<compile_context>
chip_gen: v7x
topology: tpu7x:2x2x1
jax: 0.10.0
libtpu: 0.0.40
codegen_flags: <defaults>
</compile_context>

<pallas_src>
import jax
import jax.numpy as jnp
from jax.experimental import pallas as pl
from jax.experimental.pallas import tpu as pltpu

# feature dims (input K kept at its natural 784; hidden/output dims lane-padded to 128-mult)
_IN = 784        # 784 (full-array last dim for x block; 784 = 98*8 sublanes for w1)
_H1P = 640       # 600 -> 640
_H2P = 512       # 400 -> 512
_H3P = 256       # 200 -> 256
_OUTP = 128      # 10  -> 128


def _snn_kernel(scale_ref,
                x_ref,
                w1_ref, b1_ref,
                w2_ref, b2_ref,
                w3_ref, b3_ref,
                w4_ref, b4_ref,
                mem_ref):
    # /255 decision arrives as a precomputed scalar (1.0 or 1/255)
    scale = scale_ref[0, 0]

    # fc1 + lif1 (threshold 0.5): bf16 x bf16 with f32 accumulation (single-pass MXU);
    # normalization folded into the f32 accumulator: (x*s)@W + b == (x@W)*s + b
    cur1 = jnp.dot(x_ref[...], w1_ref[...],
                   preferred_element_type=jnp.float32) * scale + b1_ref[...]
    spk1 = (cur1 > 0.5).astype(jnp.bfloat16)   # binary spikes are exact in bf16

    # fc2 + lif2 (threshold 0.3)
    cur2 = jnp.dot(spk1, w2_ref[...], preferred_element_type=jnp.float32) + b2_ref[...]
    spk2 = (cur2 > 0.3).astype(jnp.bfloat16)

    # fc3 + lif3 (threshold 0.3)
    cur3 = jnp.dot(spk2, w3_ref[...], preferred_element_type=jnp.float32) + b3_ref[...]
    spk3 = (cur3 > 0.3).astype(jnp.float32)    # layer 4 kept f32 so mem4 stays faithful

    # fc4 + lif4: mem4 = cur4 (zero initial state, single step); spk4 derived in wrapper
    cur4 = jnp.dot(spk3, w4_ref[...], preferred_element_type=jnp.float32) + b4_ref[...]
    mem_ref[...] = cur4
    # TODO(synk): training-mode Dropout(0.35) (random mask) not implemented; eval identity used.


def _pad2(a, rows, cols, dtype):
    out = jnp.zeros((rows, cols), dtype)
    return out.at[: a.shape[0], : a.shape[1]].set(a.astype(dtype))


def _choose_tile(B):
    """Batch tile: <=512 rows, multiple of 8, and >=2 grid steps whenever B > 8 so the
    parallel grid axis can shard across v7x's two TensorCores."""
    if B <= 8:
        return 8
    half = (((B + 1) // 2) + 7) // 8 * 8
    return min(512, half)


def edge_snn_forward(x, params):
    """x: (B, 784). params: w1..w4 stored (in, out), b1..b4 stored (1, out), float32."""
    x = x.astype(jnp.float32)
    B = x.shape[0]

    # global /255 decision (matches the reference: single max over the whole f32 input)
    scale = jnp.where(jnp.max(x) > 1.0,
                      jnp.float32(1.0 / 255.0),
                      jnp.float32(1.0)).reshape(1, 1)

    tb = _choose_tile(B)
    Bp = ((B + tb - 1) // tb) * tb
    grid = (Bp // tb,)

    # x streamed as bf16 (raw 0-255 pixel values exact; [0,1] inputs lose <=2^-8 rel).
    # Padded rows are zero -> cur = bias path -> sliced away below.
    xp = jnp.zeros((Bp, _IN), jnp.bfloat16).at[:B, :].set(x.astype(jnp.bfloat16))

    # zero-padded weights: padded input lanes hit zero rows; padded output lanes have zero
    # weights + bias -> cur = 0 -> spk = 0, so the logical (B, 10) results are unchanged.
    w1 = _pad2(params["w1"], _IN, _H1P, jnp.bfloat16)
    b1 = _pad2(params["b1"], 1, _H1P, jnp.float32)
    w2 = _pad2(params["w2"], _H1P, _H2P, jnp.bfloat16)
    b2 = _pad2(params["b2"], 1, _H2P, jnp.float32)
    w3 = _pad2(params["w3"], _H2P, _H3P, jnp.bfloat16)
    b3 = _pad2(params["b3"], 1, _H3P, jnp.float32)
    w4 = _pad2(params["w4"], _H3P, _OUTP, jnp.float32)   # layer 4 kept f32 (mem4 fidelity)
    b4 = _pad2(params["b4"], 1, _OUTP, jnp.float32)

    def resident(shape):
        # weights/biases stay VMEM-resident across all batch tiles (constant block index)
        return pl.BlockSpec(shape, lambda i: (0, 0))

    mem_p = pl.pallas_call(
        _snn_kernel,
        out_shape=jax.ShapeDtypeStruct((Bp, _OUTP), jnp.float32),
        grid=grid,
        in_specs=[
            pl.BlockSpec(memory_space=pltpu.MemorySpace.SMEM),   # scale scalar
            pl.BlockSpec((tb, _IN), lambda i: (i, 0)),           # batch tile of x (bf16)
            resident((_IN, _H1P)), resident((1, _H1P)),
            resident((_H1P, _H2P)), resident((1, _H2P)),
            resident((_H2P, _H3P)), resident((1, _H3P)),
            resident((_H3P, _OUTP)), resident((1, _OUTP)),
        ],
        out_specs=pl.BlockSpec((tb, _OUTP), lambda i: (i, 0)),
        compiler_params=pltpu.CompilerParams(
            dimension_semantics=("parallel",),
            vmem_limit_bytes=32 * 1024 * 1024),
    )(scale, xp, w1, b1, w2, b2, w3, b3, w4, b4)

    mem4 = mem_p[:B, :10]
    spk4 = (mem4 > 0.3).astype(jnp.float32)   # lif4 threshold 0.3; spk derived from mem
    return spk4, mem4


def init_params(key):
    """Deterministic init mimicking nn.Linear's U(-1/sqrt(fan_in), 1/sqrt(fan_in))."""
    dims = [(784, 600), (600, 400), (400, 200), (200, 10)]
    params = {}
    keys = jax.random.split(key, 2 * len(dims))
    for i, (fan_in, fan_out) in enumerate(dims):
        bound = 1.0 / jnp.sqrt(float(fan_in))
        w = jax.random.uniform(keys[2 * i], (fan_in, fan_out),
                               minval=-bound, maxval=bound, dtype=jnp.float32)
        b = jax.random.uniform(keys[2 * i + 1], (1, fan_out),
                               minval=-bound, maxval=bound, dtype=jnp.float32)
        params[f"w{i + 1}"] = w
        params[f"b{i + 1}"] = b
    return params


if __name__ == "__main__":
    key = jax.random.PRNGKey(0)
    k_x, k_p = jax.random.split(key)

    B = 8
    # MNIST-like flattened input in [0, 255] to exercise the /255 branch.
    x = jax.random.uniform(k_x, (B, 784), minval=0.0, maxval=255.0, dtype=jnp.float32)
    params = init_params(k_p)

    spk4, mem4 = edge_snn_forward(x, params)
    jax.block_until_ready((spk4, mem4))

    assert spk4.shape == (B, 10) and mem4.shape == (B, 10)
    assert spk4.dtype == jnp.float32 and mem4.dtype == jnp.float32
    assert bool(jnp.all(jnp.isfinite(mem4)))
    assert bool(jnp.all((spk4 == 0.0) | (spk4 == 1.0)))

    # Exercise the multi-tile (grid >= 2) path, which also covers v7x 2-TC sharding.
    B2 = 260
    x2 = jax.random.uniform(jax.random.PRNGKey(1), (B2, 784),
                            minval=0.0, maxval=255.0, dtype=jnp.float32)
    spk4b, mem4b = edge_snn_forward(x2, params)
    jax.block_until_ready((spk4b, mem4b))
    assert spk4b.shape == (B2, 10) and mem4b.shape == (B2, 10)
    assert bool(jnp.all(jnp.isfinite(mem4b)))
    assert bool(jnp.all((spk4b == 0.0) | (spk4b == 1.0)))

    print("KERNEL_OK")
</pallas_src>

<mosaic_0001>
module attributes {stable_mosaic.version = 11 : i64} {
  func.func @_snn_kernel(%arg0: i32, %arg1: memref<1x1xf32, #tpu.memory_space<smem>>, %arg2: memref<8x784xbf16, #tpu.memory_space<vmem>>, %arg3: memref<784x640xbf16, #tpu.memory_space<vmem>>, %arg4: memref<1x640xf32, #tpu.memory_space<vmem>>, %arg5: memref<640x512xbf16, #tpu.memory_space<vmem>>, %arg6: memref<1x512xf32, #tpu.memory_space<vmem>>, %arg7: memref<512x256xbf16, #tpu.memory_space<vmem>>, %arg8: memref<1x256xf32, #tpu.memory_space<vmem>>, %arg9: memref<256x128xf32, #tpu.memory_space<vmem>>, %arg10: memref<1x128xf32, #tpu.memory_space<vmem>>, %arg11: memref<8x128xf32, #tpu.memory_space<vmem>>) attributes {dimension_semantics = [#tpu.dimension_semantics<parallel>], iteration_bounds = array<i64: 1>, scalar_prefetch = 0 : i64, scratch_operands = 0 : i64, tpu.core_type = #tpu.core_type<tc>, window_params = [{transform_indices = @transform_0, window_bounds = array<i64: 1, 1>}, {transform_indices = @transform_1, window_bounds = array<i64: 8, 784>}, {pipeline_mode = #tpu.pipeline_mode<synchronous>, transform_indices = @transform_2, window_bounds = array<i64: 784, 640>}, {pipeline_mode = #tpu.pipeline_mode<synchronous>, transform_indices = @transform_3, window_bounds = array<i64: 1, 640>}, {pipeline_mode = #tpu.pipeline_mode<synchronous>, transform_indices = @transform_4, window_bounds = array<i64: 640, 512>}, {pipeline_mode = #tpu.pipeline_mode<synchronous>, transform_indices = @transform_5, window_bounds = array<i64: 1, 512>}, {pipeline_mode = #tpu.pipeline_mode<synchronous>, transform_indices = @transform_6, window_bounds = array<i64: 512, 256>}, {pipeline_mode = #tpu.pipeline_mode<synchronous>, transform_indices = @transform_7, window_bounds = array<i64: 1, 256>}, {pipeline_mode = #tpu.pipeline_mode<synchronous>, transform_indices = @transform_8, window_bounds = array<i64: 256, 128>}, {pipeline_mode = #tpu.pipeline_mode<synchronous>, transform_indices = @transform_9, window_bounds = array<i64: 1, 128>}, {transform_indices = @transform_10, window_bounds = array<i64: 8, 128>}]} {
    %c0 = arith.constant 0 : index
    %c0_0 = arith.constant 0 : index
    %0 = memref.load %arg1[%c0, %c0_0] : memref<1x1xf32, #tpu.memory_space<smem>>
    %c0_1 = arith.constant 0 : index
    %c0_2 = arith.constant 0 : index
    %1 = vector.load %arg2[%c0_1, %c0_2] : memref<8x784xbf16, #tpu.memory_space<vmem>>, vector<8x784xbf16>
    %c0_3 = arith.constant 0 : index
    %c0_4 = arith.constant 0 : index
    %2 = vector.load %arg3[%c0_3, %c0_4] : memref<784x640xbf16, #tpu.memory_space<vmem>>, vector<784x640xbf16>
    %cst = arith.constant dense<0.000000e+00> : vector<8x640xf32>
    %3 = tpu.matmul %1, %2, %cst {dimension_numbers = #tpu.dot_dimension_numbers<[1], [0], [0], [1], [0, 0, 1, 1], [], []>} : vector<8x784xbf16>, vector<784x640xbf16>, vector<8x640xf32> -> vector<8x640xf32>
    %4 = vector.broadcast %0 : f32 to vector<8x640xf32>
    %5 = arith.mulf %3, %4 : vector<8x640xf32>
    %c0_5 = arith.constant 0 : index
    %c0_6 = arith.constant 0 : index
    %6 = vector.load %arg4[%c0_5, %c0_6] : memref<1x640xf32, #tpu.memory_space<vmem>>, vector<1x640xf32>
    %7 = vector.broadcast %6 : vector<1x640xf32> to vector<8x640xf32>
    %8 = arith.addf %5, %7 : vector<8x640xf32>
    %cst_7 = arith.constant 5.000000e-01 : f32
    %9 = vector.broadcast %cst_7 : f32 to vector<8x640xf32>
    %10 = arith.cmpf ogt, %8, %9 : vector<8x640xf32>
    %11 = arith.extui %10 : vector<8x640xi1> to vector<8x640xi32>
    %12 = arith.sitofp %11 : vector<8x640xi32> to vector<8x640xf32>
    %13 = arith.truncf %12 : vector<8x640xf32> to vector<8x640xbf16>
    %c0_8 = arith.constant 0 : index
    %c0_9 = arith.constant 0 : index
    %14 = vector.load %arg5[%c0_8, %c0_9] : memref<640x512xbf16, #tpu.memory_space<vmem>>, vector<640x512xbf16>
    %cst_10 = arith.constant dense<0.000000e+00> : vector<8x512xf32>
    %15 = tpu.matmul %13, %14, %cst_10 {dimension_numbers = #tpu.dot_dimension_numbers<[1], [0], [0], [1], [0, 0, 1, 1], [], []>} : vector<8x640xbf16>, vector<640x512xbf16>, vector<8x512xf32> -> vector<8x512xf32>
    %c0_11 = arith.constant 0 : index
    %c0_12 = arith.constant 0 : index
    %16 = vector.load %arg6[%c0_11, %c0_12] : memref<1x512xf32, #tpu.memory_space<vmem>>, vector<1x512xf32>
    %17 = vector.broadcast %16 : vector<1x512xf32> to vector<8x512xf32>
    %18 = arith.addf %15, %17 : vector<8x512xf32>
    %cst_13 = arith.constant 3.000000e-01 : f32
    %19 = vector.broadcast %cst_13 : f32 to vector<8x512xf32>
    %20 = arith.cmpf ogt, %18, %19 : vector<8x512xf32>
    %21 = arith.extui %20 : vector<8x512xi1> to vector<8x512xi32>
    %22 = arith.sitofp %21 : vector<8x512xi32> to vector<8x512xf32>
    %23 = arith.truncf %22 : vector<8x512xf32> to vector<8x512xbf16>
    %c0_14 = arith.constant 0 : index
    %c0_15 = arith.constant 0 : index
    %24 = vector.load %arg7[%c0_14, %c0_15] : memref<512x256xbf16, #tpu.memory_space<vmem>>, vector<512x256xbf16>
    %cst_16 = arith.constant dense<0.000000e+00> : vector<8x256xf32>
    %25 = tpu.matmul %23, %24, %cst_16 {dimension_numbers = #tpu.dot_dimension_numbers<[1], [0], [0], [1], [0, 0, 1, 1], [], []>} : vector<8x512xbf16>, vector<512x256xbf16>, vector<8x256xf32> -> vector<8x256xf32>
    %c0_17 = arith.constant 0 : index
    %c0_18 = arith.constant 0 : index
    %26 = vector.load %arg8[%c0_17, %c0_18] : memref<1x256xf32, #tpu.memory_space<vmem>>, vector<1x256xf32>
    %27 = vector.broadcast %26 : vector<1x256xf32> to vector<8x256xf32>
    %28 = arith.addf %25, %27 : vector<8x256xf32>
    %cst_19 = arith.constant 3.000000e-01 : f32
    %29 = vector.broadcast %cst_19 : f32 to vector<8x256xf32>
    %30 = arith.cmpf ogt, %28, %29 : vector<8x256xf32>
    %31 = arith.extui %30 : vector<8x256xi1> to vector<8x256xi32>
    %32 = arith.sitofp %31 : vector<8x256xi32> to vector<8x256xf32>
    %c0_20 = arith.constant 0 : index
    %c0_21 = arith.constant 0 : index
    %33 = vector.load %arg9[%c0_20, %c0_21] : memref<256x128xf32, #tpu.memory_space<vmem>>, vector<256x128xf32>
    %cst_22 = arith.constant dense<0.000000e+00> : vector<8x128xf32>
    %34 = tpu.matmul %32, %33, %cst_22 {dimension_numbers = #tpu.dot_dimension_numbers<[1], [0], [0], [1], [0, 0, 1, 1], [], []>} : vector<8x256xf32>, vector<256x128xf32>, vector<8x128xf32> -> vector<8x128xf32>
    %c0_23 = arith.constant 0 : index
    %c0_24 = arith.constant 0 : index
    %35 = vector.load %arg10[%c0_23, %c0_24] : memref<1x128xf32, #tpu.memory_space<vmem>>, vector<1x128xf32>
    %36 = vector.broadcast %35 : vector<1x128xf32> to vector<8x128xf32>
    %37 = arith.addf %34, %36 : vector<8x128xf32>
    %c0_25 = arith.constant 0 : index
    %c0_26 = arith.constant 0 : index
    %38 = vector.load %arg11[%c0_25, %c0_26] : memref<8x128xf32, #tpu.memory_space<vmem>>, vector<8x128xf32>
    tpu.vector_store %arg11[%c0_25, %c0_26], %37 {strides = array<i32>} : memref<8x128xf32, #tpu.memory_space<vmem>>, vector<8x128xf32>,
    return
  }
  func.func @transform_0(%arg0: i32) -> (i32, i32) {
    %c0_i32 = arith.constant 0 : i32
    %c0_i32_0 = arith.constant 0 : i32
    %c0_i32_1 = arith.constant 0 : i32
    return %c0_i32, %c0_i32_0 : i32, i32
  }
  func.func @transform_1(%arg0: i32) -> (i32, i32) {
    %c0_i32 = arith.constant 0 : i32
    %c0_i32_0 = arith.constant 0 : i32
    return %arg0, %c0_i32 : i32, i32
  }
  func.func @transform_2(%arg0: i32) -> (i32, i32) {
    %c0_i32 = arith.constant 0 : i32
    %c0_i32_0 = arith.constant 0 : i32
    %c0_i32_1 = arith.constant 0 : i32
    return %c0_i32, %c0_i32_0 : i32, i32
  }
  func.func @transform_3(%arg0: i32) -> (i32, i32) {
    %c0_i32 = arith.constant 0 : i32
    %c0_i32_0 = arith.constant 0 : i32
    %c0_i32_1 = arith.constant 0 : i32
    return %c0_i32, %c0_i32_0 : i32, i32
  }
  func.func @transform_4(%arg0: i32) -> (i32, i32) {
    %c0_i32 = arith.constant 0 : i32
    %c0_i32_0 = arith.constant 0 : i32
    %c0_i32_1 = arith.constant 0 : i32
    return %c0_i32, %c0_i32_0 : i32, i32
  }
  func.func @transform_5(%arg0: i32) -> (i32, i32) {
    %c0_i32 = arith.constant 0 : i32
    %c0_i32_0 = arith.constant 0 : i32
    %c0_i32_1 = arith.constant 0 : i32
    return %c0_i32, %c0_i32_0 : i32, i32
  }
  func.func @transform_6(%arg0: i32) -> (i32, i32) {
    %c0_i32 = arith.constant 0 : i32
    %c0_i32_0 = arith.constant 0 : i32
    %c0_i32_1 = arith.constant 0 : i32
    return %c0_i32, %c0_i32_0 : i32, i32
  }
  func.func @transform_7(%arg0: i32) -> (i32, i32) {
    %c0_i32 = arith.constant 0 : i32
    %c0_i32_0 = arith.constant 0 : i32
    %c0_i32_1 = arith.constant 0 : i32
    return %c0_i32, %c0_i32_0 : i32, i32
  }
  func.func @transform_8(%arg0: i32) -> (i32, i32) {
    %c0_i32 = arith.constant 0 : i32
    %c0_i32_0 = arith.constant 0 : i32
    %c0_i32_1 = arith.constant 0 : i32
    return %c0_i32, %c0_i32_0 : i32, i32
  }
  func.func @transform_9(%arg0: i32) -> (i32, i32) {
    %c0_i32 = arith.constant 0 : i32
    %c0_i32_0 = arith.constant 0 : i32
    %c0_i32_1 = arith.constant 0 : i32
    return %c0_i32, %c0_i32_0 : i32, i32
  }
  func.func @transform_10(%arg0: i32) -> (i32, i32) {
    %c0_i32 = arith.constant 0 : i32
    %c0_i32_0 = arith.constant 0 : i32
    return %arg0, %c0_i32 : i32, i32
  }
}

</mosaic_0001>

<llo_original>
// kernel: tpu_custom_call.1
$region0: #{tpu_custom_call.1}
  #allocation0 [shape = 'u32[]', space=smem, size = 0x4, offset = 0x4, fixed_abs, tag = 'smem constant byte address 0x4 - core index']
  #allocation1 [shape = 'u32[144,128]{1,0:T(1,128)}', space=vmem, size = 0x12000, scoped, tag = 'internal scratch']
  #allocation2 [shape = 'f32[1,1]{1,0:T(1,128)S(6)}', space=smem, size = 0x200, scoped, tag = 'scoped memory for tpu_custom_call.1']
  %s0 = inlined_call_operand.<no memory space> [shape: f32[1,1], index: 0, kind: input, shape index: {}]
  %s1 = inlined_call_operand.hbm [shape: bf16[8,784], index: 1, kind: input, shape index: {}]
  %s2 = inlined_call_operand.hbm [shape: bf16[784,640], index: 2, kind: input, shape index: {}]
  %s3 = inlined_call_operand.vmem [shape: f32[1,640], index: 3, kind: input, shape index: {}]
  %s4 = inlined_call_operand.hbm [shape: bf16[640,512], index: 4, kind: input, shape index: {}]
  %s5 = inlined_call_operand.vmem [shape: f32[1,512], index: 5, kind: input, shape index: {}]
  %s6 = inlined_call_operand.hbm [shape: bf16[512,256], index: 6, kind: input, shape index: {}]
  %s7 = inlined_call_operand.vmem [shape: f32[1,256], index: 7, kind: input, shape index: {}]
  %s8 = inlined_call_operand.hbm [shape: f32[256,128], index: 8, kind: input, shape index: {}]
  %s9 = inlined_call_operand.vmem [shape: f32[1,128], index: 9, kind: input, shape index: {}]
  %s10 = inlined_call_operand.hbm [shape: f32[8,128], index: 10, kind: output, shape index: {}]
  %s11 = sld [smem:[#allocation0]]
  $region70: #{tpu_custom_call.1} parent=0
    _
  %s13 = ssub.s32 1, %s11
  %s14 = scalar_select 0, %s13, %s11
  %15 = sst [smem:[#allocation2]] %s0
  $region1: #{tpu_custom_call.1} parent=0
    #allocation3 [shape = 'u8[14336]{0}', space=vmem, size = 0x3800, scoped, tag = 'input window, operand 1, single buffered']
    #allocation4 [shape = 's32[1]{0}', space=sflag, size = 0x4, scoped, tag = 'scoped memory for tpu_custom_call.1']
    #allocation5 [shape = 's32[1]{0}', space=sflag, size = 0x4, scoped, tag = 'scoped memory for tpu_custom_call.1']
    #allocation6 [shape = 'u8[1003520]{0}', space=vmem, size = 0xf5000, scoped, tag = 'input window, operand 2, single buffered']
    #allocation7 [shape = 's32[1]{0}', space=sflag, size = 0x4, scoped, tag = 'scoped memory for tpu_custom_call.1']
    #allocation8 [shape = 'u8[655360]{0}', space=vmem, size = 0xa0000, scoped, tag = 'input window, operand 4, single buffered']
    #allocation9 [shape = 'u8[262144]{0}', space=vmem, size = 0x40000, scoped, tag = 'input window, operand 6, single buffered']
    #allocation10 [shape = 's32[1]{0}', space=sflag, size = 0x4, scoped, tag = 'scoped memory for tpu_custom_call.1']
    #allocation11 [shape = 'u8[131072]{0}', space=vmem, size = 0x20000, scoped, tag = 'input window, operand 8, single buffered']
    #allocation12 [shape = 'u8[4096]{0}', space=vmem, size = 0x1000, scoped, tag = 'output window, operand 0, single buffered']
    %16 = vsyncpa [#allocation4], 0
    %17 = vsyncpa [#allocation7], 0
    %18 = vsyncpa [#allocation10], 0
    %19 = vsyncpa [#allocation5], 0
    // Predicated region
    $region2: #{tpu_custom_call.1} parent=1 // pred_check
      _
    $region3: #{tpu_custom_call.1} parent=1 // pred_check_branch
      %21 = sbr.rel (0) target = $region5
    $region4: #{tpu_custom_call.1} parent=1 // pred_region
      _
    $region5: #{tpu_custom_call.1} parent=1 // pred_fallthru
      _
    // Predicated region
    $region6: #{tpu_custom_call.1} parent=1 // pred_check
      _
    $region7: #{tpu_custom_call.1} parent=1 // pred_check_branch
      %23 = sbr.rel (0) target = $region9
    $region8: #{tpu_custom_call.1} parent=1 // pred_region
      %s25 = ssub.s32 448, 448
      %26 = vsyncadd [#allocation4], %s25
      %s28 = sshll.u32 [#allocation3], 4
      %s29 = int_to_ptr.vmem [resolvable:$true] %s28
      %31 = dma.hbm_to_vmem [thread:$0]  %s1, 448, %s29, [#allocation4]
    $region9: #{tpu_custom_call.1} parent=1 // pred_fallthru
      _
    // Predicated region
    $region10: #{tpu_custom_call.1} parent=1 // pred_check
      _
    $region11: #{tpu_custom_call.1} parent=1 // pred_check_branch
      %33 = sbr.rel (0) target = $region13
    $region12: #{tpu_custom_call.1} parent=1 // pred_region
      %s35 = ssub.s32 31360, 31360
      %36 = vsyncadd [#allocation7], %s35
      %s37 = sshll.u32 [#allocation6], 4
      %s38 = int_to_ptr.vmem [resolvable:$true] %s37
      %43 = dma.hbm_to_vmem [thread:$0]  %s2, 31360, %s38, [#allocation7], 320, 320, 20
    $region13: #{tpu_custom_call.1} parent=1 // pred_fallthru
      _
    // Predicated region
    $region14: #{tpu_custom_call.1} parent=1 // pred_check
      _
    $region15: #{tpu_custom_call.1} parent=1 // pred_check_branch
      %45 = sbr.rel (0) target = $region17
    $region16: #{tpu_custom_call.1} parent=1 // pred_region
      _
    $region17: #{tpu_custom_call.1} parent=1 // pred_fallthru
      _
    // Predicated region
    $region18: #{tpu_custom_call.1} parent=1 // pred_check
      _
    $region19: #{tpu_custom_call.1} parent=1 // pred_check_branch
      %47 = sbr.rel (0) target = $region21
    $region20: #{tpu_custom_call.1} parent=1 // pred_region
      %s49 = ssub.s32 20480, 20480
      %50 = vsyncadd [#allocation7], %s49
      %s51 = sshll.u32 [#allocation8], 4
      %s52 = int_to_ptr.vmem [resolvable:$true] %s51
      %57 = dma.hbm_to_vmem [thread:$0]  %s4, 20480, %s52, [#allocation7], 256, 256, 16
    $region21: #{tpu_custom_call.1} parent=1 // pred_fallthru
      _
    // Predicated region
    $region22: #{tpu_custom_call.1} parent=1 // pred_check
      _
    $region23: #{tpu_custom_call.1} parent=1 // pred_check_branch
      %59 = sbr.rel (0) target = $region25
    $region24: #{tpu_custom_call.1} parent=1 // pred_region
      _
    $region25: #{tpu_custom_call.1} parent=1 // pred_fallthru
      _
    // Predicated region
    $region26: #{tpu_custom_call.1} parent=1 // pred_check
      _
    $region27: #{tpu_custom_call.1} parent=1 // pred_check_branch
      %61 = sbr.rel (0) target = $region29
    $region28: #{tpu_custom_call.1} parent=1 // pred_region
      %s63 = ssub.s32 8192, 8192
      %64 = vsyncadd [#allocation10], %s63
      %s65 = sshll.u32 [#allocation9], 4
      %s66 = int_to_ptr.vmem [resolvable:$true] %s65
      %71 = dma.hbm_to_vmem [thread:$0]  %s6, 8192, %s66, [#allocation10], 128, 128, 8
    $region29: #{tpu_custom_call.1} parent=1 // pred_fallthru
      _
    // Predicated region
    $region30: #{tpu_custom_call.1} parent=1 // pred_check
      _
    $region31: #{tpu_custom_call.1} parent=1 // pred_check_branch
      %73 = sbr.rel (0) target = $region33
    $region32: #{tpu_custom_call.1} parent=1 // pred_region
      _
    $region33: #{tpu_custom_call.1} parent=1 // pred_fallthru
      _
    // Predicated region
    $region34: #{tpu_custom_call.1} parent=1 // pred_check
      _
    $region35: #{tpu_custom_call.1} parent=1 // pred_check_branch
      %75 = sbr.rel (0) target = $region37
    $region36: #{tpu_custom_call.1} parent=1 // pred_region
      %s77 = ssub.s32 4096, 4096
      %78 = vsyncadd [#allocation10], %s77
      %s79 = sshll.u32 [#allocation11], 4
      %s80 = int_to_ptr.vmem [resolvable:$true] %s79
      %85 = dma.hbm_to_vmem [thread:$0]  %s8, 4096, %s80, [#allocation10], 128, 128, 8
    $region37: #{tpu_custom_call.1} parent=1 // pred_fallthru
      _
    // Predicated region
    $region38: #{tpu_custom_call.1} parent=1 // pred_check
      _
    $region39: #{tpu_custom_call.1} parent=1 // pred_check_branch
      %87 = sbr.rel (0) target = $region41
    $region40: #{tpu_custom_call.1} parent=1 // pred_region
      _
    $region41: #{tpu_custom_call.1} parent=1 // pred_fallthru
      _
    // Predicated region
    $region42: #{tpu_custom_call.1} parent=1 // pred_check
      _
    $region43: #{tpu_custom_call.1} parent=1 // pred_check_branch
      %89 = sbr.rel (0) target = $region45
    $region44: #{tpu_custom_call.1} parent=1 // pred_region
      %90 = dma.done [#allocation4], 448
    $region45: #{tpu_custom_call.1} parent=1 // pred_fallthru
      _
    // Predicated region
    $region46: #{tpu_custom_call.1} parent=1 // pred_check
      _
    $region47: #{tpu_custom_call.1} parent=1 // pred_check_branch
      %92 = sbr.rel (0) target = $region49
    $region48: #{tpu_custom_call.1} parent=1 // pred_region
      %93 = dma.done [#allocation7], 31360
    $region49: #{tpu_custom_call.1} parent=1 // pred_fallthru
      _
    // Predicated region
    $region50: #{tpu_custom_call.1} parent=1 // pred_check
      _
    $region51: #{tpu_custom_call.1} parent=1 // pred_check_branch
      %95 = sbr.rel (0) target = $region53
    $region52: #{tpu_custom_call.1} parent=1 // pred_region
      %96 = dma.done [#allocation7], 20480
    $region53: #{tpu_custom_call.1} parent=1 // pred_fallthru
      _
    // Predicated region
    $region54: #{tpu_custom_call.1} parent=1 // pred_check
      _
    $region55: #{tpu_custom_call.1} parent=1 // pred_check_branch
      %98 = sbr.rel (0) target = $region57
    $region56: #{tpu_custom_call.1} parent=1 // pred_region
      %99 = dma.done [#allocation10], 8192
    $region57: #{tpu_custom_call.1} parent=1 // pred_fallthru
      _
    // Predicated region
    $region58: #{tpu_custom_call.1} parent=1 // pred_check
      _
    $region59: #{tpu_custom_call.1} parent=1 // pred_check_branch
      %101 = sbr.rel (0) target = $region61
    $region60: #{tpu_custom_call.1} parent=1 // pred_region
      %102 = dma.done [#allocation10], 4096
    $region61: #{tpu_custom_call.1} parent=1 // pred_fallthru
      _
    %s104 = sld [smem:[#allocation2]]
    %v105 = vld [vmem:[#allocation3] sm:$0xff]
    %v106 = vld [vmem:[#allocation3 + $0x8] sm:$0xff]
    %v107 = vld [vmem:[#allocation3 + $0x10] sm:$0xff]
    %v108 = vld [vmem:[#allocation3 + $0x18] sm:$0xf]
    %v109 = vld [vmem:[#allocation6] sm:$0xff]
    %v110 = vld [vmem:[#allocation6 + $0x8] sm:$0xff]
    %v111 = vld [vmem:[#allocation6 + $0x10] sm:$0xf]
    %v112 = vld [vmem:[#allocation6 + $0x14] sm:$0xff]
    %v113 = vld [vmem:[#allocation6 + $0x1c] sm:$0xff]
    %v114 = vld [vmem:[#allocation6 + $0x24] sm:$0xf]
    %v115 = vld [vmem:[#allocation6 + $0x28] sm:$0xff]
    %v116 = vld [vmem:[#allocation6 + $0x30] sm:$0xff]
    %v117 = vld [vmem:[#allocation6 + $0x38] sm:$0xf]
    %v118 = vld [vmem:[#allocation6 + $0x3c] sm:$0xff]
    %v119 = vld [vmem:[#allocation6 + $0x44] sm:$0xff]
    %v120 = vld [vmem:[#allocation6 + $0x4c] sm:$0xf]
    %v121 = vld [vmem:[#allocation6 + $0x50] sm:$0xff]
    %v122 = vld [vmem:[#allocation6 + $0x58] sm:$0xff]
    %v123 = vld [vmem:[#allocation6 + $0x60] sm:$0xf]
    %v124 = vld [vmem:[#allocation6 + $0x64] sm:$0xff]
    %v125 = vld [vmem:[#allocation6 + $0x6c] sm:$0xff]
    %v126 = vld [vmem:[#allocation6 + $0x74] sm:$0xf]
    %v127 = vld [vmem:[#allocation6 + $0x78] sm:$0xff]
    %v128 = vld [vmem:[#allocation6 + $0x80] sm:$0xff]
    %v129 = vld [vmem:[#allocation6 + $0x88] sm:$0xf]
    %v130 = vld [vmem:[#allocation6 + $0x8c] sm:$0xff]
    %v131 = vld [vmem:[#allocation6 + $0x94] sm:$0xff]
    %v132 = vld [vmem:[#allocation6 + $0x9c] sm:$0xf]
    %v133 = vld [vmem:[#allocation6 + $0xa0] sm:$0xff]
    %v134 = vld [vmem:[#allocation6 + $0xa8] sm:$0xff]
    %v135 = vld [vmem:[#allocation6 + $0xb0] sm:$0xf]
    %v136 = vld [vmem:[#allocation6 + $0xb4] sm:$0xff]
    %v137 = vld [vmem:[#allocation6 + $0xbc] sm:$0xff]
    %v138 = vld [vmem:[#allocation6 + $0xc4] sm:$0xf]
    %v139 = vld [vmem:[#allocation6 + $0xc8] sm:$0xff]
    %v140 = vld [vmem:[#allocation6 + $0xd0] sm:$0xff]
    %v141 = vld [vmem:[#allocation6 + $0xd8] sm:$0xf]
    %v142 = vld [vmem:[#allocation6 + $0xdc] sm:$0xff]
    %v143 = vld [vmem:[#allocation6 + $0xe4] sm:$0xff]
    %v144 = vld [vmem:[#allocation6 + $0xec] sm:$0xf]
    %v145 = vld [vmem:[#allocation6 + $0xf0] sm:$0xff]
    %v146 = vld [vmem:[#allocation6 + $0xf8] sm:$0xff]
    %v147 = vld [vmem:[#allocation6 + $0x100] sm:$0xf]
    %v148 = vld [vmem:[#allocation6 + $0x104] sm:$0xff]
    %v149 = vld [vmem:[#allocation6 + $0x10c] sm:$0xff]
    %v150 = vld [vmem:[#allocation6 + $0x114] sm:$0xf]
    %v151 = vld [vmem:[#allocation6 + $0x118] sm:$0xff]
    %v152 = vld [vmem:[#allocation6 + $0x120] sm:$0xff]
    %v153 = vld [vmem:[#allocation6 + $0x128] sm:$0xf]
    %v154 = vld [vmem:[#allocation6 + $0x12c] sm:$0xff]
    %v155 = vld [vmem:[#allocation6 + $0x134] sm:$0xff]
    %v156 = vld [vmem:[#allocation6 + $0x13c] sm:$0xf]
    %v157 = vld [vmem:[#allocation6 + $0x140] sm:$0xff]
    %v158 = vld [vmem:[#allocation6 + $0x148] sm:$0xff]
    %v159 = vld [vmem:[#allocation6 + $0x150] sm:$0xf]
    %v160 = vld [vmem:[#allocation6 + $0x154] sm:$0xff]
    %v161 = vld [vmem:[#allocation6 + $0x15c] sm:$0xff]
    %v162 = vld [vmem:[#allocation6 + $0x164] sm:$0xf]
    %v163 = vld [vmem:[#allocation6 + $0x168] sm:$0xff]
    %v164 = vld [vmem:[#allocation6 + $0x170] sm:$0xff]
    %v165 = vld [vmem:[#allocation6 + $0x178] sm:$0xf]
    %v166 = vld [vmem:[#allocation6 + $0x17c] sm:$0xff]
    %v167 = vld [vmem:[#allocation6 + $0x184] sm:$0xff]
    %v168 = vld [vmem:[#allocation6 + $0x18c] sm:$0xf]
    %v169 = vld [vmem:[#allocation6 + $0x190] sm:$0xff]
    %v170 = vld [vmem:[#allocation6 + $0x198] sm:$0xff]
    %v171 = vld [vmem:[#allocation6 + $0x1a0] sm:$0xf]
    %v172 = vld [vmem:[#allocation6 + $0x1a4] sm:$0xff]
    %v173 = vld [vmem:[#allocation6 + $0x1ac] sm:$0xff]
    %v174 = vld [vmem:[#allocation6 + $0x1b4] sm:$0xf]
    %v175 = vld [vmem:[#allocation6 + $0x1b8] sm:$0xff]
    %v176 = vld [vmem:[#allocation6 + $0x1c0] sm:$0xff]
    %v177 = vld [vmem:[#allocation6 + $0x1c8] sm:$0xf]
    %v178 = vld [vmem:[#allocation6 + $0x1cc] sm:$0xff]
    %v179 = vld [vmem:[#allocation6 + $0x1d4] sm:$0xff]
    %v180 = vld [vmem:[#allocation6 + $0x1dc] sm:$0xf]
    %v181 = vld [vmem:[#allocation6 + $0x1e0] sm:$0xff]
    %v182 = vld [vmem:[#allocation6 + $0x1e8] sm:$0xff]
    %v183 = vld [vmem:[#allocation6 + $0x1f0] sm:$0xf]
    %v184 = vld [vmem:[#allocation6 + $0x1f4] sm:$0xff]
    %v185 = vld [vmem:[#allocation6 + $0x1fc] sm:$0xff]
    %v186 = vld [vmem:[#allocation6 + $0x204] sm:$0xf]
    %v187 = vld [vmem:[#allocation6 + $0x208] sm:$0xff]
    %v188 = vld [vmem:[#allocation6 + $0x210] sm:$0xff]
    %v189 = vld [vmem:[#allocation6 + $0x218] sm:$0xf]
    %v190 = vld [vmem:[#allocation6 + $0x21c] sm:$0xff]
    %v191 = vld [vmem:[#allocation6 + $0x224] sm:$0xff]
    %v192 = vld [vmem:[#allocation6 + $0x22c] sm:$0xf]
    %v193 = vld [vmem:[#allocation6 + $0x230] sm:$0xff]
    %v194 = vld [vmem:[#allocation6 + $0x238] sm:$0xff]
    %v195 = vld [vmem:[#allocation6 + $0x240] sm:$0xf]
    %v196 = vld [vmem:[#allocation6 + $0x244] sm:$0xff]
    %v197 = vld [vmem:[#allocation6 + $0x24c] sm:$0xff]
    %v198 = vld [vmem:[#allocation6 + $0x254] sm:$0xf]
    %v199 = vld [vmem:[#allocation6 + $0x258] sm:$0xff]
    %v200 = vld [vmem:[#allocation6 + $0x260] sm:$0xff]
    %v201 = vld [vmem:[#allocation6 + $0x268] sm:$0xf]
    %v202 = vld [vmem:[#allocation6 + $0x26c] sm:$0xff]
    %v203 = vld [vmem:[#allocation6 + $0x274] sm:$0xff]
    %v204 = vld [vmem:[#allocation6 + $0x27c] sm:$0xf]
    %v205 = vld [vmem:[#allocation6 + $0x280] sm:$0xff]
    %v206 = vld [vmem:[#allocation6 + $0x288] sm:$0xff]
    %v207 = vld [vmem:[#allocation6 + $0x290] sm:$0xf]
    %v208 = vld [vmem:[#allocation6 + $0x294] sm:$0xff]
    %v209 = vld [vmem:[#allocation6 + $0x29c] sm:$0xff]
    %v210 = vld [vmem:[#allocation6 + $0x2a4] sm:$0xf]
    %v211 = vld [vmem:[#allocation6 + $0x2a8] sm:$0xff]
    %v212 = vld [vmem:[#allocation6 + $0x2b0] sm:$0xff]
    %v213 = vld [vmem:[#allocation6 + $0x2b8] sm:$0xf]
    %v214 = vld [vmem:[#allocation6 + $0x2bc] sm:$0xff]
    %v215 = vld [vmem:[#allocation6 + $0x2c4] sm:$0xff]
    %v216 = vld [vmem:[#allocation6 + $0x2cc] sm:$0xf]
    %v217 = vld [vmem:[#allocation6 + $0x2d0] sm:$0xff]
    %v218 = vld [vmem:[#allocation6 + $0x2d8] sm:$0xff]
    %v219 = vld [vmem:[#allocation6 + $0x2e0] sm:$0xf]
    %v220 = vld [vmem:[#allocation6 + $0x2e4] sm:$0xff]
    %v221 = vld [vmem:[#allocation6 + $0x2ec] sm:$0xff]
    %v222 = vld [vmem:[#allocation6 + $0x2f4] sm:$0xf]
    %v223 = vld [vmem:[#allocation6 + $0x2f8] sm:$0xff]
    %v224 = vld [vmem:[#allocation6 + $0x300] sm:$0xff]
    %v225 = vld [vmem:[#allocation6 + $0x308] sm:$0xf]
    %v226 = vld [vmem:[#allocation6 + $0x30c] sm:$0xff]
    %v227 = vld [vmem:[#allocation6 + $0x314] sm:$0xff]
    %v228 = vld [vmem:[#allocation6 + $0x31c] sm:$0xf]
    %v229 = vld [vmem:[#allocation6 + $0x320] sm:$0xff]
    %v230 = vld [vmem:[#allocation6 + $0x328] sm:$0xff]
    %v231 = vld [vmem:[#allocation6 + $0x330] sm:$0xf]
    %v232 = vld [vmem:[#allocation6 + $0x334] sm:$0xff]
    %v233 = vld [vmem:[#allocation6 + $0x33c] sm:$0xff]
    %v234 = vld [vmem:[#allocation6 + $0x344] sm:$0xf]
    %v235 = vld [vmem:[#allocation6 + $0x348] sm:$0xff]
    %v236 = vld [vmem:[#allocation6 + $0x350] sm:$0xff]
    %v237 = vld [vmem:[#allocation6 + $0x358] sm:$0xf]
    %v238 = vld [vmem:[#allocation6 + $0x35c] sm:$0xff]
    %v239 = vld [vmem:[#allocation6 + $0x364] sm:$0xff]
    %v240 = vld [vmem:[#allocation6 + $0x36c] sm:$0xf]
    %v241 = vld [vmem:[#allocation6 + $0x370] sm:$0xff]
    %v242 = vld [vmem:[#allocation6 + $0x378] sm:$0xff]
    %v243 = vld [vmem:[#allocation6 + $0x380] sm:$0xf]
    %v244 = vld [vmem:[#allocation6 + $0x384] sm:$0xff]
    %v245 = vld [vmem:[#allocation6 + $0x38c] sm:$0xff]
    %v246 = vld [vmem:[#allocation6 + $0x394] sm:$0xf]
    %v247 = vld [vmem:[#allocation6 + $0x398] sm:$0xff]
    %v248 = vld [vmem:[#allocation6 + $0x3a0] sm:$0xff]
    %v249 = vld [vmem:[#allocation6 + $0x3a8] sm:$0xf]
    %v250 = vld [vmem:[#allocation6 + $0x3ac] sm:$0xff]
    %v251 = vld [vmem:[#allocation6 + $0x3b4] sm:$0xff]
    %v252 = vld [vmem:[#allocation6 + $0x3bc] sm:$0xf]
    %v253 = vld [vmem:[#allocation6 + $0x3c0] sm:$0xff]
    %v254 = vld [vmem:[#allocation6 + $0x3c8] sm:$0xff]
    %v255 = vld [vmem:[#allocation6 + $0x3d0] sm:$0xf]
    %v256 = vld [vmem:[#allocation6 + $0x3d4] sm:$0xff]
    %v257 = vld [vmem:[#allocation6 + $0x3dc] sm:$0xff]
    %v258 = vld [vmem:[#allocation6 + $0x3e4] sm:$0xf]
    %v259 = vld [vmem:[#allocation6 + $0x3e8] sm:$0xff]
    %v260 = vld [vmem:[#allocation6 + $0x3f0] sm:$0xff]
    %v261 = vld [vmem:[#allocation6 + $0x3f8] sm:$0xf]
    %v262 = vld [vmem:[#allocation6 + $0x3fc] sm:$0xff]
    %v263 = vld [vmem:[#allocation6 + $0x404] sm:$0xff]
    %v264 = vld [vmem:[#allocation6 + $0x40c] sm:$0xf]
    %v265 = vld [vmem:[#allocation6 + $0x410] sm:$0xff]
    %v266 = vld [vmem:[#allocation6 + $0x418] sm:$0xff]
    %v267 = vld [vmem:[#allocation6 + $0x420] sm:$0xf]
    %v268 = vld [vmem:[#allocation6 + $0x424] sm:$0xff]
    %v269 = vld [vmem:[#allocation6 + $0x42c] sm:$0xff]
    %v270 = vld [vmem:[#allocation6 + $0x434] sm:$0xf]
    %v271 = vld [vmem:[#allocation6 + $0x438] sm:$0xff]
    %v272 = vld [vmem:[#allocation6 + $0x440] sm:$0xff]
    %v273 = vld [vmem:[#allocation6 + $0x448] sm:$0xf]
    %v274 = vld [vmem:[#allocation6 + $0x44c] sm:$0xff]
    %v275 = vld [vmem:[#allocation6 + $0x454] sm:$0xff]
    %v276 = vld [vmem:[#allocation6 + $0x45c] sm:$0xf]
    %v277 = vld [vmem:[#allocation6 + $0x460] sm:$0xff]
    %v278 = vld [vmem:[#allocation6 + $0x468] sm:$0xff]
    %v279 = vld [vmem:[#allocation6 + $0x470] sm:$0xf]
    %v280 = vld [vmem:[#allocation6 + $0x474] sm:$0xff]
    %v281 = vld [vmem:[#allocation6 + $0x47c] sm:$0xff]
    %v282 = vld [vmem:[#allocation6 + $0x484] sm:$0xf]
    %v283 = vld [vmem:[#allocation6 + $0x488] sm:$0xff]
    %v284 = vld [vmem:[#allocation6 + $0x490] sm:$0xff]
    %v285 = vld [vmem:[#allocation6 + $0x498] sm:$0xf]
    %v286 = vld [vmem:[#allocation6 + $0x49c] sm:$0xff]
    %v287 = vld [vmem:[#allocation6 + $0x4a4] sm:$0xff]
    %v288 = vld [vmem:[#allocation6 + $0x4ac] sm:$0xf]
    %v289 = vld [vmem:[#allocation6 + $0x4b0] sm:$0xff]
    %v290 = vld [vmem:[#allocation6 + $0x4b8] sm:$0xff]
    %v291 = vld [vmem:[#allocation6 + $0x4c0] sm:$0xf]
    %v292 = vld [vmem:[#allocation6 + $0x4c4] sm:$0xff]
    %v293 = vld [vmem:[#allocation6 + $0x4cc] sm:$0xff]
    %v294 = vld [vmem:[#allocation6 + $0x4d4] sm:$0xf]
    %v295 = vld [vmem:[#allocation6 + $0x4d8] sm:$0xff]
    %v296 = vld [vmem:[#allocation6 + $0x4e0] sm:$0xff]
    %v297 = vld [vmem:[#allocation6 + $0x4e8] sm:$0xf]
    %v298 = vld [vmem:[#allocation6 + $0x4ec] sm:$0xff]
    %v299 = vld [vmem:[#allocation6 + $0x4f4] sm:$0xff]
    %v300 = vld [vmem:[#allocation6 + $0x4fc] sm:$0xf]
    %v301 = vld [vmem:[#allocation6 + $0x500] sm:$0xff]
    %v302 = vld [vmem:[#allocation6 + $0x508] sm:$0xff]
    %v303 = vld [vmem:[#allocation6 + $0x510] sm:$0xf]
    %v304 = vld [vmem:[#allocation6 + $0x514] sm:$0xff]
    %v305 = vld [vmem:[#allocation6 + $0x51c] sm:$0xff]
    %v306 = vld [vmem:[#allocation6 + $0x524] sm:$0xf]
    %v307 = vld [vmem:[#allocation6 + $0x528] sm:$0xff]
    %v308 = vld [vmem:[#allocation6 + $0x530] sm:$0xff]
    %v309 = vld [vmem:[#allocation6 + $0x538] sm:$0xf]
    %v310 = vld [vmem:[#allocation6 + $0x53c] sm:$0xff]
    %v311 = vld [vmem:[#allocation6 + $0x544] sm:$0xff]
    %v312 = vld [vmem:[#allocation6 + $0x54c] sm:$0xf]
    %v313 = vld [vmem:[#allocation6 + $0x550] sm:$0xff]
    %v314 = vld [vmem:[#allocation6 + $0x558] sm:$0xff]
    %v315 = vld [vmem:[#allocation6 + $0x560] sm:$0xf]
    %v316 = vld [vmem:[#allocation6 + $0x564] sm:$0xff]
    %v317 = vld [vmem:[#allocation6 + $0x56c] sm:$0xff]
    %v318 = vld [vmem:[#allocation6 + $0x574] sm:$0xf]
    %v319 = vld [vmem:[#allocation6 + $0x578] sm:$0xff]
    %v320 = vld [vmem:[#allocation6 + $0x580] sm:$0xff]
    %v321 = vld [vmem:[#allocation6 + $0x588] sm:$0xf]
    %v322 = vld [vmem:[#allocation6 + $0x58c] sm:$0xff]
    %v323 = vld [vmem:[#allocation6 + $0x594] sm:$0xff]
    %v324 = vld [vmem:[#allocation6 + $0x59c] sm:$0xf]
    %v325 = vld [vmem:[#allocation6 + $0x5a0] sm:$0xff]
    %v326 = vld [vmem:[#allocation6 + $0x5a8] sm:$0xff]
    %v327 = vld [vmem:[#allocation6 + $0x5b0] sm:$0xf]
    %v328 = vld [vmem:[#allocation6 + $0x5b4] sm:$0xff]
    %v329 = vld [vmem:[#allocation6 + $0x5bc] sm:$0xff]
    %v330 = vld [vmem:[#allocation6 + $0x5c4] sm:$0xf]
    %v331 = vld [vmem:[#allocation6 + $0x5c8] sm:$0xff]
    %v332 = vld [vmem:[#allocation6 + $0x5d0] sm:$0xff]
    %v333 = vld [vmem:[#allocation6 + $0x5d8] sm:$0xf]
    %v334 = vld [vmem:[#allocation6 + $0x5dc] sm:$0xff]
    %v335 = vld [vmem:[#allocation6 + $0x5e4] sm:$0xff]
    %v336 = vld [vmem:[#allocation6 + $0x5ec] sm:$0xf]
    %v337 = vld [vmem:[#allocation6 + $0x5f0] sm:$0xff]
    %v338 = vld [vmem:[#allocation6 + $0x5f8] sm:$0xff]
    %v339 = vld [vmem:[#allocation6 + $0x600] sm:$0xf]
    %v340 = vld [vmem:[#allocation6 + $0x604] sm:$0xff]
    %v341 = vld [vmem:[#allocation6 + $0x60c] sm:$0xff]
    %v342 = vld [vmem:[#allocation6 + $0x614] sm:$0xf]
    %v343 = vld [vmem:[#allocation6 + $0x618] sm:$0xff]
    %v344 = vld [vmem:[#allocation6 + $0x620] sm:$0xff]
    %v345 = vld [vmem:[#allocation6 + $0x628] sm:$0xf]
    %v346 = vld [vmem:[#allocation6 + $0x62c] sm:$0xff]
    %v347 = vld [vmem:[#allocation6 + $0x634] sm:$0xff]
    %v348 = vld [vmem:[#allocation6 + $0x63c] sm:$0xf]
    %v349 = vld [vmem:[#allocation6 + $0x640] sm:$0xff]
    %v350 = vld [vmem:[#allocation6 + $0x648] sm:$0xff]
    %v351 = vld [vmem:[#allocation6 + $0x650] sm:$0xf]
    %v352 = vld [vmem:[#allocation6 + $0x654] sm:$0xff]
    %v353 = vld [vmem:[#allocation6 + $0x65c] sm:$0xff]
    %v354 = vld [vmem:[#allocation6 + $0x664] sm:$0xf]
    %v355 = vld [vmem:[#allocation6 + $0x668] sm:$0xff]
    %v356 = vld [vmem:[#allocation6 + $0x670] sm:$0xff]
    %v357 = vld [vmem:[#allocation6 + $0x678] sm:$0xf]
    %v358 = vld [vmem:[#allocation6 + $0x67c] sm:$0xff]
    %v359 = vld [vmem:[#allocation6 + $0x684] sm:$0xff]
    %v360 = vld [vmem:[#allocation6 + $0x68c] sm:$0xf]
    %v361 = vld [vmem:[#allocation6 + $0x690] sm:$0xff]
    %v362 = vld [vmem:[#allocation6 + $0x698] sm:$0xff]
    %v363 = vld [vmem:[#allocation6 + $0x6a0] sm:$0xf]
    %v364 = vld [vmem:[#allocation6 + $0x6a4] sm:$0xff]
    %v365 = vld [vmem:[#allocation6 + $0x6ac] sm:$0xff]
    %v366 = vld [vmem:[#allocation6 + $0x6b4] sm:$0xf]
    %v367 = vld [vmem:[#allocation6 + $0x6b8] sm:$0xff]
    %v368 = vld [vmem:[#allocation6 + $0x6c0] sm:$0xff]
    %v369 = vld [vmem:[#allocation6 + $0x6c8] sm:$0xf]
    %v370 = vld [vmem:[#allocation6 + $0x6cc] sm:$0xff]
    %v371 = vld [vmem:[#allocation6 + $0x6d4] sm:$0xff]
    %v372 = vld [vmem:[#allocation6 + $0x6dc] sm:$0xf]
    %v373 = vld [vmem:[#allocation6 + $0x6e0] sm:$0xff]
    %v374 = vld [vmem:[#allocation6 + $0x6e8] sm:$0xff]
    %v375 = vld [vmem:[#allocation6 + $0x6f0] sm:$0xf]
    %v376 = vld [vmem:[#allocation6 + $0x6f4] sm:$0xff]
    %v377 = vld [vmem:[#allocation6 + $0x6fc] sm:$0xff]
    %v378 = vld [vmem:[#allocation6 + $0x704] sm:$0xf]
    %v379 = vld [vmem:[#allocation6 + $0x708] sm:$0xff]
    %v380 = vld [vmem:[#allocation6 + $0x710] sm:$0xff]
    %v381 = vld [vmem:[#allocation6 + $0x718] sm:$0xf]
    %v382 = vld [vmem:[#allocation6 + $0x71c] sm:$0xff]
    %v383 = vld [vmem:[#allocation6 + $0x724] sm:$0xff]
    %v384 = vld [vmem:[#allocation6 + $0x72c] sm:$0xf]
    %v385 = vld [vmem:[#allocation6 + $0x730] sm:$0xff]
    %v386 = vld [vmem:[#allocation6 + $0x738] sm:$0xff]
    %v387 = vld [vmem:[#allocation6 + $0x740] sm:$0xf]
    %v388 = vld [vmem:[#allocation6 + $0x744] sm:$0xff]
    %v389 = vld [vmem:[#allocation6 + $0x74c] sm:$0xff]
    %v390 = vld [vmem:[#allocation6 + $0x754] sm:$0xf]
    %v391 = vld [vmem:[#allocation6 + $0x758] sm:$0xff]
    %v392 = vld [vmem:[#allocation6 + $0x760] sm:$0xff]
    %v393 = vld [vmem:[#allocation6 + $0x768] sm:$0xf]
    %v394 = vld [vmem:[#allocation6 + $0x76c] sm:$0xff]
    %v395 = vld [vmem:[#allocation6 + $0x774] sm:$0xff]
    %v396 = vld [vmem:[#allocation6 + $0x77c] sm:$0xf]
    %v397 = vld [vmem:[#allocation6 + $0x780] sm:$0xff]
    %v398 = vld [vmem:[#allocation6 + $0x788] sm:$0xff]
    %v399 = vld [vmem:[#allocation6 + $0x790] sm:$0xf]
    %v400 = vld [vmem:[#allocation6 + $0x794] sm:$0xff]
    %v401 = vld [vmem:[#allocation6 + $0x79c] sm:$0xff]
    %v402 = vld [vmem:[#allocation6 + $0x7a4] sm:$0xf]
    %v407 = vunpack.c.l.b16 %v105
    %v408 = vunpack.c.h.b16 %v105
    %v409 = vunpack.c.l.b16 %v106
    %v410 = vunpack.c.h.b16 %v106
    %v411 = vunpack.c.l.b16 %v107
    %v412 = vunpack.c.h.b16 %v107
    %v413 = vunpack.c.l.b16 %v108
    %v414 = vpack.c.b16 %v407, %v407
    %v415 = vpack.c.b16 %v408, %v408
    %v416 = vpack.c.b16 %v409, %v409
    %v417 = vpack.c.b16 %v410, %v410
    %v418 = vpack.c.b16 %v411, %v411
    %v419 = vpack.c.b16 %v412, %v412
    %v420 = vpack.c.b16 %v413, %v413
    %v721 = vunpack.c.l.b16 %v109
    %v722 = vunpack.c.h.b16 %v109
    %v723 = vunpack.c.l.b16 %v110
    %v724 = vunpack.c.h.b16 %v110
    %v725 = vunpack.c.l.b16 %v111
    %v726 = vunpack.c.l.b16 %v112
    %v727 = vunpack.c.h.b16 %v112
    %v728 = vunpack.c.l.b16 %v113
    %v729 = vunpack.c.h.b16 %v113
    %v730 = vunpack.c.l.b16 %v114
    %v731 = vunpack.c.l.b16 %v115
    %v732 = vunpack.c.h.b16 %v115
    %v733 = vunpack.c.l.b16 %v116
    %v734 = vunpack.c.h.b16 %v116
    %v735 = vunpack.c.l.b16 %v117
    %v736 = vunpack.c.l.b16 %v118
    %v737 = vunpack.c.h.b16 %v118
    %v738 = vunpack.c.l.b16 %v119
    %v739 = vunpack.c.h.b16 %v119
    %v740 = vunpack.c.l.b16 %v120
    %v741 = vunpack.c.l.b16 %v121
    %v742 = vunpack.c.h.b16 %v121
    %v743 = vunpack.c.l.b16 %v122
    %v744 = vunpack.c.h.b16 %v122
    %v745 = vunpack.c.l.b16 %v123
    %v746 = vunpack.c.l.b16 %v124
    %v747 = vunpack.c.h.b16 %v124
    %v748 = vunpack.c.l.b16 %v125
    %v749 = vunpack.c.h.b16 %v125
    %v750 = vunpack.c.l.b16 %v126
    %v751 = vunpack.c.l.b16 %v127
    %v752 = vunpack.c.h.b16 %v127
    %v753 = vunpack.c.l.b16 %v128
    %v754 = vunpack.c.h.b16 %v128
    %v755 = vunpack.c.l.b16 %v129
    %v756 = vunpack.c.l.b16 %v130
    %v757 = vunpack.c.h.b16 %v130
    %v758 = vunpack.c.l.b16 %v131
    %v759 = vunpack.c.h.b16 %v131
    %v760 = vunpack.c.l.b16 %v132
    %v761 = vunpack.c.l.b16 %v133
    %v762 = vunpack.c.h.b16 %v133
    %v763 = vunpack.c.l.b16 %v134
    %v764 = vunpack.c.h.b16 %v134
    %v765 = vunpack.c.l.b16 %v135
    %v766 = vunpack.c.l.b16 %v136
    %v767 = vunpack.c.h.b16 %v136
    %v768 = vunpack.c.l.b16 %v137
    %v769 = vunpack.c.h.b16 %v137
    %v770 = vunpack.c.l.b16 %v138
    %v771 = vunpack.c.l.b16 %v139
    %v772 = vunpack.c.h.b16 %v139
    %v773 = vunpack.c.l.b16 %v140
    %v774 = vunpack.c.h.b16 %v140
    %v775 = vunpack.c.l.b16 %v141
    %v776 = vunpack.c.l.b16 %v142
    %v777 = vunpack.c.h.b16 %v142
    %v778 = vunpack.c.l.b16 %v143
    %v779 = vunpack.c.h.b16 %v143
    %v780 = vunpack.c.l.b16 %v144
    %v781 = vunpack.c.l.b16 %v145
    %v782 = vunpack.c.h.b16 %v145
    %v783 = vunpack.c.l.b16 %v146
    %v784 = vunpack.c.h.b16 %v146
    %v785 = vunpack.c.l.b16 %v147
    %v786 = vunpack.c.l.b16 %v148
    %v787 = vunpack.c.h.b16 %v148
    %v788 = vunpack.c.l.b16 %v149
    %v789 = vunpack.c.h.b16 %v149
    %v790 = vunpack.c.l.b16 %v150
    %v791 = vunpack.c.l.b16 %v151
    %v792 = vunpack.c.h.b16 %v151
    %v793 = vunpack.c.l.b16 %v152
    %v794 = vunpack.c.h.b16 %v152
    %v795 = vunpack.c.l.b16 %v153
    %v796 = vunpack.c.l.b16 %v154
    %v797 = vunpack.c.h.b16 %v154
    %v798 = vunpack.c.l.b16 %v155
    %v799 = vunpack.c.h.b16 %v155
    %v800 = vunpack.c.l.b16 %v156
    %v801 = vunpack.c.l.b16 %v157
    %v802 = vunpack.c.h.b16 %v157
    %v803 = vunpack.c.l.b16 %v158
    %v804 = vunpack.c.h.b16 %v158
    %v805 = vunpack.c.l.b16 %v159
    %v806 = vunpack.c.l.b16 %v160
    %v807 = vunpack.c.h.b16 %v160
    %v808 = vunpack.c.l.b16 %v161
    %v809 = vunpack.c.h.b16 %v161
    %v810 = vunpack.c.l.b16 %v162
    %v811 = vunpack.c.l.b16 %v163
    %v812 = vunpack.c.h.b16 %v163
    %v813 = vunpack.c.l.b16 %v164
    %v814 = vunpack.c.h.b16 %v164
    %v815 = vunpack.c.l.b16 %v165
    %v816 = vunpack.c.l.b16 %v166
    %v817 = vunpack.c.h.b16 %v166
    %v818 = vunpack.c.l.b16 %v167
    %v819 = vunpack.c.h.b16 %v167
    %v820 = vunpack.c.l.b16 %v168
    %v821 = vunpack.c.l.b16 %v169
    %v822 = vunpack.c.h.b16 %v169
    %v823 = vunpack.c.l.b16 %v170
    %v824 = vunpack.c.h.b16 %v170
    %v825 = vunpack.c.l.b16 %v171
    %v826 = vunpack.c.l.b16 %v172
    %v827 = vunpack.c.h.b16 %v172
    %v828 = vunpack.c.l.b16 %v173
    %v829 = vunpack.c.h.b16 %v173
    %v830 = vunpack.c.l.b16 %v174
    %v831 = vunpack.c.l.b16 %v175
    %v832 = vunpack.c.h.b16 %v175
    %v833 = vunpack.c.l.b16 %v176
    %v834 = vunpack.c.h.b16 %v176
    %v835 = vunpack.c.l.b16 %v177
    %v836 = vunpack.c.l.b16 %v178
    %v837 = vunpack.c.h.b16 %v178
    %v838 = vunpack.c.l.b16 %v179
    %v839 = vunpack.c.h.b16 %v179
    %v840 = vunpack.c.l.b16 %v180
    %v841 = vunpack.c.l.b16 %v181
    %v842 = vunpack.c.h.b16 %v181
    %v843 = vunpack.c.l.b16 %v182
    %v844 = vunpack.c.h.b16 %v182
    %v845 = vunpack.c.l.b16 %v183
    %v846 = vunpack.c.l.b16 %v184
    %v847 = vunpack.c.h.b16 %v184
    %v848 = vunpack.c.l.b16 %v185
    %v849 = vunpack.c.h.b16 %v185
    %v850 = vunpack.c.l.b16 %v186
    %v851 = vunpack.c.l.b16 %v187
    %v852 = vunpack.c.h.b16 %v187
    %v853 = vunpack.c.l.b16 %v188
    %v854 = vunpack.c.h.b16 %v188
    %v855 = vunpack.c.l.b16 %v189
    %v856 = vunpack.c.l.b16 %v190
    %v857 = vunpack.c.h.b16 %v190
    %v858 = vunpack.c.l.b16 %v191
    %v859 = vunpack.c.h.b16 %v191
    %v860 = vunpack.c.l.b16 %v192
    %v861 = vunpack.c.l.b16 %v193
    %v862 = vunpack.c.h.b16 %v193
    %v863 = vunpack.c.l.b16 %v194
    %v864 = vunpack.c.h.b16 %v194
    %v865 = vunpack.c.l.b16 %v195
    %v866 = vunpack.c.l.b16 %v196
    %v867 = vunpack.c.h.b16 %v196
    %v868 = vunpack.c.l.b16 %v197
    %v869 = vunpack.c.h.b16 %v197
    %v870 = vunpack.c.l.b16 %v198
    %v871 = vunpack.c.l.b16 %v199
    %v872 = vunpack.c.h.b16 %v199
    %v873 = vunpack.c.l.b16 %v200
    %v874 = vunpack.c.h.b16 %v200
    %v875 = vunpack.c.l.b16 %v201
    %v876 = vunpack.c.l.b16 %v202
    %v877 = vunpack.c.h.b16 %v202
    %v878 = vunpack.c.l.b16 %v203
    %v879 = vunpack.c.h.b16 %v203
    %v880 = vunpack.c.l.b16 %v204
    %v881 = vunpack.c.l.b16 %v205
    %v882 = vunpack.c.h.b16 %v205
    %v883 = vunpack.c.l.b16 %v206
    %v884 = vunpack.c.h.b16 %v206
    %v885 = vunpack.c.l.b16 %v207
    %v886 = vunpack.c.l.b16 %v208
    %v887 = vunpack.c.h.b16 %v208
    %v888 = vunpack.c.l.b16 %v209
    %v889 = vunpack.c.h.b16 %v209
    %v890 = vunpack.c.l.b16 %v210
    %v891 = vunpack.c.l.b16 %v211
    %v892 = vunpack.c.h.b16 %v211
    %v893 = vunpack.c.l.b16 %v212
    %v894 = vunpack.c.h.b16 %v212
    %v895 = vunpack.c.l.b16 %v213
    %v896 = vunpack.c.l.b16 %v214
    %v897 = vunpack.c.h.b16 %v214
    %v898 = vunpack.c.l.b16 %v215
    %v899 = vunpack.c.h.b16 %v215
    %v900 = vunpack.c.l.b16 %v216
    %v901 = vunpack.c.l.b16 %v217
    %v902 = vunpack.c.h.b16 %v217
    %v903 = vunpack.c.l.b16 %v218
    %v904 = vunpack.c.h.b16 %v218
    %v905 = vunpack.c.l.b16 %v219
    %v906 = vunpack.c.l.b16 %v220
    %v907 = vunpack.c.h.b16 %v220
    %v908 = vunpack.c.l.b16 %v221
    %v909 = vunpack.c.h.b16 %v221
    %v910 = vunpack.c.l.b16 %v222
    %v911 = vunpack.c.l.b16 %v223
    %v912 = vunpack.c.h.b16 %v223
    %v913 = vunpack.c.l.b16 %v224
    %v914 = vunpack.c.h.b16 %v224
    %v915 = vunpack.c.l.b16 %v225
    %v916 = vunpack.c.l.b16 %v226
    %v917 = vunpack.c.h.b16 %v226
    %v918 = vunpack.c.l.b16 %v227
    %v919 = vunpack.c.h.b16 %v227
    %v920 = vunpack.c.l.b16 %v228
    %v921 = vunpack.c.l.b16 %v229
    %v922 = vunpack.c.h.b16 %v229
    %v923 = vunpack.c.l.b16 %v230
    %v924 = vunpack.c.h.b16 %v230
    %v925 = vunpack.c.l.b16 %v231
    %v926 = vunpack.c.l.b16 %v232
    %v927 = vunpack.c.h.b16 %v232
    %v928 = vunpack.c.l.b16 %v233
    %v929 = vunpack.c.h.b16 %v233
    %v930 = vunpack.c.l.b16 %v234
    %v931 = vunpack.c.l.b16 %v235
    %v932 = vunpack.c.h.b16 %v235
    %v933 = vunpack.c.l.b16 %v236
    %v934 = vunpack.c.h.b16 %v236
    %v935 = vunpack.c.l.b16 %v237
    %v936 = vunpack.c.l.b16 %v238
    %v937 = vunpack.c.h.b16 %v238
    %v938 = vunpack.c.l.b16 %v239
    %v939 = vunpack.c.h.b16 %v239
    %v940 = vunpack.c.l.b16 %v240
    %v941 = vunpack.c.l.b16 %v241
    %v942 = vunpack.c.h.b16 %v241
    %v943 = vunpack.c.l.b16 %v242
    %v944 = vunpack.c.h.b16 %v242
    %v945 = vunpack.c.l.b16 %v243
    %v946 = vunpack.c.l.b16 %v244
    %v947 = vunpack.c.h.b16 %v244
    %v948 = vunpack.c.l.b16 %v245
    %v949 = vunpack.c.h.b16 %v245
    %v950 = vunpack.c.l.b16 %v246
    %v951 = vunpack.c.l.b16 %v247
    %v952 = vunpack.c.h.b16 %v247
    %v953 = vunpack.c.l.b16 %v248
    %v954 = vunpack.c.h.b16 %v248
    %v955 = vunpack.c.l.b16 %v249
    %v956 = vunpack.c.l.b16 %v250
    %v957 = vunpack.c.h.b16 %v250
    %v958 = vunpack.c.l.b16 %v251
    %v959 = vunpack.c.h.b16 %v251
    %v960 = vunpack.c.l.b16 %v252
    %v961 = vunpack.c.l.b16 %v253
    %v962 = vunpack.c.h.b16 %v253
    %v963 = vunpack.c.l.b16 %v254
    %v964 = vunpack.c.h.b16 %v254
    %v965 = vunpack.c.l.b16 %v255
    %v966 = vunpack.c.l.b16 %v256
    %v967 = vunpack.c.h.b16 %v256
    %v968 = vunpack.c.l.b16 %v257
    %v969 = vunpack.c.h.b16 %v257
    %v970 = vunpack.c.l.b16 %v258
    %v971 = vunpack.c.l.b16 %v259
    %v972 = vunpack.c.h.b16 %v259
    %v973 = vunpack.c.l.b16 %v260
    %v974 = vunpack.c.h.b16 %v260
    %v975 = vunpack.c.l.b16 %v261
    %v976 = vunpack.c.l.b16 %v262
    %v977 = vunpack.c.h.b16 %v262
    %v978 = vunpack.c.l.b16 %v263
    %v979 = vunpack.c.h.b16 %v263
    %v980 = vunpack.c.l.b16 %v264
    %v981 = vunpack.c.l.b16 %v265
    %v982 = vunpack.c.h.b16 %v265
    %v983 = vunpack.c.l.b16 %v266
    %v984 = vunpack.c.h.b16 %v266
    %v985 = vunpack.c.l.b16 %v267
    %v986 = vunpack.c.l.b16 %v268
    %v987 = vunpack.c.h.b16 %v268
    %v988 = vunpack.c.l.b16 %v269
    %v989 = vunpack.c.h.b16 %v269
    %v990 = vunpack.c.l.b16 %v270
    %v991 = vunpack.c.l.b16 %v271
    %v992 = vunpack.c.h.b16 %v271
    %v993 = vunpack.c.l.b16 %v272
    %v994 = vunpack.c.h.b16 %v272
    %v995 = vunpack.c.l.b16 %v273
    %v996 = vunpack.c.l.b16 %v274
    %v997 = vunpack.c.h.b16 %v274
    %v998 = vunpack.c.l.b16 %v275
    %v999 = vunpack.c.h.b16 %v275
    %v1000 = vunpack.c.l.b16 %v276
    %v1001 = vunpack.c.l.b16 %v277
    %v1002 = vunpack.c.h.b16 %v277
    %v1003 = vunpack.c.l.b16 %v278
    %v1004 = vunpack.c.h.b16 %v278
    %v1005 = vunpack.c.l.b16 %v279
    %v1006 = vunpack.c.l.b16 %v280
    %v1007 = vunpack.c.h.b16 %v280
    %v1008 = vunpack.c.l.b16 %v281
    %v1009 = vunpack.c.h.b16 %v281
    %v1010 = vunpack.c.l.b16 %v282
    %v1011 = vunpack.c.l.b16 %v283
    %v1012 = vunpack.c.h.b16 %v283
    %v1013 = vunpack.c.l.b16 %v284
    %v1014 = vunpack.c.h.b16 %v284
    %v1015 = vunpack.c.l.b16 %v285
    %v1016 = vunpack.c.l.b16 %v286
    %v1017 = vunpack.c.h.b16 %v286
    %v1018 = vunpack.c.l.b16 %v287
    %v1019 = vunpack.c.h.b16 %v287
    %v1020 = vunpack.c.l.b16 %v288
    %v1021 = vunpack.c.l.b16 %v289
    %v1022 = vunpack.c.h.b16 %v289
    %v1023 = vunpack.c.l.b16 %v290
    %v1024 = vunpack.c.h.b16 %v290
    %v1025 = vunpack.c.l.b16 %v291
    %v1026 = vunpack.c.l.b16 %v292
    %v1027 = vunpack.c.h.b16 %v292
    %v1028 = vunpack.c.l.b16 %v293
    %v1029 = vunpack.c.h.b16 %v293
    %v1030 = vunpack.c.l.b16 %v294
    %v1031 = vunpack.c.l.b16 %v295
    %v1032 = vunpack.c.h.b16 %v295
    %v1033 = vunpack.c.l.b16 %v296
    %v1034 = vunpack.c.h.b16 %v296
    %v1035 = vunpack.c.l.b16 %v297
    %v1036 = vunpack.c.l.b16 %v298
    %v1037 = vunpack.c.h.b16 %v298
    %v1038 = vunpack.c.l.b16 %v299
    %v1039 = vunpack.c.h.b16 %v299
    %v1040 = vunpack.c.l.b16 %v300
    %v1041 = vunpack.c.l.b16 %v301
    %v1042 = vunpack.c.h.b16 %v301
    %v1043 = vunpack.c.l.b16 %v302
    %v1044 = vunpack.c.h.b16 %v302
    %v1045 = vunpack.c.l.b16 %v303
    %v1046 = vunpack.c.l.b16 %v304
    %v1047 = vunpack.c.h.b16 %v304
    %v1048 = vunpack.c.l.b16 %v305
    %v1049 = vunpack.c.h.b16 %v305
    %v1050 = vunpack.c.l.b16 %v306
    %v1051 = vunpack.c.l.b16 %v307
    %v1052 = vunpack.c.h.b16 %v307
    %v1053 = vunpack.c.l.b16 %v308
    %v1054 = vunpack.c.h.b16 %v308
    %v1055 = vunpack.c.l.b16 %v309
    %v1056 = vunpack.c.l.b16 %v310
    %v1057 = vunpack.c.h.b16 %v310
    %v1058 = vunpack.c.l.b16 %v311
    %v1059 = vunpack.c.h.b16 %v311
    %v1060 = vunpack.c.l.b16 %v312
    %v1061 = vunpack.c.l.b16 %v313
    %v1062 = vunpack.c.h.b16 %v313
    %v1063 = vunpack.c.l.b16 %v314
    %v1064 = vunpack.c.h.b16 %v314
    %v1065 = vunpack.c.l.b16 %v315
    %v1066 = vunpack.c.l.b16 %v316
    %v1067 = vunpack.c.h.b16 %v316
    %v1068 = vunpack.c.l.b16 %v317
    %v1069 = vunpack.c.h.b16 %v317
    %v1070 = vunpack.c.l.b16 %v318
    %v1071 = vunpack.c.l.b16 %v319
    %v1072 = vunpack.c.h.b16 %v319
    %v1073 = vunpack.c.l.b16 %v320
    %v1074 = vunpack.c.h.b16 %v320
    %v1075 = vunpack.c.l.b16 %v321
    %v1076 = vunpack.c.l.b16 %v322
    %v1077 = vunpack.c.h.b16 %v322
    %v1078 = vunpack.c.l.b16 %v323
    %v1079 = vunpack.c.h.b16 %v323
    %v1080 = vunpack.c.l.b16 %v324
    %v1081 = vunpack.c.l.b16 %v325
    %v1082 = vunpack.c.h.b16 %v325
    %v1083 = vunpack.c.l.b16 %v326
    %v1084 = vunpack.c.h.b16 %v326
    %v1085 = vunpack.c.l.b16 %v327
    %v1086 = vunpack.c.l.b16 %v328
    %v1087 = vunpack.c.h.b16 %v328
    %v1088 = vunpack.c.l.b16 %v329
    %v1089 = vunpack.c.h.b16 %v329
    %v1090 = vunpack.c.l.b16 %v330
    %v1091 = vunpack.c.l.b16 %v331
    %v1092 = vunpack.c.h.b16 %v331
    %v1093 = vunpack.c.l.b16 %v332
    %v1094 = vunpack.c.h.b16 %v332
    %v1095 = vunpack.c.l.b16 %v333
    %v1096 = vunpack.c.l.b16 %v334
    %v1097 = vunpack.c.h.b16 %v334
    %v1098 = vunpack.c.l.b16 %v335
    %v1099 = vunpack.c.h.b16 %v335
    %v1100 = vunpack.c.l.b16 %v336
    %v1101 = vunpack.c.l.b16 %v337
    %v1102 = vunpack.c.h.b16 %v337
    %v1103 = vunpack.c.l.b16 %v338
    %v1104 = vunpack.c.h.b16 %v338
    %v1105 = vunpack.c.l.b16 %v339
    %v1106 = vunpack.c.l.b16 %v340
    %v1107 = vunpack.c.h.b16 %v340
    %v1108 = vunpack.c.l.b16 %v341
    %v1109 = vunpack.c.h.b16 %v341
    %v1110 = vunpack.c.l.b16 %v342
    %v1111 = vunpack.c.l.b16 %v343
    %v1112 = vunpack.c.h.b16 %v343
    %v1113 = vunpack.c.l.b16 %v344
    %v1114 = vunpack.c.h.b16 %v344
    %v1115 = vunpack.c.l.b16 %v345
    %v1116 = vunpack.c.l.b16 %v346
    %v1117 = vunpack.c.h.b16 %v346
    %v1118 = vunpack.c.l.b16 %v347
    %v1119 = vunpack.c.h.b16 %v347
    %v1120 = vunpack.c.l.b16 %v348
    %v1121 = vunpack.c.l.b16 %v349
    %v1122 = vunpack.c.h.b16 %v349
    %v1123 = vunpack.c.l.b16 %v350
    %v1124 = vunpack.c.h.b16 %v350
    %v1125 = vunpack.c.l.b16 %v351
    %v1126 = vunpack.c.l.b16 %v352
    %v1127 = vunpack.c.h.b16 %v352
    %v1128 = vunpack.c.l.b16 %v353
    %v1129 = vunpack.c.h.b16 %v353
    %v1130 = vunpack.c.l.b16 %v354
    %v1131 = vunpack.c.l.b16 %v355
    %v1132 = vunpack.c.h.b16 %v355
    %v1133 = vunpack.c.l.b16 %v356
    %v1134 = vunpack.c.h.b16 %v356
    %v1135 = vunpack.c.l.b16 %v357
    %v1136 = vunpack.c.l.b16 %v358
    %v1137 = vunpack.c.h.b16 %v358
    %v1138 = vunpack.c.l.b16 %v359
    %v1139 = vunpack.c.h.b16 %v359
    %v1140 = vunpack.c.l.b16 %v360
    %v1141 = vunpack.c.l.b16 %v361
    %v1142 = vunpack.c.h.b16 %v361
    %v1143 = vunpack.c.l.b16 %v362
    %v1144 = vunpack.c.h.b16 %v362
    %v1145 = vunpack.c.l.b16 %v363
    %v1146 = vunpack.c.l.b16 %v364
    %v1147 = vunpack.c.h.b16 %v364
    %v1148 = vunpack.c.l.b16 %v365
    %v1149 = vunpack.c.h.b16 %v365
    %v1150 = vunpack.c.l.b16 %v366
    %v1151 = vunpack.c.l.b16 %v367
    %v1152 = vunpack.c.h.b16 %v367
    %v1153 = vunpack.c.l.b16 %v368
    %v1154 = vunpack.c.h.b16 %v368
    %v1155 = vunpack.c.l.b16 %v369
    %v1156 = vunpack.c.l.b16 %v370
    %v1157 = vunpack.c.h.b16 %v370
    %v1158 = vunpack.c.l.b16 %v371
    %v1159 = vunpack.c.h.b16 %v371
    %v1160 = vunpack.c.l.b16 %v372
    %v1161 = vunpack.c.l.b16 %v373
    %v1162 = vunpack.c.h.b16 %v373
    %v1163 = vunpack.c.l.b16 %v374
    %v1164 = vunpack.c.h.b16 %v374
    %v1165 = vunpack.c.l.b16 %v375
    %v1166 = vunpack.c.l.b16 %v376
    %v1167 = vunpack.c.h.b16 %v376
    %v1168 = vunpack.c.l.b16 %v377
    %v1169 = vunpack.c.h.b16 %v377
    %v1170 = vunpack.c.l.b16 %v378
    %v1171 = vunpack.c.l.b16 %v379
    %v1172 = vunpack.c.h.b16 %v379
    %v1173 = vunpack.c.l.b16 %v380
    %v1174 = vunpack.c.h.b16 %v380
    %v1175 = vunpack.c.l.b16 %v381
    %v1176 = vunpack.c.l.b16 %v382
    %v1177 = vunpack.c.h.b16 %v382
    %v1178 = vunpack.c.l.b16 %v383
    %v1179 = vunpack.c.h.b16 %v383
    %v1180 = vunpack.c.l.b16 %v384
    %v1181 = vunpack.c.l.b16 %v385
    %v1182 = vunpack.c.h.b16 %v385
    %v1183 = vunpack.c.l.b16 %v386
    %v1184 = vunpack.c.h.b16 %v386
    %v1185 = vunpack.c.l.b16 %v387
    %v1186 = vunpack.c.l.b16 %v388
    %v1187 = vunpack.c.h.b16 %v388
    %v1188 = vunpack.c.l.b16 %v389
    %v1189 = vunpack.c.h.b16 %v389
    %v1190 = vunpack.c.l.b16 %v390
    %v1191 = vunpack.c.l.b16 %v391
    %v1192 = vunpack.c.h.b16 %v391
    %v1193 = vunpack.c.l.b16 %v392
    %v1194 = vunpack.c.h.b16 %v392
    %v1195 = vunpack.c.l.b16 %v393
    %v1196 = vunpack.c.l.b16 %v394
    %v1197 = vunpack.c.h.b16 %v394
    %v1198 = vunpack.c.l.b16 %v395
    %v1199 = vunpack.c.h.b16 %v395
    %v1200 = vunpack.c.l.b16 %v396
    %v1201 = vunpack.c.l.b16 %v397
    %v1202 = vunpack.c.h.b16 %v397
    %v1203 = vunpack.c.l.b16 %v398
    %v1204 = vunpack.c.h.b16 %v398
    %v1205 = vunpack.c.l.b16 %v399
    %v1206 = vunpack.c.l.b16 %v400
    %v1207 = vunpack.c.h.b16 %v400
    %v1208 = vunpack.c.l.b16 %v401
    %v1209 = vunpack.c.h.b16 %v401
    %v1210 = vunpack.c.l.b16 %v402
    %v1211 = vpack.c.b16 %v726, %v721
    %v1212 = vpack.c.b16 %v727, %v722
    %v1213 = vpack.c.b16 %v728, %v723
    %v1214 = vpack.c.b16 %v729, %v724
    %v1215 = vpack.c.b16 %v730, %v725
    %v1216 = vpack.c.b16 %v736, %v731
    %v1217 = vpack.c.b16 %v737, %v732
    %v1218 = vpack.c.b16 %v738, %v733
    %v1219 = vpack.c.b16 %v739, %v734
    %v1220 = vpack.c.b16 %v740, %v735
    %v1221 = vpack.c.b16 %v746, %v741
    %v1222 = vpack.c.b16 %v747, %v742
    %v1223 = vpack.c.b16 %v748, %v743
    %v1224 = vpack.c.b16 %v749, %v744
    %v1225 = vpack.c.b16 %v750, %v745
    %v1226 = vpack.c.b16 %v756, %v751
    %v1227 = vpack.c.b16 %v757, %v752
    %v1228 = vpack.c.b16 %v758, %v753
    %v1229 = vpack.c.b16 %v759, %v754
    %v1230 = vpack.c.b16 %v760, %v755
    %v1231 = vpack.c.b16 %v766, %v761
    %v1232 = vpack.c.b16 %v767, %v762
    %v1233 = vpack.c.b16 %v768, %v763
    %v1234 = vpack.c.b16 %v769, %v764
    %v1235 = vpack.c.b16 %v770, %v765
    %v1236 = vpack.c.b16 %v776, %v771
    %v1237 = vpack.c.b16 %v777, %v772
    %v1238 = vpack.c.b16 %v778, %v773
    %v1239 = vpack.c.b16 %v779, %v774
    %v1240 = vpack.c.b16 %v780, %v775
    %v1241 = vpack.c.b16 %v786, %v781
    %v1242 = vpack.c.b16 %v787, %v782
    %v1243 = vpack.c.b16 %v788, %v783
    %v1244 = vpack.c.b16 %v789, %v784
    %v1245 = vpack.c.b16 %v790, %v785
    %v1246 = vpack.c.b16 %v796, %v791
    %v1247 = vpack.c.b16 %v797, %v792
    %v1248 = vpack.c.b16 %v798, %v793
    %v1249 = vpack.c.b16 %v799, %v794
    %v1250 = vpack.c.b16 %v800, %v795
    %v1251 = vpack.c.b16 %v806, %v801
    %v1252 = vpack.c.b16 %v807, %v802
    %v1253 = vpack.c.b16 %v808, %v803
    %v1254 = vpack.c.b16 %v809, %v804
    %v1255 = vpack.c.b16 %v810, %v805
    %v1256 = vpack.c.b16 %v816, %v811
    %v1257 = vpack.c.b16 %v817, %v812
    %v1258 = vpack.c.b16 %v818, %v813
    %v1259 = vpack.c.b16 %v819, %v814
    %v1260 = vpack.c.b16 %v820, %v815
    %v1261 = vpack.c.b16 %v826, %v821
    %v1262 = vpack.c.b16 %v827, %v822
    %v1263 = vpack.c.b16 %v828, %v823
    %v1264 = vpack.c.b16 %v829, %v824
    %v1265 = vpack.c.b16 %v830, %v825
    %v1266 = vpack.c.b16 %v836, %v831
    %v1267 = vpack.c.b16 %v837, %v832
    %v1268 = vpack.c.b16 %v838, %v833
    %v1269 = vpack.c.b16 %v839, %v834
    %v1270 = vpack.c.b16 %v840, %v835
    %v1271 = vpack.c.b16 %v846, %v841
    %v1272 = vpack.c.b16 %v847, %v842
    %v1273 = vpack.c.b16 %v848, %v843
    %v1274 = vpack.c.b16 %v849, %v844
    %v1275 = vpack.c.b16 %v850, %v845
    %v1276 = vpack.c.b16 %v856, %v851
    %v1277 = vpack.c.b16 %v857, %v852
    %v1278 = vpack.c.b16 %v858, %v853
    %v1279 = vpack.c.b16 %v859, %v854
    %v1280 = vpack.c.b16 %v860, %v855
    %v1281 = vpack.c.b16 %v866, %v861
    %v1282 = vpack.c.b16 %v867, %v862
    %v1283 = vpack.c.b16 %v868, %v863
    %v1284 = vpack.c.b16 %v869, %v864
    %v1285 = vpack.c.b16 %v870, %v865
    %v1286 = vpack.c.b16 %v876, %v871
    %v1287 = vpack.c.b16 %v877, %v872
    %v1288 = vpack.c.b16 %v878, %v873
    %v1289 = vpack.c.b16 %v879, %v874
    %v1290 = vpack.c.b16 %v880, %v875
    %v1291 = vpack.c.b16 %v886, %v881
    %v1292 = vpack.c.b16 %v887, %v882
    %v1293 = vpack.c.b16 %v888, %v883
    %v1294 = vpack.c.b16 %v889, %v884
    %v1295 = vpack.c.b16 %v890, %v885
    %v1296 = vpack.c.b16 %v896, %v891
    %v1297 = vpack.c.b16 %v897, %v892
    %v1298 = vpack.c.b16 %v898, %v893
    %v1299 = vpack.c.b16 %v899, %v894
    %v1300 = vpack.c.b16 %v900, %v895
    %v1301 = vpack.c.b16 %v906, %v901
    %v1302 = vpack.c.b16 %v907, %v902
    %v1303 = vpack.c.b16 %v908, %v903
    %v1304 = vpack.c.b16 %v909, %v904
    %v1305 = vpack.c.b16 %v910, %v905
    %v1306 = vpack.c.b16 %v916, %v911
    %v1307 = vpack.c.b16 %v917, %v912
    %v1308 = vpack.c.b16 %v918, %v913
    %v1309 = vpack.c.b16 %v919, %v914
    %v1310 = vpack.c.b16 %v920, %v915
    %v1311 = vpack.c.b16 %v926, %v921
    %v1312 = vpack.c.b16 %v927, %v922
    %v1313 = vpack.c.b16 %v928, %v923
    %v1314 = vpack.c.b16 %v929, %v924
    %v1315 = vpack.c.b16 %v930, %v925
    %v1316 = vpack.c.b16 %v936, %v931
    %v1317 = vpack.c.b16 %v937, %v932
    %v1318 = vpack.c.b16 %v938, %v933
    %v1319 = vpack.c.b16 %v939, %v934
    %v1320 = vpack.c.b16 %v940, %v935
    %v1321 = vpack.c.b16 %v946, %v941
    %v1322 = vpack.c.b16 %v947, %v942
    %v1323 = vpack.c.b16 %v948, %v943
    %v1324 = vpack.c.b16 %v949, %v944
    %v1325 = vpack.c.b16 %v950, %v945
    %v1326 = vpack.c.b16 %v956, %v951
    %v1327 = vpack.c.b16 %v957, %v952
    %v1328 = vpack.c.b16 %v958, %v953
    %v1329 = vpack.c.b16 %v959, %v954
    %v1330 = vpack.c.b16 %v960, %v955
    %v1331 = vpack.c.b16 %v966, %v961
    %v1332 = vpack.c.b16 %v967, %v962
    %v1333 = vpack.c.b16 %v968, %v963
    %v1334 = vpack.c.b16 %v969, %v964
    %v1335 = vpack.c.b16 %v970, %v965
    %v1336 = vpack.c.b16 %v976, %v971
    %v1337 = vpack.c.b16 %v977, %v972
    %v1338 = vpack.c.b16 %v978, %v973
    %v1339 = vpack.c.b16 %v979, %v974
    %v1340 = vpack.c.b16 %v980, %v975
    %v1341 = vpack.c.b16 %v986, %v981
    %v1342 = vpack.c.b16 %v987, %v982
    %v1343 = vpack.c.b16 %v988, %v983
    %v1344 = vpack.c.b16 %v989, %v984
    %v1345 = vpack.c.b16 %v990, %v985
    %v1346 = vpack.c.b16 %v996, %v991
    %v1347 = vpack.c.b16 %v997, %v992
    %v1348 = vpack.c.b16 %v998, %v993
    %v1349 = vpack.c.b16 %v999, %v994
    %v1350 = vpack.c.b16 %v1000, %v995
    %v1351 = vpack.c.b16 %v1006, %v1001
    %v1352 = vpack.c.b16 %v1007, %v1002
    %v1353 = vpack.c.b16 %v1008, %v1003
    %v1354 = vpack.c.b16 %v1009, %v1004
    %v1355 = vpack.c.b16 %v1010, %v1005
    %v1356 = vpack.c.b16 %v1016, %v1011
    %v1357 = vpack.c.b16 %v1017, %v1012
    %v1358 = vpack.c.b16 %v1018, %v1013
    %v1359 = vpack.c.b16 %v1019, %v1014
    %v1360 = vpack.c.b16 %v1020, %v1015
    %v1361 = vpack.c.b16 %v1026, %v1021
    %v1362 = vpack.c.b16 %v1027, %v1022
    %v1363 = vpack.c.b16 %v1028, %v1023
    %v1364 = vpack.c.b16 %v1029, %v1024
    %v1365 = vpack.c.b16 %v1030, %v1025
    %v1366 = vpack.c.b16 %v1036, %v1031
    %v1367 = vpack.c.b16 %v1037, %v1032
    %v1368 = vpack.c.b16 %v1038, %v1033
    %v1369 = vpack.c.b16 %v1039, %v1034
    %v1370 = vpack.c.b16 %v1040, %v1035
    %v1371 = vpack.c.b16 %v1046, %v1041
    %v1372 = vpack.c.b16 %v1047, %v1042
    %v1373 = vpack.c.b16 %v1048, %v1043
    %v1374 = vpack.c.b16 %v1049, %v1044
    %v1375 = vpack.c.b16 %v1050, %v1045
    %v1376 = vpack.c.b16 %v1056, %v1051
    %v1377 = vpack.c.b16 %v1057, %v1052
    %v1378 = vpack.c.b16 %v1058, %v1053
    %v1379 = vpack.c.b16 %v1059, %v1054
    %v1380 = vpack.c.b16 %v1060, %v1055
    %v1381 = vpack.c.b16 %v1066, %v1061
    %v1382 = vpack.c.b16 %v1067, %v1062
    %v1383 = vpack.c.b16 %v1068, %v1063
    %v1384 = vpack.c.b16 %v1069, %v1064
    %v1385 = vpack.c.b16 %v1070, %v1065
    %v1386 = vpack.c.b16 %v1076, %v1071
    %v1387 = vpack.c.b16 %v1077, %v1072
    %v1388 = vpack.c.b16 %v1078, %v1073
    %v1389 = vpack.c.b16 %v1079, %v1074
    %v1390 = vpack.c.b16 %v1080, %v1075
    %v1391 = vpack.c.b16 %v1086, %v1081
    %v1392 = vpack.c.b16 %v1087, %v1082
    %v1393 = vpack.c.b16 %v1088, %v1083
    %v1394 = vpack.c.b16 %v1089, %v1084
    %v1395 = vpack.c.b16 %v1090, %v1085
    %v1396 = vpack.c.b16 %v1096, %v1091
    %v1397 = vpack.c.b16 %v1097, %v1092
    %v1398 = vpack.c.b16 %v1098, %v1093
    %v1399 = vpack.c.b16 %v1099, %v1094
    %v1400 = vpack.c.b16 %v1100, %v1095
    %v1401 = vpack.c.b16 %v1106, %v1101
    %v1402 = vpack.c.b16 %v1107, %v1102
    %v1403 = vpack.c.b16 %v1108, %v1103
    %v1404 = vpack.c.b16 %v1109, %v1104
    %v1405 = vpack.c.b16 %v1110, %v1105
    %v1406 = vpack.c.b16 %v1116, %v1111
    %v1407 = vpack.c.b16 %v1117, %v1112
    %v1408 = vpack.c.b16 %v1118, %v1113
    %v1409 = vpack.c.b16 %v1119, %v1114
    %v1410 = vpack.c.b16 %v1120, %v1115
    %v1411 = vpack.c.b16 %v1126, %v1121
    %v1412 = vpack.c.b16 %v1127, %v1122
    %v1413 = vpack.c.b16 %v1128, %v1123
    %v1414 = vpack.c.b16 %v1129, %v1124
    %v1415 = vpack.c.b16 %v1130, %v1125
    %v1416 = vpack.c.b16 %v1136, %v1131
    %v1417 = vpack.c.b16 %v1137, %v1132
    %v1418 = vpack.c.b16 %v1138, %v1133
    %v1419 = vpack.c.b16 %v1139, %v1134
    %v1420 = vpack.c.b16 %v1140, %v1135
    %v1421 = vpack.c.b16 %v1146, %v1141
    %v1422 = vpack.c.b16 %v1147, %v1142
    %v1423 = vpack.c.b16 %v1148, %v1143
    %v1424 = vpack.c.b16 %v1149, %v1144
    %v1425 = vpack.c.b16 %v1150, %v1145
    %v1426 = vpack.c.b16 %v1156, %v1151
    %v1427 = vpack.c.b16 %v1157, %v1152
    %v1428 = vpack.c.b16 %v1158, %v1153
    %v1429 = vpack.c.b16 %v1159, %v1154
    %v1430 = vpack.c.b16 %v1160, %v1155
    %v1431 = vpack.c.b16 %v1166, %v1161
    %v1432 = vpack.c.b16 %v1167, %v1162
    %v1433 = vpack.c.b16 %v1168, %v1163
    %v1434 = vpack.c.b16 %v1169, %v1164
    %v1435 = vpack.c.b16 %v1170, %v1165
    %v1436 = vpack.c.b16 %v1176, %v1171
    %v1437 = vpack.c.b16 %v1177, %v1172
    %v1438 = vpack.c.b16 %v1178, %v1173
    %v1439 = vpack.c.b16 %v1179, %v1174
    %v1440 = vpack.c.b16 %v1180, %v1175
    %v1441 = vpack.c.b16 %v1186, %v1181
    %v1442 = vpack.c.b16 %v1187, %v1182
    %v1443 = vpack.c.b16 %v1188, %v1183
    %v1444 = vpack.c.b16 %v1189, %v1184
    %v1445 = vpack.c.b16 %v1190, %v1185
    %v1446 = vpack.c.b16 %v1196, %v1191
    %v1447 = vpack.c.b16 %v1197, %v1192
    %v1448 = vpack.c.b16 %v1198, %v1193
    %v1449 = vpack.c.b16 %v1199, %v1194
    %v1450 = vpack.c.b16 %v1200, %v1195
    %v1451 = vpack.c.b16 %v1206, %v1201
    %v1452 = vpack.c.b16 %v1207, %v1202
    %v1453 = vpack.c.b16 %v1208, %v1203
    %v1454 = vpack.c.b16 %v1209, %v1204
    %v1455 = vpack.c.b16 %v1210, %v1205
    %vm1701 = vcmask 130048
    %v1703 = vsel %vm1701, %v420, 0
    %1705 = vmatprep.subr.bf16.mxu0 %v1212
    %1706 = vmatpush1.bf16.msra.mxu0 %v1211
    %1707 = vmatprep.subr.bf16.mxu0 %v1217
    %1708 = vmatpush1.bf16.msra.mxu0 %v1216
    %1709 = vmatprep.subr.bf16.mxu0 %v1222
    %1710 = vmatpush1.bf16.msra.mxu0 %v1221
    %1711 = vmatprep.subr.bf16.mxu0 %v1227
    %1712 = vmatpush1.bf16.msra.mxu0 %v1226
    %1713 = vmatprep.subr.bf16.mxu0 %v1232
    %1714 = vmatpush1.bf16.msra.mxu0 %v1231
    %1715 = vmatprep.subr.bf16.mxu0 %v1237
    %1716 = vmatpush1.bf16.msra.mxu0 %v1236
    %1717 = vmatprep.subr.bf16.mxu0 %v1242
    %1718 = vmatpush1.bf16.msra.mxu0 %v1241
    %1719 = vmatprep.subr.bf16.mxu0 %v1247
    %1720 = vmatpush1.bf16.msra.mxu0 %v1246
    %1721 = vmatprep.subr.bf16.mxu0 %v1252
    %1722 = vmatpush1.bf16.msra.mxu0 %v1251
    %1723 = vmatprep.subr.bf16.mxu0 %v1257
    %1724 = vmatpush1.bf16.msra.mxu0 %v1256
    %1725 = vmatprep.subr.bf16.mxu0 %v1262
    %1726 = vmatpush1.bf16.msra.mxu0 %v1261
    %1727 = vmatprep.subr.bf16.mxu0 %v1267
    %1728 = vmatpush1.bf16.msra.mxu0 %v1266
    %1729 = vmatprep.subr.bf16.mxu0 %v1272
    %1730 = vmatpush1.bf16.msra.mxu0 %v1271
    %1731 = vmatprep.subr.bf16.mxu0 %v1277
    %1732 = vmatpush1.bf16.msra.mxu0 %v1276
    %1733 = vmatprep.subr.bf16.mxu0 %v1282
    %1734 = vmatpush1.bf16.msra.mxu0 %v1281
    %1735 = vmatprep.subr.bf16.mxu0 %v1287
    %1736 = vmatpush1.bf16.msra.mxu0 %v1286
    %1737 = vmatprep.mubr.bf16.mxu0 %v415
    %1738 = vmatmul.mubr.bf16.gmra.mrb[0].mxu0 %v414
    %v1739 = vpop.f32.mrb[0].mxu0
    %v1740 = vadd.f32 0.0, %v1739
    %v1741 = vpop.f32.mrb[0].mxu0
    %v1742 = vadd.f32 0.0, %v1741
    %v1743 = vpop.f32.mrb[0].mxu0
    %v1744 = vpop.f32.mrb[0].mxu0
    %1745 = vdwg.mxu0
    %1746 = vmatprep.subr.bf16.mxu0 %v1292
    %1747 = vmatpush1.bf16.msra.mxu0 %v1291
    %1748 = vmatprep.subr.bf16.mxu0 %v1297
    %1749 = vmatpush1.bf16.msra.mxu0 %v1296
    %1750 = vmatprep.subr.bf16.mxu0 %v1302
    %1751 = vmatpush1.bf16.msra.mxu0 %v1301
    %1752 = vmatprep.subr.bf16.mxu0 %v1307
    %1753 = vmatpush1.bf16.msra.mxu0 %v1306
    %1754 = vmatprep.subr.bf16.mxu0 %v1312
    %1755 = vmatpush1.bf16.msra.mxu0 %v1311
    %1756 = vmatprep.subr.bf16.mxu0 %v1317
    %1757 = vmatpush1.bf16.msra.mxu0 %v1316
    %1758 = vmatprep.subr.bf16.mxu0 %v1322
    %1759 = vmatpush1.bf16.msra.mxu0 %v1321
    %1760 = vmatprep.subr.bf16.mxu0 %v1327
    %1761 = vmatpush1.bf16.msra.mxu0 %v1326
    %1762 = vmatprep.subr.bf16.mxu0 %v1332
    %1763 = vmatpush1.bf16.msra.mxu0 %v1331
    %1764 = vmatprep.subr.bf16.mxu0 %v1337
    %1765 = vmatpush1.bf16.msra.mxu0 %v1336
    %1766 = vmatprep.subr.bf16.mxu0 %v1342
    %1767 = vmatpush1.bf16.msra.mxu0 %v1341
    %1768 = vmatprep.subr.bf16.mxu0 %v1347
    %1769 = vmatpush1.bf16.msra.mxu0 %v1346
    %1770 = vmatprep.subr.bf16.mxu0 %v1352
    %1771 = vmatpush1.bf16.msra.mxu0 %v1351
    %1772 = vmatprep.subr.bf16.mxu0 %v1357
    %1773 = vmatpush1.bf16.msra.mxu0 %v1356
    %1774 = vmatprep.subr.bf16.mxu0 %v1362
    %1775 = vmatpush1.bf16.msra.mxu0 %v1361
    %1776 = vmatprep.subr.bf16.mxu0 %v1367
    %1777 = vmatpush1.bf16.msra.mxu0 %v1366
    %1778 = vmatprep.mubr.bf16.mxu0 %v417
    %1779 = vmatmul.mubr.bf16.gmra.mrb[0].mxu0 %v416
    %v1780 = vpop.f32.mrb[0].mxu0
    %v1781 = vadd.f32 %v1740, %v1780
    %v1782 = vpop.f32.mrb[0].mxu0
    %v1783 = vadd.f32 %v1742, %v1782
    %v1784 = vpop.f32.mrb[0].mxu0
    %v1785 = vpop.f32.mrb[0].mxu0
    %1786 = vdwg.mxu0
    %1787 = vmatprep.subr.bf16.mxu0 %v1372
    %1788 = vmatpush1.bf16.msra.mxu0 %v1371
    %1789 = vmatprep.subr.bf16.mxu0 %v1377
    %1790 = vmatpush1.bf16.msra.mxu0 %v1376
    %1791 = vmatprep.subr.bf16.mxu0 %v1382
    %1792 = vmatpush1.bf16.msra.mxu0 %v1381
    %1793 = vmatprep.subr.bf16.mxu0 %v1387
    %1794 = vmatpush1.bf16.msra.mxu0 %v1386
    %1795 = vmatprep.subr.bf16.mxu0 %v1392
    %1796 = vmatpush1.bf16.msra.mxu0 %v1391
    %1797 = vmatprep.subr.bf16.mxu0 %v1397
    %1798 = vmatpush1.bf16.msra.mxu0 %v1396
    %1799 = vmatprep.subr.bf16.mxu0 %v1402
    %1800 = vmatpush1.bf16.msra.mxu0 %v1401
    %1801 = vmatprep.subr.bf16.mxu0 %v1407
    %1802 = vmatpush1.bf16.msra.mxu0 %v1406
    %1803 = vmatprep.subr.bf16.mxu0 %v1412
    %1804 = vmatpush1.bf16.msra.mxu0 %v1411
    %1805 = vmatprep.subr.bf16.mxu0 %v1417
    %1806 = vmatpush1.bf16.msra.mxu0 %v1416
    %1807 = vmatprep.subr.bf16.mxu0 %v1422
    %1808 = vmatpush1.bf16.msra.mxu0 %v1421
    %1809 = vmatprep.subr.bf16.mxu0 %v1427
    %1810 = vmatpush1.bf16.msra.mxu0 %v1426
    %1811 = vmatprep.subr.bf16.mxu0 %v1432
    %1812 = vmatpush1.bf16.msra.mxu0 %v1431
    %1813 = vmatprep.subr.bf16.mxu0 %v1437
    %1814 = vmatpush1.bf16.msra.mxu0 %v1436
    %1815 = vmatprep.subr.bf16.mxu0 %v1442
    %1816 = vmatpush1.bf16.msra.mxu0 %v1441
    %1817 = vmatprep.subr.bf16.mxu0 %v1447
    %1818 = vmatpush1.bf16.msra.mxu0 %v1446
    %1819 = vmatprep.mubr.bf16.mxu0 %v419
    %1820 = vmatmul.mubr.bf16.gmra.mrb[0].mxu0 %v418
    %v1821 = vpop.f32.mrb[0].mxu0
    %v1822 = vadd.f32 %v1781, %v1821
    %v1823 = vpop.f32.mrb[0].mxu0
    %v1824 = vadd.f32 %v1783, %v1823
    %v1825 = vpop.f32.mrb[0].mxu0
    %v1826 = vpop.f32.mrb[0].mxu0
    %1827 = vdwg.mxu0
    %1828 = vmatprep.subr.bf16.mxu0 %v1452
    %1829 = vmatpush1.bf16.msra.mxu0 %v1451
    %1830 = vmatprep.subr.bf16.mxu0 0
    %1831 = vmatpush1.bf16.msra.mxu0 0
    %1832 = vmatprep.subr.bf16.mxu0 0
    %1833 = vmatpush1.bf16.msra.mxu0 0
    %1834 = vmatprep.subr.bf16.mxu0 0
    %1835 = vmatpush1.bf16.msra.mxu0 0
    %1836 = vmatprep.subr.bf16.mxu0 0
    %1837 = vmatpush1.bf16.msra.mxu0 0
    %1838 = vmatprep.subr.bf16.mxu0 0
    %1839 = vmatpush1.bf16.msra.mxu0 0
    %1840 = vmatprep.subr.bf16.mxu0 0
    %1841 = vmatpush1.bf16.msra.mxu0 0
    %1842 = vmatprep.subr.bf16.mxu0 0
    %1843 = vmatpush1.bf16.msra.mxu0 0
    %1844 = vmatprep.subr.bf16.mxu0 0
    %1845 = vmatpush1.bf16.msra.mxu0 0
    %1846 = vmatprep.subr.bf16.mxu0 0
    %1847 = vmatpush1.bf16.msra.mxu0 0
    %1848 = vmatprep.subr.bf16.mxu0 0
    %1849 = vmatpush1.bf16.msra.mxu0 0
    %1850 = vmatprep.subr.bf16.mxu0 0
    %1851 = vmatpush1.bf16.msra.mxu0 0
    %1852 = vmatprep.subr.bf16.mxu0 0
    %1853 = vmatpush1.bf16.msra.mxu0 0
    %1854 = vmatprep.subr.bf16.mxu0 0
    %1855 = vmatpush1.bf16.msra.mxu0 0
    %1856 = vmatprep.subr.bf16.mxu0 0
    %1857 = vmatpush1.bf16.msra.mxu0 0
    %1858 = vmatprep.subr.bf16.mxu0 0
    %1859 = vmatpush1.bf16.msra.mxu0 0
    %1860 = vmatprep.mubr.bf16.mxu0 0
    %1861 = vmatmul.mubr.bf16.gmra.mrb[0].mxu0 %v1703
    %v1862 = vpop.f32.mrb[0].mxu0
    %v1863 = vadd.f32 %v1822, %v1862
    %v1864 = vpop.f32.mrb[0].mxu0
    %v1865 = vadd.f32 %v1824, %v1864
    %v1866 = vpop.f32.mrb[0].mxu0
    %v1867 = vpop.f32.mrb[0].mxu0
    %1868 = vdwg.mxu0
    %1869 = vmatprep.subr.bf16.mxu0 %v1214
    %1870 = vmatpush1.bf16.msra.mxu0 %v1213
    %1871 = vmatprep.subr.bf16.mxu0 %v1219
    %1872 = vmatpush1.bf16.msra.mxu0 %v1218
    %1873 = vmatprep.subr.bf16.mxu0 %v1224
    %1874 = vmatpush1.bf16.msra.mxu0 %v1223
    %1875 = vmatprep.subr.bf16.mxu0 %v1229
    %1876 = vmatpush1.bf16.msra.mxu0 %v1228
    %1877 = vmatprep.subr.bf16.mxu0 %v1234
    %1878 = vmatpush1.bf16.msra.mxu0 %v1233
    %1879 = vmatprep.subr.bf16.mxu0 %v1239
    %1880 = vmatpush1.bf16.msra.mxu0 %v1238
    %1881 = vmatprep.subr.bf16.mxu0 %v1244
    %1882 = vmatpush1.bf16.msra.mxu0 %v1243
    %1883 = vmatprep.subr.bf16.mxu0 %v1249
    %1884 = vmatpush1.bf16.msra.mxu0 %v1248
    %1885 = vmatprep.subr.bf16.mxu0 %v1254
    %1886 = vmatpush1.bf16.msra.mxu0 %v1253
    %1887 = vmatprep.subr.bf16.mxu0 %v1259
    %1888 = vmatpush1.bf16.msra.mxu0 %v1258
    %1889 = vmatprep.subr.bf16.mxu0 %v1264
    %1890 = vmatpush1.bf16.msra.mxu0 %v1263
    %1891 = vmatprep.subr.bf16.mxu0 %v1269
    %1892 = vmatpush1.bf16.msra.mxu0 %v1268
    %1893 = vmatprep.subr.bf16.mxu0 %v1274
    %1894 = vmatpush1.bf16.msra.mxu0 %v1273
    %1895 = vmatprep.subr.bf16.mxu0 %v1279
    %1896 = vmatpush1.bf16.msra.mxu0 %v1278
    %1897 = vmatprep.subr.bf16.mxu0 %v1284
    %1898 = vmatpush1.bf16.msra.mxu0 %v1283
    %1899 = vmatprep.subr.bf16.mxu0 %v1289
    %1900 = vmatpush1.bf16.msra.mxu0 %v1288
    %1901 = vmatprep.mubr.bf16.mxu0 %v415
    %1902 = vmatmul.mubr.bf16.gmra.mrb[0].mxu0 %v414
    %v1903 = vpop.f32.mrb[0].mxu0
    %v1904 = vadd.f32 0.0, %v1903
    %v1905 = vpop.f32.mrb[0].mxu0
    %v1906 = vadd.f32 0.0, %v1905
    %v1907 = vpop.f32.mrb[0].mxu0
    %v1908 = vpop.f32.mrb[0].mxu0
    %1909 = vdwg.mxu0
    %1910 = vmatprep.subr.bf16.mxu0 %v1294
    %1911 = vmatpush1.bf16.msra.mxu0 %v1293
    %1912 = vmatprep.subr.bf16.mxu0 %v1299
    %1913 = vmatpush1.bf16.msra.mxu0 %v1298
    %1914 = vmatprep.subr.bf16.mxu0 %v1304
    %1915 = vmatpush1.bf16.msra.mxu0 %v1303
    %1916 = vmatprep.subr.bf16.mxu0 %v1309
    %1917 = vmatpush1.bf16.msra.mxu0 %v1308
    %1918 = vmatprep.subr.bf16.mxu0 %v1314
    %1919 = vmatpush1.bf16.msra.mxu0 %v1313
    %1920 = vmatprep.subr.bf16.mxu0 %v1319
    %1921 = vmatpush1.bf16.msra.mxu0 %v1318
    %1922 = vmatprep.subr.bf16.mxu0 %v1324
    %1923 = vmatpush1.bf16.msra.mxu0 %v1323
    %1924 = vmatprep.subr.bf16.mxu0 %v1329
    %1925 = vmatpush1.bf16.msra.mxu0 %v1328
    %1926 = vmatprep.subr.bf16.mxu0 %v1334
    %1927 = vmatpush1.bf16.msra.mxu0 %v1333
    %1928 = vmatprep.subr.bf16.mxu0 %v1339
    %1929 = vmatpush1.bf16.msra.mxu0 %v1338
    %1930 = vmatprep.subr.bf16.mxu0 %v1344
    %1931 = vmatpush1.bf16.msra.mxu0 %v1343
    %1932 = vmatprep.subr.bf16.mxu0 %v1349
    %1933 = vmatpush1.bf16.msra.mxu0 %v1348
    %1934 = vmatprep.subr.bf16.mxu0 %v1354
    %1935 = vmatpush1.bf16.msra.mxu0 %v1353
    %1936 = vmatprep.subr.bf16.mxu0 %v1359
    %1937 = vmatpush1.bf16.msra.mxu0 %v1358
    %1938 = vmatprep.subr.bf16.mxu0 %v1364
    %1939 = vmatpush1.bf16.msra.mxu0 %v1363
    %1940 = vmatprep.subr.bf16.mxu0 %v1369
    %1941 = vmatpush1.bf16.msra.mxu0 %v1368
    %1942 = vmatprep.mubr.bf16.mxu0 %v417
    %1943 = vmatmul.mubr.bf16.gmra.mrb[0].mxu0 %v416
    %v1944 = vpop.f32.mrb[0].mxu0
    %v1945 = vadd.f32 %v1904, %v1944
    %v1946 = vpop.f32.mrb[0].mxu0
    %v1947 = vadd.f32 %v1906, %v1946
    %v1948 = vpop.f32.mrb[0].mxu0
    %v1949 = vpop.f32.mrb[0].mxu0
    %1950 = vdwg.mxu0
    %1951 = vmatprep.subr.bf16.mxu0 %v1374
    %1952 = vmatpush1.bf16.msra.mxu0 %v1373
    %1953 = vmatprep.subr.bf16.mxu0 %v1379
    %1954 = vmatpush1.bf16.msra.mxu0 %v1378
    %1955 = vmatprep.subr.bf16.mxu0 %v1384
    %1956 = vmatpush1.bf16.msra.mxu0 %v1383
    %1957 = vmatprep.subr.bf16.mxu0 %v1389
    %1958 = vmatpush1.bf16.msra.mxu0 %v1388
    %1959 = vmatprep.subr.bf16.mxu0 %v1394
    %1960 = vmatpush1.bf16.msra.mxu0 %v1393
    %1961 = vmatprep.subr.bf16.mxu0 %v1399
    %1962 = vmatpush1.bf16.msra.mxu0 %v1398
    %1963 = vmatprep.subr.bf16.mxu0 %v1404
    %1964 = vmatpush1.bf16.msra.mxu0 %v1403
    %1965 = vmatprep.subr.bf16.mxu0 %v1409
    %1966 = vmatpush1.bf16.msra.mxu0 %v1408
    %1967 = vmatprep.subr.bf16.mxu0 %v1414
    %1968 = vmatpush1.bf16.msra.mxu0 %v1413
    %1969 = vmatprep.subr.bf16.mxu0 %v1419
    %1970 = vmatpush1.bf16.msra.mxu0 %v1418
    %1971 = vmatprep.subr.bf16.mxu0 %v1424
    %1972 = vmatpush1.bf16.msra.mxu0 %v1423
    %1973 = vmatprep.subr.bf16.mxu0 %v1429
    %1974 = vmatpush1.bf16.msra.mxu0 %v1428
    %1975 = vmatprep.subr.bf16.mxu0 %v1434
    %1976 = vmatpush1.bf16.msra.mxu0 %v1433
    %1977 = vmatprep.subr.bf16.mxu0 %v1439
    %1978 = vmatpush1.bf16.msra.mxu0 %v1438
    %1979 = vmatprep.subr.bf16.mxu0 %v1444
    %1980 = vmatpush1.bf16.msra.mxu0 %v1443
    %1981 = vmatprep.subr.bf16.mxu0 %v1449
    %1982 = vmatpush1.bf16.msra.mxu0 %v1448
    %1983 = vmatprep.mubr.bf16.mxu0 %v419
    %1984 = vmatmul.mubr.bf16.gmra.mrb[0].mxu0 %v418
    %v1985 = vpop.f32.mrb[0].mxu0
    %v1986 = vadd.f32 %v1945, %v1985
    %v1987 = vpop.f32.mrb[0].mxu0
    %v1988 = vadd.f32 %v1947, %v1987
    %v1989 = vpop.f32.mrb[0].mxu0
    %v1990 = vpop.f32.mrb[0].mxu0
    %1991 = vdwg.mxu0
    %1992 = vmatprep.subr.bf16.mxu0 %v1454
    %1993 = vmatpush1.bf16.msra.mxu0 %v1453
    %1994 = vmatprep.subr.bf16.mxu0 0
    %1995 = vmatpush1.bf16.msra.mxu0 0
    %1996 = vmatprep.subr.bf16.mxu0 0
    %1997 = vmatpush1.bf16.msra.mxu0 0
    %1998 = vmatprep.subr.bf16.mxu0 0
    %1999 = vmatpush1.bf16.msra.mxu0 0
    %2000 = vmatprep.subr.bf16.mxu0 0
    %2001 = vmatpush1.bf16.msra.mxu0 0
    %2002 = vmatprep.subr.bf16.mxu0 0
    %2003 = vmatpush1.bf16.msra.mxu0 0
    %2004 = vmatprep.subr.bf16.mxu0 0
    %2005 = vmatpush1.bf16.msra.mxu0 0
    %2006 = vmatprep.subr.bf16.mxu0 0
    %2007 = vmatpush1.bf16.msra.mxu0 0
    %2008 = vmatprep.subr.bf16.mxu0 0
    %2009 = vmatpush1.bf16.msra.mxu0 0
    %2010 = vmatprep.subr.bf16.mxu0 0
    %2011 = vmatpush1.bf16.msra.mxu0 0
    %2012 = vmatprep.subr.bf16.mxu0 0
    %2013 = vmatpush1.bf16.msra.mxu0 0
    %2014 = vmatprep.subr.bf16.mxu0 0
    %2015 = vmatpush1.bf16.msra.mxu0 0
    %2016 = vmatprep.subr.bf16.mxu0 0
    %2017 = vmatpush1.bf16.msra.mxu0 0
    %2018 = vmatprep.subr.bf16.mxu0 0
    %2019 = vmatpush1.bf16.msra.mxu0 0
    %2020 = vmatprep.subr.bf16.mxu0 0
    %2021 = vmatpush1.bf16.msra.mxu0 0
    %2022 = vmatprep.subr.bf16.mxu0 0
    %2023 = vmatpush1.bf16.msra.mxu0 0
    %2024 = vmatprep.mubr.bf16.mxu0 0
    %2025 = vmatmul.mubr.bf16.gmra.mrb[0].mxu0 %v1703
    %v2026 = vpop.f32.mrb[0].mxu0
    %v2027 = vadd.f32 %v1986, %v2026
    %v2028 = vpop.f32.mrb[0].mxu0
    %v2029 = vadd.f32 %v1988, %v2028
    %v2030 = vpop.f32.mrb[0].mxu0
    %v2031 = vpop.f32.mrb[0].mxu0
    %2032 = vdwg.mxu0
    %2033 = vmatprep.subr.bf16.mxu0 0
    %2034 = vmatpush1.bf16.msra.mxu0 %v1215
    %2035 = vmatprep.subr.bf16.mxu0 0
    %2036 = vmatpush1.bf16.msra.mxu0 %v1220
    %2037 = vmatprep.subr.bf16.mxu0 0
    %2038 = vmatpush1.bf16.msra.mxu0 %v1225
    %2039 = vmatprep.subr.bf16.mxu0 0
    %2040 = vmatpush1.bf16.msra.mxu0 %v1230
    %2041 = vmatprep.subr.bf16.mxu0 0
    %2042 = vmatpush1.bf16.msra.mxu0 %v1235
    %2043 = vmatprep.subr.bf16.mxu0 0
    %2044 = vmatpush1.bf16.msra.mxu0 %v1240
    %2045 = vmatprep.subr.bf16.mxu0 0
    %2046 = vmatpush1.bf16.msra.mxu0 %v1245
    %2047 = vmatprep.subr.bf16.mxu0 0
    %2048 = vmatpush1.bf16.msra.mxu0 %v1250
    %2049 = vmatprep.subr.bf16.mxu0 0
    %2050 = vmatpush1.bf16.msra.mxu0 %v1255
    %2051 = vmatprep.subr.bf16.mxu0 0
    %2052 = vmatpush1.bf16.msra.mxu0 %v1260
    %2053 = vmatprep.subr.bf16.mxu0 0
    %2054 = vmatpush1.bf16.msra.mxu0 %v1265
    %2055 = vmatprep.subr.bf16.mxu0 0
    %2056 = vmatpush1.bf16.msra.mxu0 %v1270
    %2057 = vmatprep.subr.bf16.mxu0 0
    %2058 = vmatpush1.bf16.msra.mxu0 %v1275
    %2059 = vmatprep.subr.bf16.mxu0 0
    %2060 = vmatpush1.bf16.msra.mxu0 %v1280
    %2061 = vmatprep.subr.bf16.mxu0 0
    %2062 = vmatpush1.bf16.msra.mxu0 %v1285
    %2063 = vmatprep.subr.bf16.mxu0 0
    %2064 = vmatpush1.bf16.msra.mxu0 %v1290
    %2065 = vmatprep.mubr.bf16.mxu0 %v415
    %2066 = vmatmul.mubr.bf16.gmra.mrb[0].mxu0 %v414
    %v2067 = vpop.f32.mrb[0].mxu0
    %v2068 = vadd.f32 0.0, %v2067
    %v2069 = vpop.f32.mrb[0].mxu0
    %v2070 = vpop.f32.mrb[0].mxu0
    %v2071 = vpop.f32.mrb[0].mxu0
    %2072 = vdwg.mxu0
    %2073 = vmatprep.subr.bf16.mxu0 0
    %2074 = vmatpush1.bf16.msra.mxu0 %v1295
    %2075 = vmatprep.subr.bf16.mxu0 0
    %2076 = vmatpush1.bf16.msra.mxu0 %v1300
    %2077 = vmatprep.subr.bf16.mxu0 0
    %2078 = vmatpush1.bf16.msra.mxu0 %v1305
    %2079 = vmatprep.subr.bf16.mxu0 0
    %2080 = vmatpush1.bf16.msra.mxu0 %v1310
    %2081 = vmatprep.subr.bf16.mxu0 0
    %2082 = vmatpush1.bf16.msra.mxu0 %v1315
    %2083 = vmatprep.subr.bf16.mxu0 0
    %2084 = vmatpush1.bf16.msra.mxu0 %v1320
    %2085 = vmatprep.subr.bf16.mxu0 0
    %2086 = vmatpush1.bf16.msra.mxu0 %v1325
    %2087 = vmatprep.subr.bf16.mxu0 0
    %2088 = vmatpush1.bf16.msra.mxu0 %v1330
    %2089 = vmatprep.subr.bf16.mxu0 0
    %2090 = vmatpush1.bf16.msra.mxu0 %v1335
    %2091 = vmatprep.subr.bf16.mxu0 0
    %2092 = vmatpush1.bf16.msra.mxu0 %v1340
    %2093 = vmatprep.subr.bf16.mxu0 0
    %2094 = vmatpush1.bf16.msra.mxu0 %v1345
    %2095 = vmatprep.subr.bf16.mxu0 0
    %2096 = vmatpush1.bf16.msra.mxu0 %v1350
    %2097 = vmatprep.subr.bf16.mxu0 0
    %2098 = vmatpush1.bf16.msra.mxu0 %v1355
    %2099 = vmatprep.subr.bf16.mxu0 0
    %2100 = vmatpush1.bf16.msra.mxu0 %v1360
    %2101 = vmatprep.subr.bf16.mxu0 0
    %2102 = vmatpush1.bf16.msra.mxu0 %v1365
    %2103 = vmatprep.subr.bf16.mxu0 0
    %2104 = vmatpush1.bf16.msra.mxu0 %v1370
    %2105 = vmatprep.mubr.bf16.mxu0 %v417
    %2106 = vmatmul.mubr.bf16.gmra.mrb[0].mxu0 %v416
    %v2107 = vpop.f32.mrb[0].mxu0
    %v2108 = vadd.f32 %v2068, %v2107
    %v2109 = vpop.f32.mrb[0].mxu0
    %v2110 = vpop.f32.mrb[0].mxu0
    %v2111 = vpop.f32.mrb[0].mxu0
    %2112 = vdwg.mxu0
    %2113 = vmatprep.subr.bf16.mxu0 0
    %2114 = vmatpush1.bf16.msra.mxu0 %v1375
    %2115 = vmatprep.subr.bf16.mxu0 0
    %2116 = vmatpush1.bf16.msra.mxu0 %v1380
    %2117 = vmatprep.subr.bf16.mxu0 0
    %2118 = vmatpush1.bf16.msra.mxu0 %v1385
    %2119 = vmatprep.subr.bf16.mxu0 0
    %2120 = vmatpush1.bf16.msra.mxu0 %v1390
    %2121 = vmatprep.subr.bf16.mxu0 0
    %2122 = vmatpush1.bf16.msra.mxu0 %v1395
    %2123 = vmatprep.subr.bf16.mxu0 0
    %2124 = vmatpush1.bf16.msra.mxu0 %v1400
    %2125 = vmatprep.subr.bf16.mxu0 0
    %2126 = vmatpush1.bf16.msra.mxu0 %v1405
    %2127 = vmatprep.subr.bf16.mxu0 0
    %2128 = vmatpush1.bf16.msra.mxu0 %v1410
    %2129 = vmatprep.subr.bf16.mxu0 0
    %2130 = vmatpush1.bf16.msra.mxu0 %v1415
    %2131 = vmatprep.subr.bf16.mxu0 0
    %2132 = vmatpush1.bf16.msra.mxu0 %v1420
    %2133 = vmatprep.subr.bf16.mxu0 0
    %2134 = vmatpush1.bf16.msra.mxu0 %v1425
    %2135 = vmatprep.subr.bf16.mxu0 0
    %2136 = vmatpush1.bf16.msra.mxu0 %v1430
    %2137 = vmatprep.subr.bf16.mxu0 0
    %2138 = vmatpush1.bf16.msra.mxu0 %v1435
    %2139 = vmatprep.subr.bf16.mxu0 0
    %2140 = vmatpush1.bf16.msra.mxu0 %v1440
    %2141 = vmatprep.subr.bf16.mxu0 0
    %2142 = vmatpush1.bf16.msra.mxu0 %v1445
    %2143 = vmatprep.subr.bf16.mxu0 0
    %2144 = vmatpush1.bf16.msra.mxu0 %v1450
    %2145 = vmatprep.mubr.bf16.mxu0 %v419
    %2146 = vmatmul.mubr.bf16.gmra.mrb[0].mxu0 %v418
    %v2147 = vpop.f32.mrb[0].mxu0
    %v2148 = vadd.f32 %v2108, %v2147
    %v2149 = vpop.f32.mrb[0].mxu0
    %v2150 = vpop.f32.mrb[0].mxu0
    %v2151 = vpop.f32.mrb[0].mxu0
    %2152 = vdwg.mxu0
    %2153 = vmatprep.subr.bf16.mxu0 0
    %2154 = vmatpush1.bf16.msra.mxu0 %v1455
    %2155 = vmatprep.subr.bf16.mxu0 0
    %2156 = vmatpush1.bf16.msra.mxu0 0
    %2157 = vmatprep.subr.bf16.mxu0 0
    %2158 = vmatpush1.bf16.msra.mxu0 0
    %2159 = vmatprep.subr.bf16.mxu0 0
    %2160 = vmatpush1.bf16.msra.mxu0 0
    %2161 = vmatprep.subr.bf16.mxu0 0
    %2162 = vmatpush1.bf16.msra.mxu0 0
    %2163 = vmatprep.subr.bf16.mxu0 0
    %2164 = vmatpush1.bf16.msra.mxu0 0
    %2165 = vmatprep.subr.bf16.mxu0 0
    %2166 = vmatpush1.bf16.msra.mxu0 0
    %2167 = vmatprep.subr.bf16.mxu0 0
    %2168 = vmatpush1.bf16.msra.mxu0 0
    %2169 = vmatprep.subr.bf16.mxu0 0
    %2170 = vmatpush1.bf16.msra.mxu0 0
    %2171 = vmatprep.subr.bf16.mxu0 0
    %2172 = vmatpush1.bf16.msra.mxu0 0
    %2173 = vmatprep.subr.bf16.mxu0 0
    %2174 = vmatpush1.bf16.msra.mxu0 0
    %2175 = vmatprep.subr.bf16.mxu0 0
    %2176 = vmatpush1.bf16.msra.mxu0 0
    %2177 = vmatprep.subr.bf16.mxu0 0
    %2178 = vmatpush1.bf16.msra.mxu0 0
    %2179 = vmatprep.subr.bf16.mxu0 0
    %2180 = vmatpush1.bf16.msra.mxu0 0
    %2181 = vmatprep.subr.bf16.mxu0 0
    %2182 = vmatpush1.bf16.msra.mxu0 0
    %2183 = vmatprep.subr.bf16.mxu0 0
    %2184 = vmatpush1.bf16.msra.mxu0 0
    %2185 = vmatprep.mubr.bf16.mxu0 0
    %2186 = vmatmul.mubr.bf16.gmra.mrb[0].mxu0 %v1703
    %v2187 = vpop.f32.mrb[0].mxu0
    %v2188 = vadd.f32 %v2148, %v2187
    %v2189 = vpop.f32.mrb[0].mxu0
    %v2190 = vpop.f32.mrb[0].mxu0
    %v2191 = vpop.f32.mrb[0].mxu0
    %2192 = vdwg.mxu0
    %v2193 = vstv %s104
    %v2194 = vmul.f32 %v1863, %v2193
    %v2195 = vmul.f32 %v1865, %v2193
    %v2196 = vmul.f32 %v2027, %v2193
    %v2197 = vmul.f32 %v2029, %v2193
    %v2198 = vmul.f32 %v2188, %v2193
    %v2199 = vld [vmem:[%s3] sm:$0x1f]
    %v2201 = vlaneseq
    %v2202 = vshrl.u32 %v2201, 7
    %v2203 = vsub.s32 0, %v2202
    %v2204 = vrot.slane %v2199, %v2203
    %v2205 = vlaneseq
    %v2206 = vshrl.u32 %v2205, 7
    %v2207 = vsub.s32 1, %v2206
    %v2208 = vrot.slane %v2199, %v2207
    %v2209 = vlaneseq
    %v2210 = vshrl.u32 %v2209, 7
    %v2211 = vsub.s32 2, %v2210
    %v2212 = vrot.slane %v2199, %v2211
    %v2213 = vlaneseq
    %v2214 = vshrl.u32 %v2213, 7
    %v2215 = vsub.s32 3, %v2214
    %v2216 = vrot.slane %v2199, %v2215
    %v2217 = vlaneseq
    %v2218 = vshrl.u32 %v2217, 7
    %v2219 = vsub.s32 4, %v2218
    %v2220 = vrot.slane %v2199, %v2219
    %v2226 = vadd.f32 %v2194, %v2204
    %v2227 = vadd.f32 %v2195, %v2208
    %v2228 = vadd.f32 %v2196, %v2212
    %v2229 = vadd.f32 %v2197, %v2216
    %v2230 = vadd.f32 %v2198, %v2220
    %vm2231 = vcmp.gt.f32.partialorder %v2226, 0.5
    %vm2232 = vcmp.gt.f32.partialorder %v2227, 0.5
    %vm2233 = vcmp.gt.f32.partialorder %v2228, 0.5
    %vm2234 = vcmp.gt.f32.partialorder %v2229, 0.5
    %vm2235 = vcmp.gt.f32.partialorder %v2230, 0.5
    %v2236 = vsel %vm2231, 1, 0
    %v2237 = vsel %vm2232, 1, 0
    %v2238 = vsel %vm2233, 1, 0
    %v2239 = vsel %vm2234, 1, 0
    %v2240 = vsel %vm2235, 1, 0
    %v2241 = vcvt.s32.f32 %v2236
    %v2242 = vcvt.s32.f32 %v2237
    %v2243 = vcvt.s32.f32 %v2238
    %v2244 = vcvt.s32.f32 %v2239
    %v2245 = vcvt.s32.f32 %v2240
    %v2246 = vpack.c.bf16 %v2241, %v2241
    %v2247 = vpack.c.bf16 %v2242, %v2242
    %v2248 = vpack.c.bf16 %v2243, %v2243
    %v2249 = vpack.c.bf16 %v2244, %v2244
    %v2250 = vpack.c.bf16 %v2245, %v2245
    %v2251 = vld [vmem:[#allocation8] sm:$0xff]
    %v2252 = vld [vmem:[#allocation8 + $0x8] sm:$0xff]
    %v2253 = vld [vmem:[#allocation8 + $0x10] sm:$0xff]
    %v2254 = vld [vmem:[#allocation8 + $0x18] sm:$0xff]
    %v2255 = vld [vmem:[#allocation8 + $0x20] sm:$0xff]
    %v2256 = vld [vmem:[#allocation8 + $0x28] sm:$0xff]
    %v2257 = vld [vmem:[#allocation8 + $0x30] sm:$0xff]
    %v2258 = vld [vmem:[#allocation8 + $0x38] sm:$0xff]
    %v2259 = vld [vmem:[#allocation8 + $0x40] sm:$0xff]
    %v2260 = vld [vmem:[#allocation8 + $0x48] sm:$0xff]
    %v2261 = vld [vmem:[#allocation8 + $0x50] sm:$0xff]
    %v2262 = vld [vmem:[#allocation8 + $0x58] sm:$0xff]
    %v2263 = vld [vmem:[#allocation8 + $0x60] sm:$0xff]
    %v2264 = vld [vmem:[#allocation8 + $0x68] sm:$0xff]
    %v2265 = vld [vmem:[#allocation8 + $0x70] sm:$0xff]
    %v2266 = vld [vmem:[#allocation8 + $0x78] sm:$0xff]
    %v2267 = vld [vmem:[#allocation8 + $0x80] sm:$0xff]
    %v2268 = vld [vmem:[#allocation8 + $0x88] sm:$0xff]
    %v2269 = vld [vmem:[#allocation8 + $0x90] sm:$0xff]
    %v2270 = vld [vmem:[#allocation8 + $0x98] sm:$0xff]
    %v2271 = vld [vmem:[#allocation8 + $0xa0] sm:$0xff]
    %v2272 = vld [vmem:[#allocation8 + $0xa8] sm:$0xff]
    %v2273 = vld [vmem:[#allocation8 + $0xb0] sm:$0xff]
    %v2274 = vld [vmem:[#allocation8 + $0xb8] sm:$0xff]
    %v2275 = vld [vmem:[#allocation8 + $0xc0] sm:$0xff]
    %v2276 = vld [vmem:[#allocation8 + $0xc8] sm:$0xff]
    %v2277 = vld [vmem:[#allocation8 + $0xd0] sm:$0xff]
    %v2278 = vld [vmem:[#allocation8 + $0xd8] sm:$0xff]
    %v2279 = vld [vmem:[#allocation8 + $0xe0] sm:$0xff]
    %v2280 = vld [vmem:[#allocation8 + $0xe8] sm:$0xff]
    %v2281 = vld [vmem:[#allocation8 + $0xf0] sm:$0xff]
    %v2282 = vld [vmem:[#allocation8 + $0xf8] sm:$0xff]
    %v2283 = vld [vmem:[#allocation8 + $0x100] sm:$0xff]
    %v2284 = vld [vmem:[#allocation8 + $0x108] sm:$0xff]
    %v2285 = vld [vmem:[#allocation8 + $0x110] sm:$0xff]
    %v2286 = vld [vmem:[#allocation8 + $0x118] sm:$0xff]
    %v2287 = vld [vmem:[#allocation8 + $0x120] sm:$0xff]
    %v2288 = vld [vmem:[#allocation8 + $0x128] sm:$0xff]
    %v2289 = vld [vmem:[#allocation8 + $0x130] sm:$0xff]
    %v2290 = vld [vmem:[#allocation8 + $0x138] sm:$0xff]
    %v2291 = vld [vmem:[#allocation8 + $0x140] sm:$0xff]
    %v2292 = vld [vmem:[#allocation8 + $0x148] sm:$0xff]
    %v2293 = vld [vmem:[#allocation8 + $0x150] sm:$0xff]
    %v2294 = vld [vmem:[#allocation8 + $0x158] sm:$0xff]
    %v2295 = vld [vmem:[#allocation8 + $0x160] sm:$0xff]
    %v2296 = vld [vmem:[#allocation8 + $0x168] sm:$0xff]
    %v2297 = vld [vmem:[#allocation8 + $0x170] sm:$0xff]
    %v2298 = vld [vmem:[#allocation8 + $0x178] sm:$0xff]
    %v2299 = vld [vmem:[#allocation8 + $0x180] sm:$0xff]
    %v2300 = vld [vmem:[#allocation8 + $0x188] sm:$0xff]
    %v2301 = vld [vmem:[#allocation8 + $0x190] sm:$0xff]
    %v2302 = vld [vmem:[#allocation8 + $0x198] sm:$0xff]
    %v2303 = vld [vmem:[#allocation8 + $0x1a0] sm:$0xff]
    %v2304 = vld [vmem:[#allocation8 + $0x1a8] sm:$0xff]
    %v2305 = vld [vmem:[#allocation8 + $0x1b0] sm:$0xff]
    %v2306 = vld [vmem:[#allocation8 + $0x1b8] sm:$0xff]
    %v2307 = vld [vmem:[#allocation8 + $0x1c0] sm:$0xff]
    %v2308 = vld [vmem:[#allocation8 + $0x1c8] sm:$0xff]
    %v2309 = vld [vmem:[#allocation8 + $0x1d0] sm:$0xff]
    %v2310 = vld [vmem:[#allocation8 + $0x1d8] sm:$0xff]
    %v2311 = vld [vmem:[#allocation8 + $0x1e0] sm:$0xff]
    %v2312 = vld [vmem:[#allocation8 + $0x1e8] sm:$0xff]
    %v2313 = vld [vmem:[#allocation8 + $0x1f0] sm:$0xff]
    %v2314 = vld [vmem:[#allocation8 + $0x1f8] sm:$0xff]
    %v2315 = vld [vmem:[#allocation8 + $0x200] sm:$0xff]
    %v2316 = vld [vmem:[#allocation8 + $0x208] sm:$0xff]
    %v2317 = vld [vmem:[#allocation8 + $0x210] sm:$0xff]
    %v2318 = vld [vmem:[#allocation8 + $0x218] sm:$0xff]
    %v2319 = vld [vmem:[#allocation8 + $0x220] sm:$0xff]
    %v2320 = vld [vmem:[#allocation8 + $0x228] sm:$0xff]
    %v2321 = vld [vmem:[#allocation8 + $0x230] sm:$0xff]
    %v2322 = vld [vmem:[#allocation8 + $0x238] sm:$0xff]
    %v2323 = vld [vmem:[#allocation8 + $0x240] sm:$0xff]
    %v2324 = vld [vmem:[#allocation8 + $0x248] sm:$0xff]
    %v2325 = vld [vmem:[#allocation8 + $0x250] sm:$0xff]
    %v2326 = vld [vmem:[#allocation8 + $0x258] sm:$0xff]
    %v2327 = vld [vmem:[#allocation8 + $0x260] sm:$0xff]
    %v2328 = vld [vmem:[#allocation8 + $0x268] sm:$0xff]
    %v2329 = vld [vmem:[#allocation8 + $0x270] sm:$0xff]
    %v2330 = vld [vmem:[#allocation8 + $0x278] sm:$0xff]
    %v2331 = vld [vmem:[#allocation8 + $0x280] sm:$0xff]
    %v2332 = vld [vmem:[#allocation8 + $0x288] sm:$0xff]
    %v2333 = vld [vmem:[#allocation8 + $0x290] sm:$0xff]
    %v2334 = vld [vmem:[#allocation8 + $0x298] sm:$0xff]
    %v2335 = vld [vmem:[#allocation8 + $0x2a0] sm:$0xff]
    %v2336 = vld [vmem:[#allocation8 + $0x2a8] sm:$0xff]
    %v2337 = vld [vmem:[#allocation8 + $0x2b0] sm:$0xff]
    %v2338 = vld [vmem:[#allocation8 + $0x2b8] sm:$0xff]
    %v2339 = vld [vmem:[#allocation8 + $0x2c0] sm:$0xff]
    %v2340 = vld [vmem:[#allocation8 + $0x2c8] sm:$0xff]
    %v2341 = vld [vmem:[#allocation8 + $0x2d0] sm:$0xff]
    %v2342 = vld [vmem:[#allocation8 + $0x2d8] sm:$0xff]
    %v2343 = vld [vmem:[#allocation8 + $0x2e0] sm:$0xff]
    %v2344 = vld [vmem:[#allocation8 + $0x2e8] sm:$0xff]
    %v2345 = vld [vmem:[#allocation8 + $0x2f0] sm:$0xff]
    %v2346 = vld [vmem:[#allocation8 + $0x2f8] sm:$0xff]
    %v2347 = vld [vmem:[#allocation8 + $0x300] sm:$0xff]
    %v2348 = vld [vmem:[#allocation8 + $0x308] sm:$0xff]
    %v2349 = vld [vmem:[#allocation8 + $0x310] sm:$0xff]
    %v2350 = vld [vmem:[#allocation8 + $0x318] sm:$0xff]
    %v2351 = vld [vmem:[#allocation8 + $0x320] sm:$0xff]
    %v2352 = vld [vmem:[#allocation8 + $0x328] sm:$0xff]
    %v2353 = vld [vmem:[#allocation8 + $0x330] sm:$0xff]
    %v2354 = vld [vmem:[#allocation8 + $0x338] sm:$0xff]
    %v2355 = vld [vmem:[#allocation8 + $0x340] sm:$0xff]
    %v2356 = vld [vmem:[#allocation8 + $0x348] sm:$0xff]
    %v2357 = vld [vmem:[#allocation8 + $0x350] sm:$0xff]
    %v2358 = vld [vmem:[#allocation8 + $0x358] sm:$0xff]
    %v2359 = vld [vmem:[#allocation8 + $0x360] sm:$0xff]
    %v2360 = vld [vmem:[#allocation8 + $0x368] sm:$0xff]
    %v2361 = vld [vmem:[#allocation8 + $0x370] sm:$0xff]
    %v2362 = vld [vmem:[#allocation8 + $0x378] sm:$0xff]
    %v2363 = vld [vmem:[#allocation8 + $0x380] sm:$0xff]
    %v2364 = vld [vmem:[#allocation8 + $0x388] sm:$0xff]
    %v2365 = vld [vmem:[#allocation8 + $0x390] sm:$0xff]
    %v2366 = vld [vmem:[#allocation8 + $0x398] sm:$0xff]
    %v2367 = vld [vmem:[#allocation8 + $0x3a0] sm:$0xff]
    %v2368 = vld [vmem:[#allocation8 + $0x3a8] sm:$0xff]
    %v2369 = vld [vmem:[#allocation8 + $0x3b0] sm:$0xff]
    %v2370 = vld [vmem:[#allocation8 + $0x3b8] sm:$0xff]
    %v2371 = vld [vmem:[#allocation8 + $0x3c0] sm:$0xff]
    %v2372 = vld [vmem:[#allocation8 + $0x3c8] sm:$0xff]
    %v2373 = vld [vmem:[#allocation8 + $0x3d0] sm:$0xff]
    %v2374 = vld [vmem:[#allocation8 + $0x3d8] sm:$0xff]
    %v2375 = vld [vmem:[#allocation8 + $0x3e0] sm:$0xff]
    %v2376 = vld [vmem:[#allocation8 + $0x3e8] sm:$0xff]
    %v2377 = vld [vmem:[#allocation8 + $0x3f0] sm:$0xff]
    %v2378 = vld [vmem:[#allocation8 + $0x3f8] sm:$0xff]
    %v2379 = vld [vmem:[#allocation8 + $0x400] sm:$0xff]
    %v2380 = vld [vmem:[#allocation8 + $0x408] sm:$0xff]
    %v2381 = vld [vmem:[#allocation8 + $0x410] sm:$0xff]
    %v2382 = vld [vmem:[#allocation8 + $0x418] sm:$0xff]
    %v2383 = vld [vmem:[#allocation8 + $0x420] sm:$0xff]
    %v2384 = vld [vmem:[#allocation8 + $0x428] sm:$0xff]
    %v2385 = vld [vmem:[#allocation8 + $0x430] sm:$0xff]
    %v2386 = vld [vmem:[#allocation8 + $0x438] sm:$0xff]
    %v2387 = vld [vmem:[#allocation8 + $0x440] sm:$0xff]
    %v2388 = vld [vmem:[#allocation8 + $0x448] sm:$0xff]
    %v2389 = vld [vmem:[#allocation8 + $0x450] sm:$0xff]
    %v2390 = vld [vmem:[#allocation8 + $0x458] sm:$0xff]
    %v2391 = vld [vmem:[#allocation8 + $0x460] sm:$0xff]
    %v2392 = vld [vmem:[#allocation8 + $0x468] sm:$0xff]
    %v2393 = vld [vmem:[#allocation8 + $0x470] sm:$0xff]
    %v2394 = vld [vmem:[#allocation8 + $0x478] sm:$0xff]
    %v2395 = vld [vmem:[#allocation8 + $0x480] sm:$0xff]
    %v2396 = vld [vmem:[#allocation8 + $0x488] sm:$0xff]
    %v2397 = vld [vmem:[#allocation8 + $0x490] sm:$0xff]
    %v2398 = vld [vmem:[#allocation8 + $0x498] sm:$0xff]
    %v2399 = vld [vmem:[#allocation8 + $0x4a0] sm:$0xff]
    %v2400 = vld [vmem:[#allocation8 + $0x4a8] sm:$0xff]
    %v2401 = vld [vmem:[#allocation8 + $0x4b0] sm:$0xff]
    %v2402 = vld [vmem:[#allocation8 + $0x4b8] sm:$0xff]
    %v2403 = vld [vmem:[#allocation8 + $0x4c0] sm:$0xff]
    %v2404 = vld [vmem:[#allocation8 + $0x4c8] sm:$0xff]
    %v2405 = vld [vmem:[#allocation8 + $0x4d0] sm:$0xff]
    %v2406 = vld [vmem:[#allocation8 + $0x4d8] sm:$0xff]
    %v2407 = vld [vmem:[#allocation8 + $0x4e0] sm:$0xff]
    %v2408 = vld [vmem:[#allocation8 + $0x4e8] sm:$0xff]
    %v2409 = vld [vmem:[#allocation8 + $0x4f0] sm:$0xff]
    %v2410 = vld [vmem:[#allocation8 + $0x4f8] sm:$0xff]
    %v2411 = vld [vmem:[%s5] sm:$0xf]
    %v2413 = vlaneseq
    %v2414 = vshrl.u32 %v2413, 7
    %v2415 = vsub.s32 0, %v2414
    %v2416 = vrot.slane %v2411, %v2415
    %v2417 = vlaneseq
    %v2418 = vshrl.u32 %v2417, 7
    %v2419 = vsub.s32 1, %v2418
    %v2420 = vrot.slane %v2411, %v2419
    %v2421 = vlaneseq
    %v2422 = vshrl.u32 %v2421, 7
    %v2423 = vsub.s32 2, %v2422
    %v2424 = vrot.slane %v2411, %v2423
    %v2425 = vlaneseq
    %v2426 = vshrl.u32 %v2425, 7
    %v2427 = vsub.s32 3, %v2426
    %v2428 = vrot.slane %v2411, %v2427
    %v2593 = vunpack.c.l.b16 %v2251
    %v2594 = vunpack.c.h.b16 %v2251
    %v2595 = vunpack.c.l.b16 %v2252
    %v2596 = vunpack.c.h.b16 %v2252
    %v2597 = vunpack.c.l.b16 %v2253
    %v2598 = vunpack.c.h.b16 %v2253
    %v2599 = vunpack.c.l.b16 %v2254
    %v2600 = vunpack.c.h.b16 %v2254
    %v2601 = vunpack.c.l.b16 %v2255
    %v2602 = vunpack.c.h.b16 %v2255
    %v2603 = vunpack.c.l.b16 %v2256
    %v2604 = vunpack.c.h.b16 %v2256
    %v2605 = vunpack.c.l.b16 %v2257
    %v2606 = vunpack.c.h.b16 %v2257
    %v2607 = vunpack.c.l.b16 %v2258
    %v2608 = vunpack.c.h.b16 %v2258
    %v2609 = vunpack.c.l.b16 %v2259
    %v2610 = vunpack.c.h.b16 %v2259
    %v2611 = vunpack.c.l.b16 %v2260
    %v2612 = vunpack.c.h.b16 %v2260
    %v2613 = vunpack.c.l.b16 %v2261
    %v2614 = vunpack.c.h.b16 %v2261
    %v2615 = vunpack.c.l.b16 %v2262
    %v2616 = vunpack.c.h.b16 %v2262
    %v2617 = vunpack.c.l.b16 %v2263
    %v2618 = vunpack.c.h.b16 %v2263
    %v2619 = vunpack.c.l.b16 %v2264
    %v2620 = vunpack.c.h.b16 %v2264
    %v2621 = vunpack.c.l.b16 %v2265
    %v2622 = vunpack.c.h.b16 %v2265
    %v2623 = vunpack.c.l.b16 %v2266
    %v2624 = vunpack.c.h.b16 %v2266
    %v2625 = vunpack.c.l.b16 %v2267
    %v2626 = vunpack.c.h.b16 %v2267
    %v2627 = vunpack.c.l.b16 %v2268
    %v2628 = vunpack.c.h.b16 %v2268
    %v2629 = vunpack.c.l.b16 %v2269
    %v2630 = vunpack.c.h.b16 %v2269
    %v2631 = vunpack.c.l.b16 %v2270
    %v2632 = vunpack.c.h.b16 %v2270
    %v2633 = vunpack.c.l.b16 %v2271
    %v2634 = vunpack.c.h.b16 %v2271
    %v2635 = vunpack.c.l.b16 %v2272
    %v2636 = vunpack.c.h.b16 %v2272
    %v2637 = vunpack.c.l.b16 %v2273
    %v2638 = vunpack.c.h.b16 %v2273
    %v2639 = vunpack.c.l.b16 %v2274
    %v2640 = vunpack.c.h.b16 %v2274
    %v2641 = vunpack.c.l.b16 %v2275
    %v2642 = vunpack.c.h.b16 %v2275
    %v2643 = vunpack.c.l.b16 %v2276
    %v2644 = vunpack.c.h.b16 %v2276
    %v2645 = vunpack.c.l.b16 %v2277
    %v2646 = vunpack.c.h.b16 %v2277
    %v2647 = vunpack.c.l.b16 %v2278
    %v2648 = vunpack.c.h.b16 %v2278
    %v2649 = vunpack.c.l.b16 %v2279
    %v2650 = vunpack.c.h.b16 %v2279
    %v2651 = vunpack.c.l.b16 %v2280
    %v2652 = vunpack.c.h.b16 %v2280
    %v2653 = vunpack.c.l.b16 %v2281
    %v2654 = vunpack.c.h.b16 %v2281
    %v2655 = vunpack.c.l.b16 %v2282
    %v2656 = vunpack.c.h.b16 %v2282
    %v2657 = vunpack.c.l.b16 %v2283
    %v2658 = vunpack.c.h.b16 %v2283
    %v2659 = vunpack.c.l.b16 %v2284
    %v2660 = vunpack.c.h.b16 %v2284
    %v2661 = vunpack.c.l.b16 %v2285
    %v2662 = vunpack.c.h.b16 %v2285
    %v2663 = vunpack.c.l.b16 %v2286
    %v2664 = vunpack.c.h.b16 %v2286
    %v2665 = vunpack.c.l.b16 %v2287
    %v2666 = vunpack.c.h.b16 %v2287
    %v2667 = vunpack.c.l.b16 %v2288
    %v2668 = vunpack.c.h.b16 %v2288
    %v2669 = vunpack.c.l.b16 %v2289
    %v2670 = vunpack.c.h.b16 %v2289
    %v2671 = vunpack.c.l.b16 %v2290
    %v2672 = vunpack.c.h.b16 %v2290
    %v2673 = vunpack.c.l.b16 %v2291
    %v2674 = vunpack.c.h.b16 %v2291
    %v2675 = vunpack.c.l.b16 %v2292
    %v2676 = vunpack.c.h.b16 %v2292
    %v2677 = vunpack.c.l.b16 %v2293
    %v2678 = vunpack.c.h.b16 %v2293
    %v2679 = vunpack.c.l.b16 %v2294
    %v2680 = vunpack.c.h.b16 %v2294
    %v2681 = vunpack.c.l.b16 %v2295
    %v2682 = vunpack.c.h.b16 %v2295
    %v2683 = vunpack.c.l.b16 %v2296
    %v2684 = vunpack.c.h.b16 %v2296
    %v2685 = vunpack.c.l.b16 %v2297
    %v2686 = vunpack.c.h.b16 %v2297
    %v2687 = vunpack.c.l.b16 %v2298
    %v2688 = vunpack.c.h.b16 %v2298
    %v2689 = vunpack.c.l.b16 %v2299
    %v2690 = vunpack.c.h.b16 %v2299
    %v2691 = vunpack.c.l.b16 %v2300
    %v2692 = vunpack.c.h.b16 %v2300
    %v2693 = vunpack.c.l.b16 %v2301
    %v2694 = vunpack.c.h.b16 %v2301
    %v2695 = vunpack.c.l.b16 %v2302
    %v2696 = vunpack.c.h.b16 %v2302
    %v2697 = vunpack.c.l.b16 %v2303
    %v2698 = vunpack.c.h.b16 %v2303
    %v2699 = vunpack.c.l.b16 %v2304
    %v2700 = vunpack.c.h.b16 %v2304
    %v2701 = vunpack.c.l.b16 %v2305
    %v2702 = vunpack.c.h.b16 %v2305
    %v2703 = vunpack.c.l.b16 %v2306
    %v2704 = vunpack.c.h.b16 %v2306
    %v2705 = vunpack.c.l.b16 %v2307
    %v2706 = vunpack.c.h.b16 %v2307
    %v2707 = vunpack.c.l.b16 %v2308
    %v2708 = vunpack.c.h.b16 %v2308
    %v2709 = vunpack.c.l.b16 %v2309
    %v2710 = vunpack.c.h.b16 %v2309
    %v2711 = vunpack.c.l.b16 %v2310
    %v2712 = vunpack.c.h.b16 %v2310
    %v2713 = vunpack.c.l.b16 %v2311
    %v2714 = vunpack.c.h.b16 %v2311
    %v2715 = vunpack.c.l.b16 %v2312
    %v2716 = vunpack.c.h.b16 %v2312
    %v2717 = vunpack.c.l.b16 %v2313
    %v2718 = vunpack.c.h.b16 %v2313
    %v2719 = vunpack.c.l.b16 %v2314
    %v2720 = vunpack.c.h.b16 %v2314
    %v2721 = vunpack.c.l.b16 %v2315
    %v2722 = vunpack.c.h.b16 %v2315
    %v2723 = vunpack.c.l.b16 %v2316
    %v2724 = vunpack.c.h.b16 %v2316
    %v2725 = vunpack.c.l.b16 %v2317
    %v2726 = vunpack.c.h.b16 %v2317
    %v2727 = vunpack.c.l.b16 %v2318
    %v2728 = vunpack.c.h.b16 %v2318
    %v2729 = vunpack.c.l.b16 %v2319
    %v2730 = vunpack.c.h.b16 %v2319
    %v2731 = vunpack.c.l.b16 %v2320
    %v2732 = vunpack.c.h.b16 %v2320
    %v2733 = vunpack.c.l.b16 %v2321
    %v2734 = vunpack.c.h.b16 %v2321
    %v2735 = vunpack.c.l.b16 %v2322
    %v2736 = vunpack.c.h.b16 %v2322
    %v2737 = vunpack.c.l.b16 %v2323
    %v2738 = vunpack.c.h.b16 %v2323
    %v2739 = vunpack.c.l.b16 %v2324
    %v2740 = vunpack.c.h.b16 %v2324
    %v2741 = vunpack.c.l.b16 %v2325
    %v2742 = vunpack.c.h.b16 %v2325
    %v2743 = vunpack.c.l.b16 %v2326
    %v2744 = vunpack.c.h.b16 %v2326
    %v2745 = vunpack.c.l.b16 %v2327
    %v2746 = vunpack.c.h.b16 %v2327
    %v2747 = vunpack.c.l.b16 %v2328
    %v2748 = vunpack.c.h.b16 %v2328
    %v2749 = vunpack.c.l.b16 %v2329
    %v2750 = vunpack.c.h.b16 %v2329
    %v2751 = vunpack.c.l.b16 %v2330
    %v2752 = vunpack.c.h.b16 %v2330
    %v2753 = vunpack.c.l.b16 %v2331
    %v2754 = vunpack.c.h.b16 %v2331
    %v2755 = vunpack.c.l.b16 %v2332
    %v2756 = vunpack.c.h.b16 %v2332
    %v2757 = vunpack.c.l.b16 %v2333
    %v2758 = vunpack.c.h.b16 %v2333
    %v2759 = vunpack.c.l.b16 %v2334
    %v2760 = vunpack.c.h.b16 %v2334
    %v2761 = vunpack.c.l.b16 %v2335
    %v2762 = vunpack.c.h.b16 %v2335
    %v2763 = vunpack.c.l.b16 %v2336
    %v2764 = vunpack.c.h.b16 %v2336
    %v2765 = vunpack.c.l.b16 %v2337
    %v2766 = vunpack.c.h.b16 %v2337
    %v2767 = vunpack.c.l.b16 %v2338
    %v2768 = vunpack.c.h.b16 %v2338
    %v2769 = vunpack.c.l.b16 %v2339
    %v2770 = vunpack.c.h.b16 %v2339
    %v2771 = vunpack.c.l.b16 %v2340
    %v2772 = vunpack.c.h.b16 %v2340
    %v2773 = vunpack.c.l.b16 %v2341
    %v2774 = vunpack.c.h.b16 %v2341
    %v2775 = vunpack.c.l.b16 %v2342
    %v2776 = vunpack.c.h.b16 %v2342
    %v2777 = vunpack.c.l.b16 %v2343
    %v2778 = vunpack.c.h.b16 %v2343
    %v2779 = vunpack.c.l.b16 %v2344
    %v2780 = vunpack.c.h.b16 %v2344
    %v2781 = vunpack.c.l.b16 %v2345
    %v2782 = vunpack.c.h.b16 %v2345
    %v2783 = vunpack.c.l.b16 %v2346
    %v2784 = vunpack.c.h.b16 %v2346
    %v2785 = vunpack.c.l.b16 %v2347
    %v2786 = vunpack.c.h.b16 %v2347
    %v2787 = vunpack.c.l.b16 %v2348
    %v2788 = vunpack.c.h.b16 %v2348
    %v2789 = vunpack.c.l.b16 %v2349
    %v2790 = vunpack.c.h.b16 %v2349
    %v2791 = vunpack.c.l.b16 %v2350
    %v2792 = vunpack.c.h.b16 %v2350
    %v2793 = vunpack.c.l.b16 %v2351
    %v2794 = vunpack.c.h.b16 %v2351
    %v2795 = vunpack.c.l.b16 %v2352
    %v2796 = vunpack.c.h.b16 %v2352
    %v2797 = vunpack.c.l.b16 %v2353
    %v2798 = vunpack.c.h.b16 %v2353
    %v2799 = vunpack.c.l.b16 %v2354
    %v2800 = vunpack.c.h.b16 %v2354
    %v2801 = vunpack.c.l.b16 %v2355
    %v2802 = vunpack.c.h.b16 %v2355
    %v2803 = vunpack.c.l.b16 %v2356
    %v2804 = vunpack.c.h.b16 %v2356
    %v2805 = vunpack.c.l.b16 %v2357
    %v2806 = vunpack.c.h.b16 %v2357
    %v2807 = vunpack.c.l.b16 %v2358
    %v2808 = vunpack.c.h.b16 %v2358
    %v2809 = vunpack.c.l.b16 %v2359
    %v2810 = vunpack.c.h.b16 %v2359
    %v2811 = vunpack.c.l.b16 %v2360
    %v2812 = vunpack.c.h.b16 %v2360
    %v2813 = vunpack.c.l.b16 %v2361
    %v2814 = vunpack.c.h.b16 %v2361
    %v2815 = vunpack.c.l.b16 %v2362
    %v2816 = vunpack.c.h.b16 %v2362
    %v2817 = vunpack.c.l.b16 %v2363
    %v2818 = vunpack.c.h.b16 %v2363
    %v2819 = vunpack.c.l.b16 %v2364
    %v2820 = vunpack.c.h.b16 %v2364
    %v2821 = vunpack.c.l.b16 %v2365
    %v2822 = vunpack.c.h.b16 %v2365
    %v2823 = vunpack.c.l.b16 %v2366
    %v2824 = vunpack.c.h.b16 %v2366
    %v2825 = vunpack.c.l.b16 %v2367
    %v2826 = vunpack.c.h.b16 %v2367
    %v2827 = vunpack.c.l.b16 %v2368
    %v2828 = vunpack.c.h.b16 %v2368
    %v2829 = vunpack.c.l.b16 %v2369
    %v2830 = vunpack.c.h.b16 %v2369
    %v2831 = vunpack.c.l.b16 %v2370
    %v2832 = vunpack.c.h.b16 %v2370
    %v2833 = vunpack.c.l.b16 %v2371
    %v2834 = vunpack.c.h.b16 %v2371
    %v2835 = vunpack.c.l.b16 %v2372
    %v2836 = vunpack.c.h.b16 %v2372
    %v2837 = vunpack.c.l.b16 %v2373
    %v2838 = vunpack.c.h.b16 %v2373
    %v2839 = vunpack.c.l.b16 %v2374
    %v2840 = vunpack.c.h.b16 %v2374
    %v2841 = vunpack.c.l.b16 %v2375
    %v2842 = vunpack.c.h.b16 %v2375
    %v2843 = vunpack.c.l.b16 %v2376
    %v2844 = vunpack.c.h.b16 %v2376
    %v2845 = vunpack.c.l.b16 %v2377
    %v2846 = vunpack.c.h.b16 %v2377
    %v2847 = vunpack.c.l.b16 %v2378
    %v2848 = vunpack.c.h.b16 %v2378
    %v2849 = vunpack.c.l.b16 %v2379
    %v2850 = vunpack.c.h.b16 %v2379
    %v2851 = vunpack.c.l.b16 %v2380
    %v2852 = vunpack.c.h.b16 %v2380
    %v2853 = vunpack.c.l.b16 %v2381
    %v2854 = vunpack.c.h.b16 %v2381
    %v2855 = vunpack.c.l.b16 %v2382
    %v2856 = vunpack.c.h.b16 %v2382
    %v2857 = vunpack.c.l.b16 %v2383
    %v2858 = vunpack.c.h.b16 %v2383
    %v2859 = vunpack.c.l.b16 %v2384
    %v2860 = vunpack.c.h.b16 %v2384
    %v2861 = vunpack.c.l.b16 %v2385
    %v2862 = vunpack.c.h.b16 %v2385
    %v2863 = vunpack.c.l.b16 %v2386
    %v2864 = vunpack.c.h.b16 %v2386
    %v2865 = vunpack.c.l.b16 %v2387
    %v2866 = vunpack.c.h.b16 %v2387
    %v2867 = vunpack.c.l.b16 %v2388
    %v2868 = vunpack.c.h.b16 %v2388
    %v2869 = vunpack.c.l.b16 %v2389
    %v2870 = vunpack.c.h.b16 %v2389
    %v2871 = vunpack.c.l.b16 %v2390
    %v2872 = vunpack.c.h.b16 %v2390
    %v2873 = vunpack.c.l.b16 %v2391
    %v2874 = vunpack.c.h.b16 %v2391
    %v2875 = vunpack.c.l.b16 %v2392
    %v2876 = vunpack.c.h.b16 %v2392
    %v2877 = vunpack.c.l.b16 %v2393
    %v2878 = vunpack.c.h.b16 %v2393
    %v2879 = vunpack.c.l.b16 %v2394
    %v2880 = vunpack.c.h.b16 %v2394
    %v2881 = vunpack.c.l.b16 %v2395
    %v2882 = vunpack.c.h.b16 %v2395
    %v2883 = vunpack.c.l.b16 %v2396
    %v2884 = vunpack.c.h.b16 %v2396
    %v2885 = vunpack.c.l.b16 %v2397
    %v2886 = vunpack.c.h.b16 %v2397
    %v2887 = vunpack.c.l.b16 %v2398
    %v2888 = vunpack.c.h.b16 %v2398
    %v2889 = vunpack.c.l.b16 %v2399
    %v2890 = vunpack.c.h.b16 %v2399
    %v2891 = vunpack.c.l.b16 %v2400
    %v2892 = vunpack.c.h.b16 %v2400
    %v2893 = vunpack.c.l.b16 %v2401
    %v2894 = vunpack.c.h.b16 %v2401
    %v2895 = vunpack.c.l.b16 %v2402
    %v2896 = vunpack.c.h.b16 %v2402
    %v2897 = vunpack.c.l.b16 %v2403
    %v2898 = vunpack.c.h.b16 %v2403
    %v2899 = vunpack.c.l.b16 %v2404
    %v2900 = vunpack.c.h.b16 %v2404
    %v2901 = vunpack.c.l.b16 %v2405
    %v2902 = vunpack.c.h.b16 %v2405
    %v2903 = vunpack.c.l.b16 %v2406
    %v2904 = vunpack.c.h.b16 %v2406
    %v2905 = vunpack.c.l.b16 %v2407
    %v2906 = vunpack.c.h.b16 %v2407
    %v2907 = vunpack.c.l.b16 %v2408
    %v2908 = vunpack.c.h.b16 %v2408
    %v2909 = vunpack.c.l.b16 %v2409
    %v2910 = vunpack.c.h.b16 %v2409
    %v2911 = vunpack.c.l.b16 %v2410
    %v2912 = vunpack.c.h.b16 %v2410
    %v2913 = vpack.c.b16 %v2597, %v2593
    %v2914 = vpack.c.b16 %v2598, %v2594
    %v2915 = vpack.c.b16 %v2599, %v2595
    %v2916 = vpack.c.b16 %v2600, %v2596
    %v2917 = vpack.c.b16 %v2605, %v2601
    %v2918 = vpack.c.b16 %v2606, %v2602
    %v2919 = vpack.c.b16 %v2607, %v2603
    %v2920 = vpack.c.b16 %v2608, %v2604
    %v2921 = vpack.c.b16 %v2613, %v2609
    %v2922 = vpack.c.b16 %v2614, %v2610
    %v2923 = vpack.c.b16 %v2615, %v2611
    %v2924 = vpack.c.b16 %v2616, %v2612
    %v2925 = vpack.c.b16 %v2621, %v2617
    %v2926 = vpack.c.b16 %v2622, %v2618
    %v2927 = vpack.c.b16 %v2623, %v2619
    %v2928 = vpack.c.b16 %v2624, %v2620
    %v2929 = vpack.c.b16 %v2629, %v2625
    %v2930 = vpack.c.b16 %v2630, %v2626
    %v2931 = vpack.c.b16 %v2631, %v2627
    %v2932 = vpack.c.b16 %v2632, %v2628
    %v2933 = vpack.c.b16 %v2637, %v2633
    %v2934 = vpack.c.b16 %v2638, %v2634
    %v2935 = vpack.c.b16 %v2639, %v2635
    %v2936 = vpack.c.b16 %v2640, %v2636
    %v2937 = vpack.c.b16 %v2645, %v2641
    %v2938 = vpack.c.b16 %v2646, %v2642
    %v2939 = vpack.c.b16 %v2647, %v2643
    %v2940 = vpack.c.b16 %v2648, %v2644
    %v2941 = vpack.c.b16 %v2653, %v2649
    %v2942 = vpack.c.b16 %v2654, %v2650
    %v2943 = vpack.c.b16 %v2655, %v2651
    %v2944 = vpack.c.b16 %v2656, %v2652
    %v2945 = vpack.c.b16 %v2661, %v2657
    %v2946 = vpack.c.b16 %v2662, %v2658
    %v2947 = vpack.c.b16 %v2663, %v2659
    %v2948 = vpack.c.b16 %v2664, %v2660
    %v2949 = vpack.c.b16 %v2669, %v2665
    %v2950 = vpack.c.b16 %v2670, %v2666
    %v2951 = vpack.c.b16 %v2671, %v2667
    %v2952 = vpack.c.b16 %v2672, %v2668
    %v2953 = vpack.c.b16 %v2677, %v2673
    %v2954 = vpack.c.b16 %v2678, %v2674
    %v2955 = vpack.c.b16 %v2679, %v2675
    %v2956 = vpack.c.b16 %v2680, %v2676
    %v2957 = vpack.c.b16 %v2685, %v2681
    %v2958 = vpack.c.b16 %v2686, %v2682
    %v2959 = vpack.c.b16 %v2687, %v2683
    %v2960 = vpack.c.b16 %v2688, %v2684
    %v2961 = vpack.c.b16 %v2693, %v2689
    %v2962 = vpack.c.b16 %v2694, %v2690
    %v2963 = vpack.c.b16 %v2695, %v2691
    %v2964 = vpack.c.b16 %v2696, %v2692
    %v2965 = vpack.c.b16 %v2701, %v2697
    %v2966 = vpack.c.b16 %v2702, %v2698
    %v2967 = vpack.c.b16 %v2703, %v2699
    %v2968 = vpack.c.b16 %v2704, %v2700
    %v2969 = vpack.c.b16 %v2709, %v2705
    %v2970 = vpack.c.b16 %v2710, %v2706
    %v2971 = vpack.c.b16 %v2711, %v2707
    %v2972 = vpack.c.b16 %v2712, %v2708
    %v2973 = vpack.c.b16 %v2717, %v2713
    %v2974 = vpack.c.b16 %v2718, %v2714
    %v2975 = vpack.c.b16 %v2719, %v2715
    %v2976 = vpack.c.b16 %v2720, %v2716
    %v2977 = vpack.c.b16 %v2725, %v2721
    %v2978 = vpack.c.b16 %v2726, %v2722
    %v2979 = vpack.c.b16 %v2727, %v2723
    %v2980 = vpack.c.b16 %v2728, %v2724
    %v2981 = vpack.c.b16 %v2733, %v2729
    %v2982 = vpack.c.b16 %v2734, %v2730
    %v2983 = vpack.c.b16 %v2735, %v2731
    %v2984 = vpack.c.b16 %v2736, %v2732
    %v2985 = vpack.c.b16 %v2741, %v2737
    %v2986 = vpack.c.b16 %v2742, %v2738
    %v2987 = vpack.c.b16 %v2743, %v2739
    %v2988 = vpack.c.b16 %v2744, %v2740
    %v2989 = vpack.c.b16 %v2749, %v2745
    %v2990 = vpack.c.b16 %v2750, %v2746
    %v2991 = vpack.c.b16 %v2751, %v2747
    %v2992 = vpack.c.b16 %v2752, %v2748
    %v2993 = vpack.c.b16 %v2757, %v2753
    %v2994 = vpack.c.b16 %v2758, %v2754
    %v2995 = vpack.c.b16 %v2759, %v2755
    %v2996 = vpack.c.b16 %v2760, %v2756
    %v2997 = vpack.c.b16 %v2765, %v2761
    %v2998 = vpack.c.b16 %v2766, %v2762
    %v2999 = vpack.c.b16 %v2767, %v2763
    %v3000 = vpack.c.b16 %v2768, %v2764
    %v3001 = vpack.c.b16 %v2773, %v2769
    %v3002 = vpack.c.b16 %v2774, %v2770
    %v3003 = vpack.c.b16 %v2775, %v2771
    %v3004 = vpack.c.b16 %v2776, %v2772
    %v3005 = vpack.c.b16 %v2781, %v2777
    %v3006 = vpack.c.b16 %v2782, %v2778
    %v3007 = vpack.c.b16 %v2783, %v2779
    %v3008 = vpack.c.b16 %v2784, %v2780
    %v3009 = vpack.c.b16 %v2789, %v2785
    %v3010 = vpack.c.b16 %v2790, %v2786
    %v3011 = vpack.c.b16 %v2791, %v2787
    %v3012 = vpack.c.b16 %v2792, %v2788
    %v3013 = vpack.c.b16 %v2797, %v2793
    %v3014 = vpack.c.b16 %v2798, %v2794
    %v3015 = vpack.c.b16 %v2799, %v2795
    %v3016 = vpack.c.b16 %v2800, %v2796
    %v3017 = vpack.c.b16 %v2805, %v2801
    %v3018 = vpack.c.b16 %v2806, %v2802
    %v3019 = vpack.c.b16 %v2807, %v2803
    %v3020 = vpack.c.b16 %v2808, %v2804
    %v3021 = vpack.c.b16 %v2813, %v2809
    %v3022 = vpack.c.b16 %v2814, %v2810
    %v3023 = vpack.c.b16 %v2815, %v2811
    %v3024 = vpack.c.b16 %v2816, %v2812
    %v3025 = vpack.c.b16 %v2821, %v2817
    %v3026 = vpack.c.b16 %v2822, %v2818
    %v3027 = vpack.c.b16 %v2823, %v2819
    %v3028 = vpack.c.b16 %v2824, %v2820
    %v3029 = vpack.c.b16 %v2829, %v2825
    %v3030 = vpack.c.b16 %v2830, %v2826
    %v3031 = vpack.c.b16 %v2831, %v2827
    %v3032 = vpack.c.b16 %v2832, %v2828
    %v3033 = vpack.c.b16 %v2837, %v2833
    %v3034 = vpack.c.b16 %v2838, %v2834
    %v3035 = vpack.c.b16 %v2839, %v2835
    %v3036 = vpack.c.b16 %v2840, %v2836
    %v3037 = vpack.c.b16 %v2845, %v2841
    %v3038 = vpack.c.b16 %v2846, %v2842
    %v3039 = vpack.c.b16 %v2847, %v2843
    %v3040 = vpack.c.b16 %v2848, %v2844
    %v3041 = vpack.c.b16 %v2853, %v2849
    %v3042 = vpack.c.b16 %v2854, %v2850
    %v3043 = vpack.c.b16 %v2855, %v2851
    %v3044 = vpack.c.b16 %v2856, %v2852
    %v3045 = vpack.c.b16 %v2861, %v2857
    %v3046 = vpack.c.b16 %v2862, %v2858
    %v3047 = vpack.c.b16 %v2863, %v2859
    %v3048 = vpack.c.b16 %v2864, %v2860
    %v3049 = vpack.c.b16 %v2869, %v2865
    %v3050 = vpack.c.b16 %v2870, %v2866
    %v3051 = vpack.c.b16 %v2871, %v2867
    %v3052 = vpack.c.b16 %v2872, %v2868
    %v3053 = vpack.c.b16 %v2877, %v2873
    %v3054 = vpack.c.b16 %v2878, %v2874
    %v3055 = vpack.c.b16 %v2879, %v2875
    %v3056 = vpack.c.b16 %v2880, %v2876
    %v3057 = vpack.c.b16 %v2885, %v2881
    %v3058 = vpack.c.b16 %v2886, %v2882
    %v3059 = vpack.c.b16 %v2887, %v2883
    %v3060 = vpack.c.b16 %v2888, %v2884
    %v3061 = vpack.c.b16 %v2893, %v2889
    %v3062 = vpack.c.b16 %v2894, %v2890
    %v3063 = vpack.c.b16 %v2895, %v2891
    %v3064 = vpack.c.b16 %v2896, %v2892
    %v3065 = vpack.c.b16 %v2901, %v2897
    %v3066 = vpack.c.b16 %v2902, %v2898
    %v3067 = vpack.c.b16 %v2903, %v2899
    %v3068 = vpack.c.b16 %v2904, %v2900
    %v3069 = vpack.c.b16 %v2909, %v2905
    %v3070 = vpack.c.b16 %v2910, %v2906
    %v3071 = vpack.c.b16 %v2911, %v2907
    %v3072 = vpack.c.b16 %v2912, %v2908
    %3233 = vmatprep.subr.bf16.mxu0 %v2914
    %3234 = vmatpush1.bf16.msra.mxu0 %v2913
    %3235 = vmatprep.subr.bf16.mxu0 %v2918
    %3236 = vmatpush1.bf16.msra.mxu0 %v2917
    %3237 = vmatprep.subr.bf16.mxu0 %v2922
    %3238 = vmatpush1.bf16.msra.mxu0 %v2921
    %3239 = vmatprep.subr.bf16.mxu0 %v2926
    %3240 = vmatpush1.bf16.msra.mxu0 %v2925
    %3241 = vmatprep.subr.bf16.mxu0 %v2930
    %3242 = vmatpush1.bf16.msra.mxu0 %v2929
    %3243 = vmatprep.subr.bf16.mxu0 %v2934
    %3244 = vmatpush1.bf16.msra.mxu0 %v2933
    %3245 = vmatprep.subr.bf16.mxu0 %v2938
    %3246 = vmatpush1.bf16.msra.mxu0 %v2937
    %3247 = vmatprep.subr.bf16.mxu0 %v2942
    %3248 = vmatpush1.bf16.msra.mxu0 %v2941
    %3249 = vmatprep.subr.bf16.mxu0 %v2946
    %3250 = vmatpush1.bf16.msra.mxu0 %v2945
    %3251 = vmatprep.subr.bf16.mxu0 %v2950
    %3252 = vmatpush1.bf16.msra.mxu0 %v2949
    %3253 = vmatprep.subr.bf16.mxu0 %v2954
    %3254 = vmatpush1.bf16.msra.mxu0 %v2953
    %3255 = vmatprep.subr.bf16.mxu0 %v2958
    %3256 = vmatpush1.bf16.msra.mxu0 %v2957
    %3257 = vmatprep.subr.bf16.mxu0 %v2962
    %3258 = vmatpush1.bf16.msra.mxu0 %v2961
    %3259 = vmatprep.subr.bf16.mxu0 %v2966
    %3260 = vmatpush1.bf16.msra.mxu0 %v2965
    %3261 = vmatprep.subr.bf16.mxu0 %v2970
    %3262 = vmatpush1.bf16.msra.mxu0 %v2969
    %3263 = vmatprep.subr.bf16.mxu0 %v2974
    %3264 = vmatpush1.bf16.msra.mxu0 %v2973
    %3265 = vmatprep.mubr.bf16.mxu0 %v2247
    %3266 = vmatmul.mubr.bf16.gmra.mrb[0].mxu0 %v2246
    %v3267 = vpop.f32.mrb[0].mxu0
    %v3268 = vadd.f32 %v2416, %v3267
    %v3269 = vpop.f32.mrb[0].mxu0
    %v3270 = vadd.f32 %v2420, %v3269
    %v3271 = vpop.f32.mrb[0].mxu0
    %v3272 = vpop.f32.mrb[0].mxu0
    %3273 = vdwg.mxu0
    %3274 = vmatprep.subr.bf16.mxu0 %v2978
    %3275 = vmatpush1.bf16.msra.mxu0 %v2977
    %3276 = vmatprep.subr.bf16.mxu0 %v2982
    %3277 = vmatpush1.bf16.msra.mxu0 %v2981
    %3278 = vmatprep.subr.bf16.mxu0 %v2986
    %3279 = vmatpush1.bf16.msra.mxu0 %v2985
    %3280 = vmatprep.subr.bf16.mxu0 %v2990
    %3281 = vmatpush1.bf16.msra.mxu0 %v2989
    %3282 = vmatprep.subr.bf16.mxu0 %v2994
    %3283 = vmatpush1.bf16.msra.mxu0 %v2993
    %3284 = vmatprep.subr.bf16.mxu0 %v2998
    %3285 = vmatpush1.bf16.msra.mxu0 %v2997
    %3286 = vmatprep.subr.bf16.mxu0 %v3002
    %3287 = vmatpush1.bf16.msra.mxu0 %v3001
    %3288 = vmatprep.subr.bf16.mxu0 %v3006
    %3289 = vmatpush1.bf16.msra.mxu0 %v3005
    %3290 = vmatprep.subr.bf16.mxu0 %v3010
    %3291 = vmatpush1.bf16.msra.mxu0 %v3009
    %3292 = vmatprep.subr.bf16.mxu0 %v3014
    %3293 = vmatpush1.bf16.msra.mxu0 %v3013
    %3294 = vmatprep.subr.bf16.mxu0 %v3018
    %3295 = vmatpush1.bf16.msra.mxu0 %v3017
    %3296 = vmatprep.subr.bf16.mxu0 %v3022
    %3297 = vmatpush1.bf16.msra.mxu0 %v3021
    %3298 = vmatprep.subr.bf16.mxu0 %v3026
    %3299 = vmatpush1.bf16.msra.mxu0 %v3025
    %3300 = vmatprep.subr.bf16.mxu0 %v3030
    %3301 = vmatpush1.bf16.msra.mxu0 %v3029
    %3302 = vmatprep.subr.bf16.mxu0 %v3034
    %3303 = vmatpush1.bf16.msra.mxu0 %v3033
    %3304 = vmatprep.subr.bf16.mxu0 %v3038
    %3305 = vmatpush1.bf16.msra.mxu0 %v3037
    %3306 = vmatprep.mubr.bf16.mxu0 %v2249
    %3307 = vmatmul.mubr.bf16.gmra.mrb[0].mxu0 %v2248
    %v3308 = vpop.f32.mrb[0].mxu0
    %v3309 = vadd.f32 %v3268, %v3308
    %v3310 = vpop.f32.mrb[0].mxu0
    %v3311 = vadd.f32 %v3270, %v3310
    %v3312 = vpop.f32.mrb[0].mxu0
    %v3313 = vpop.f32.mrb[0].mxu0
    %3314 = vdwg.mxu0
    %3315 = vmatprep.subr.bf16.mxu0 %v3042
    %3316 = vmatpush1.bf16.msra.mxu0 %v3041
    %3317 = vmatprep.subr.bf16.mxu0 %v3046
    %3318 = vmatpush1.bf16.msra.mxu0 %v3045
    %3319 = vmatprep.subr.bf16.mxu0 %v3050
    %3320 = vmatpush1.bf16.msra.mxu0 %v3049
    %3321 = vmatprep.subr.bf16.mxu0 %v3054
    %3322 = vmatpush1.bf16.msra.mxu0 %v3053
    %3323 = vmatprep.subr.bf16.mxu0 %v3058
    %3324 = vmatpush1.bf16.msra.mxu0 %v3057
    %3325 = vmatprep.subr.bf16.mxu0 %v3062
    %3326 = vmatpush1.bf16.msra.mxu0 %v3061
    %3327 = vmatprep.subr.bf16.mxu0 %v3066
    %3328 = vmatpush1.bf16.msra.mxu0 %v3065
    %3329 = vmatprep.subr.bf16.mxu0 %v3070
    %3330 = vmatpush1.bf16.msra.mxu0 %v3069
    %3331 = vmatprep.subr.bf16.mxu0 0
    %3332 = vmatpush1.bf16.msra.mxu0 0
    %3333 = vmatprep.subr.bf16.mxu0 0
    %3334 = vmatpush1.bf16.msra.mxu0 0
    %3335 = vmatprep.subr.bf16.mxu0 0
    %3336 = vmatpush1.bf16.msra.mxu0 0
    %3337 = vmatprep.subr.bf16.mxu0 0
    %3338 = vmatpush1.bf16.msra.mxu0 0
    %3339 = vmatprep.subr.bf16.mxu0 0
    %3340 = vmatpush1.bf16.msra.mxu0 0
    %3341 = vmatprep.subr.bf16.mxu0 0
    %3342 = vmatpush1.bf16.msra.mxu0 0
    %3343 = vmatprep.subr.bf16.mxu0 0
    %3344 = vmatpush1.bf16.msra.mxu0 0
    %3345 = vmatprep.subr.bf16.mxu0 0
    %3346 = vmatpush1.bf16.msra.mxu0 0
    %3347 = vmatprep.mubr.bf16.mxu0 0
    %3348 = vmatmul.mubr.bf16.gmra.mrb[0].mxu0 %v2250
    %v3349 = vpop.f32.mrb[0].mxu0
    %v3350 = vadd.f32 %v3309, %v3349
    %v3351 = vpop.f32.mrb[0].mxu0
    %v3352 = vadd.f32 %v3311, %v3351
    %v3353 = vpop.f32.mrb[0].mxu0
    %v3354 = vpop.f32.mrb[0].mxu0
    %3355 = vdwg.mxu0
    %3356 = vmatprep.subr.bf16.mxu0 %v2916
    %3357 = vmatpush1.bf16.msra.mxu0 %v2915
    %3358 = vmatprep.subr.bf16.mxu0 %v2920
    %3359 = vmatpush1.bf16.msra.mxu0 %v2919
    %3360 = vmatprep.subr.bf16.mxu0 %v2924
    %3361 = vmatpush1.bf16.msra.mxu0 %v2923
    %3362 = vmatprep.subr.bf16.mxu0 %v2928
    %3363 = vmatpush1.bf16.msra.mxu0 %v2927
    %3364 = vmatprep.subr.bf16.mxu0 %v2932
    %3365 = vmatpush1.bf16.msra.mxu0 %v2931
    %3366 = vmatprep.subr.bf16.mxu0 %v2936
    %3367 = vmatpush1.bf16.msra.mxu0 %v2935
    %3368 = vmatprep.subr.bf16.mxu0 %v2940
    %3369 = vmatpush1.bf16.msra.mxu0 %v2939
    %3370 = vmatprep.subr.bf16.mxu0 %v2944
    %3371 = vmatpush1.bf16.msra.mxu0 %v2943
    %3372 = vmatprep.subr.bf16.mxu0 %v2948
    %3373 = vmatpush1.bf16.msra.mxu0 %v2947
    %3374 = vmatprep.subr.bf16.mxu0 %v2952
    %3375 = vmatpush1.bf16.msra.mxu0 %v2951
    %3376 = vmatprep.subr.bf16.mxu0 %v2956
    %3377 = vmatpush1.bf16.msra.mxu0 %v2955
    %3378 = vmatprep.subr.bf16.mxu0 %v2960
    %3379 = vmatpush1.bf16.msra.mxu0 %v2959
    %3380 = vmatprep.subr.bf16.mxu0 %v2964
    %3381 = vmatpush1.bf16.msra.mxu0 %v2963
    %3382 = vmatprep.subr.bf16.mxu0 %v2968
    %3383 = vmatpush1.bf16.msra.mxu0 %v2967
    %3384 = vmatprep.subr.bf16.mxu0 %v2972
    %3385 = vmatpush1.bf16.msra.mxu0 %v2971
    %3386 = vmatprep.subr.bf16.mxu0 %v2976
    %3387 = vmatpush1.bf16.msra.mxu0 %v2975
    %3388 = vmatprep.mubr.bf16.mxu0 %v2247
    %3389 = vmatmul.mubr.bf16.gmra.mrb[0].mxu0 %v2246
    %v3390 = vpop.f32.mrb[0].mxu0
    %v3391 = vadd.f32 %v2424, %v3390
    %v3392 = vpop.f32.mrb[0].mxu0
    %v3393 = vadd.f32 %v2428, %v3392
    %v3394 = vpop.f32.mrb[0].mxu0
    %v3395 = vpop.f32.mrb[0].mxu0
    %3396 = vdwg.mxu0
    %3397 = vmatprep.subr.bf16.mxu0 %v2980
    %3398 = vmatpush1.bf16.msra.mxu0 %v2979
    %3399 = vmatprep.subr.bf16.mxu0 %v2984
    %3400 = vmatpush1.bf16.msra.mxu0 %v2983
    %3401 = vmatprep.subr.bf16.mxu0 %v2988
    %3402 = vmatpush1.bf16.msra.mxu0 %v2987
    %3403 = vmatprep.subr.bf16.mxu0 %v2992
    %3404 = vmatpush1.bf16.msra.mxu0 %v2991
    %3405 = vmatprep.subr.bf16.mxu0 %v2996
    %3406 = vmatpush1.bf16.msra.mxu0 %v2995
    %3407 = vmatprep.subr.bf16.mxu0 %v3000
    %3408 = vmatpush1.bf16.msra.mxu0 %v2999
    %3409 = vmatprep.subr.bf16.mxu0 %v3004
    %3410 = vmatpush1.bf16.msra.mxu0 %v3003
    %3411 = vmatprep.subr.bf16.mxu0 %v3008
    %3412 = vmatpush1.bf16.msra.mxu0 %v3007
    %3413 = vmatprep.subr.bf16.mxu0 %v3012
    %3414 = vmatpush1.bf16.msra.mxu0 %v3011
    %3415 = vmatprep.subr.bf16.mxu0 %v3016
    %3416 = vmatpush1.bf16.msra.mxu0 %v3015
    %3417 = vmatprep.subr.bf16.mxu0 %v3020
    %3418 = vmatpush1.bf16.msra.mxu0 %v3019
    %3419 = vmatprep.subr.bf16.mxu0 %v3024
    %3420 = vmatpush1.bf16.msra.mxu0 %v3023
    %3421 = vmatprep.subr.bf16.mxu0 %v3028
    %3422 = vmatpush1.bf16.msra.mxu0 %v3027
    %3423 = vmatprep.subr.bf16.mxu0 %v3032
    %3424 = vmatpush1.bf16.msra.mxu0 %v3031
    %3425 = vmatprep.subr.bf16.mxu0 %v3036
    %3426 = vmatpush1.bf16.msra.mxu0 %v3035
    %3427 = vmatprep.subr.bf16.mxu0 %v3040
    %3428 = vmatpush1.bf16.msra.mxu0 %v3039
    %3429 = vmatprep.mubr.bf16.mxu0 %v2249
    %3430 = vmatmul.mubr.bf16.gmra.mrb[0].mxu0 %v2248
    %v3431 = vpop.f32.mrb[0].mxu0
    %v3432 = vadd.f32 %v3391, %v3431
    %v3433 = vpop.f32.mrb[0].mxu0
    %v3434 = vadd.f32 %v3393, %v3433
    %v3435 = vpop.f32.mrb[0].mxu0
    %v3436 = vpop.f32.mrb[0].mxu0
    %3437 = vdwg.mxu0
    %3438 = vmatprep.subr.bf16.mxu0 %v3044
    %3439 = vmatpush1.bf16.msra.mxu0 %v3043
    %3440 = vmatprep.subr.bf16.mxu0 %v3048
    %3441 = vmatpush1.bf16.msra.mxu0 %v3047
    %3442 = vmatprep.subr.bf16.mxu0 %v3052
    %3443 = vmatpush1.bf16.msra.mxu0 %v3051
    %3444 = vmatprep.subr.bf16.mxu0 %v3056
    %3445 = vmatpush1.bf16.msra.mxu0 %v3055
    %3446 = vmatprep.subr.bf16.mxu0 %v3060
    %3447 = vmatpush1.bf16.msra.mxu0 %v3059
    %3448 = vmatprep.subr.bf16.mxu0 %v3064
    %3449 = vmatpush1.bf16.msra.mxu0 %v3063
    %3450 = vmatprep.subr.bf16.mxu0 %v3068
    %3451 = vmatpush1.bf16.msra.mxu0 %v3067
    %3452 = vmatprep.subr.bf16.mxu0 %v3072
    %3453 = vmatpush1.bf16.msra.mxu0 %v3071
    %3454 = vmatprep.subr.bf16.mxu0 0
    %3455 = vmatpush1.bf16.msra.mxu0 0
    %3456 = vmatprep.subr.bf16.mxu0 0
    %3457 = vmatpush1.bf16.msra.mxu0 0
    %3458 = vmatprep.subr.bf16.mxu0 0
    %3459 = vmatpush1.bf16.msra.mxu0 0
    %3460 = vmatprep.subr.bf16.mxu0 0
    %3461 = vmatpush1.bf16.msra.mxu0 0
    %3462 = vmatprep.subr.bf16.mxu0 0
    %3463 = vmatpush1.bf16.msra.mxu0 0
    %3464 = vmatprep.subr.bf16.mxu0 0
    %3465 = vmatpush1.bf16.msra.mxu0 0
    %3466 = vmatprep.subr.bf16.mxu0 0
    %3467 = vmatpush1.bf16.msra.mxu0 0
    %3468 = vmatprep.subr.bf16.mxu0 0
    %3469 = vmatpush1.bf16.msra.mxu0 0
    %3470 = vmatprep.mubr.bf16.mxu0 0
    %3471 = vmatmul.mubr.bf16.gmra.mrb[0].mxu0 %v2250
    %v3472 = vpop.f32.mrb[0].mxu0
    %v3473 = vadd.f32 %v3432, %v3472
    %v3474 = vpop.f32.mrb[0].mxu0
    %v3475 = vadd.f32 %v3434, %v3474
    %v3476 = vpop.f32.mrb[0].mxu0
    %v3477 = vpop.f32.mrb[0].mxu0
    %3478 = vdwg.mxu0
    %vm3479 = vcmp.gt.f32.partialorder %v3350, 0.3
    %vm3480 = vcmp.gt.f32.partialorder %v3352, 0.3
    %vm3481 = vcmp.gt.f32.partialorder %v3473, 0.3
    %vm3482 = vcmp.gt.f32.partialorder %v3475, 0.3
    %v3483 = vsel %vm3479, 1, 0
    %v3484 = vsel %vm3480, 1, 0
    %v3485 = vsel %vm3481, 1, 0
    %v3486 = vsel %vm3482, 1, 0
    %v3487 = vcvt.s32.f32 %v3483
    %v3488 = vcvt.s32.f32 %v3484
    %v3489 = vcvt.s32.f32 %v3485
    %v3490 = vcvt.s32.f32 %v3486
    %v3491 = vpack.c.bf16 %v3487, %v3487
    %v3492 = vpack.c.bf16 %v3488, %v3488
    %v3493 = vpack.c.bf16 %v3489, %v3489
    %v3494 = vpack.c.bf16 %v3490, %v3490
    %v3495 = vld [vmem:[#allocation9] sm:$0xff]
    %v3496 = vld [vmem:[#allocation9 + $0x8] sm:$0xff]
    %v3497 = vld [vmem:[#allocation9 + $0x10] sm:$0xff]
    %v3498 = vld [vmem:[#allocation9 + $0x18] sm:$0xff]
    %v3499 = vld [vmem:[#allocation9 + $0x20] sm:$0xff]
    %v3500 = vld [vmem:[#allocation9 + $0x28] sm:$0xff]
    %v3501 = vld [vmem:[#allocation9 + $0x30] sm:$0xff]
    %v3502 = vld [vmem:[#allocation9 + $0x38] sm:$0xff]
    %v3503 = vld [vmem:[#allocation9 + $0x40] sm:$0xff]
    %v3504 = vld [vmem:[#allocation9 + $0x48] sm:$0xff]
    %v3505 = vld [vmem:[#allocation9 + $0x50] sm:$0xff]
    %v3506 = vld [vmem:[#allocation9 + $0x58] sm:$0xff]
    %v3507 = vld [vmem:[#allocation9 + $0x60] sm:$0xff]
    %v3508 = vld [vmem:[#allocation9 + $0x68] sm:$0xff]
    %v3509 = vld [vmem:[#allocation9 + $0x70] sm:$0xff]
    %v3510 = vld [vmem:[#allocation9 + $0x78] sm:$0xff]
    %v3511 = vld [vmem:[#allocation9 + $0x80] sm:$0xff]
    %v3512 = vld [vmem:[#allocation9 + $0x88] sm:$0xff]
    %v3513 = vld [vmem:[#allocation9 + $0x90] sm:$0xff]
    %v3514 = vld [vmem:[#allocation9 + $0x98] sm:$0xff]
    %v3515 = vld [vmem:[#allocation9 + $0xa0] sm:$0xff]
    %v3516 = vld [vmem:[#allocation9 + $0xa8] sm:$0xff]
    %v3517 = vld [vmem:[#allocation9 + $0xb0] sm:$0xff]
    %v3518 = vld [vmem:[#allocation9 + $0xb8] sm:$0xff]
    %v3519 = vld [vmem:[#allocation9 + $0xc0] sm:$0xff]
    %v3520 = vld [vmem:[#allocation9 + $0xc8] sm:$0xff]
    %v3521 = vld [vmem:[#allocation9 + $0xd0] sm:$0xff]
    %v3522 = vld [vmem:[#allocation9 + $0xd8] sm:$0xff]
    %v3523 = vld [vmem:[#allocation9 + $0xe0] sm:$0xff]
    %v3524 = vld [vmem:[#allocation9 + $0xe8] sm:$0xff]
    %v3525 = vld [vmem:[#allocation9 + $0xf0] sm:$0xff]
    %v3526 = vld [vmem:[#allocation9 + $0xf8] sm:$0xff]
    %v3527 = vld [vmem:[#allocation9 + $0x100] sm:$0xff]
    %v3528 = vld [vmem:[#allocation9 + $0x108] sm:$0xff]
    %v3529 = vld [vmem:[#allocation9 + $0x110] sm:$0xff]
    %v3530 = vld [vmem:[#allocation9 + $0x118] sm:$0xff]
    %v3531 = vld [vmem:[#allocation9 + $0x120] sm:$0xff]
    %v3532 = vld [vmem:[#allocation9 + $0x128] sm:$0xff]
    %v3533 = vld [vmem:[#allocation9 + $0x130] sm:$0xff]
    %v3534 = vld [vmem:[#allocation9 + $0x138] sm:$0xff]
    %v3535 = vld [vmem:[#allocation9 + $0x140] sm:$0xff]
    %v3536 = vld [vmem:[#allocation9 + $0x148] sm:$0xff]
    %v3537 = vld [vmem:[#allocation9 + $0x150] sm:$0xff]
    %v3538 = vld [vmem:[#allocation9 + $0x158] sm:$0xff]
    %v3539 = vld [vmem:[#allocation9 + $0x160] sm:$0xff]
    %v3540 = vld [vmem:[#allocation9 + $0x168] sm:$0xff]
    %v3541 = vld [vmem:[#allocation9 + $0x170] sm:$0xff]
    %v3542 = vld [vmem:[#allocation9 + $0x178] sm:$0xff]
    %v3543 = vld [vmem:[#allocation9 + $0x180] sm:$0xff]
    %v3544 = vld [vmem:[#allocation9 + $0x188] sm:$0xff]
    %v3545 = vld [vmem:[#allocation9 + $0x190] sm:$0xff]
    %v3546 = vld [vmem:[#allocation9 + $0x198] sm:$0xff]
    %v3547 = vld [vmem:[#allocation9 + $0x1a0] sm:$0xff]
    %v3548 = vld [vmem:[#allocation9 + $0x1a8] sm:$0xff]
    %v3549 = vld [vmem:[#allocation9 + $0x1b0] sm:$0xff]
    %v3550 = vld [vmem:[#allocation9 + $0x1b8] sm:$0xff]
    %v3551 = vld [vmem:[#allocation9 + $0x1c0] sm:$0xff]
    %v3552 = vld [vmem:[#allocation9 + $0x1c8] sm:$0xff]
    %v3553 = vld [vmem:[#allocation9 + $0x1d0] sm:$0xff]
    %v3554 = vld [vmem:[#allocation9 + $0x1d8] sm:$0xff]
    %v3555 = vld [vmem:[#allocation9 + $0x1e0] sm:$0xff]
    %v3556 = vld [vmem:[#allocation9 + $0x1e8] sm:$0xff]
    %v3557 = vld [vmem:[#allocation9 + $0x1f0] sm:$0xff]
    %v3558 = vld [vmem:[#allocation9 + $0x1f8] sm:$0xff]
    %v3559 = vld [vmem:[%s7] sm:$0x3]
    %v3561 = vlaneseq
    %v3562 = vshrl.u32 %v3561, 7
    %v3563 = vsub.s32 0, %v3562
    %v3564 = vrot.slane %v3559, %v3563
    %v3565 = vlaneseq
    %v3566 = vshrl.u32 %v3565, 7
    %v3567 = vsub.s32 1, %v3566
    %v3568 = vrot.slane %v3559, %v3567
    %v3635 = vunpack.c.l.b16 %v3495
    %v3636 = vunpack.c.h.b16 %v3495
    %v3637 = vunpack.c.l.b16 %v3496
    %v3638 = vunpack.c.h.b16 %v3496
    %v3639 = vunpack.c.l.b16 %v3497
    %v3640 = vunpack.c.h.b16 %v3497
    %v3641 = vunpack.c.l.b16 %v3498
    %v3642 = vunpack.c.h.b16 %v3498
    %v3643 = vunpack.c.l.b16 %v3499
    %v3644 = vunpack.c.h.b16 %v3499
    %v3645 = vunpack.c.l.b16 %v3500
    %v3646 = vunpack.c.h.b16 %v3500
    %v3647 = vunpack.c.l.b16 %v3501
    %v3648 = vunpack.c.h.b16 %v3501
    %v3649 = vunpack.c.l.b16 %v3502
    %v3650 = vunpack.c.h.b16 %v3502
    %v3651 = vunpack.c.l.b16 %v3503
    %v3652 = vunpack.c.h.b16 %v3503
    %v3653 = vunpack.c.l.b16 %v3504
    %v3654 = vunpack.c.h.b16 %v3504
    %v3655 = vunpack.c.l.b16 %v3505
    %v3656 = vunpack.c.h.b16 %v3505
    %v3657 = vunpack.c.l.b16 %v3506
    %v3658 = vunpack.c.h.b16 %v3506
    %v3659 = vunpack.c.l.b16 %v3507
    %v3660 = vunpack.c.h.b16 %v3507
    %v3661 = vunpack.c.l.b16 %v3508
    %v3662 = vunpack.c.h.b16 %v3508
    %v3663 = vunpack.c.l.b16 %v3509
    %v3664 = vunpack.c.h.b16 %v3509
    %v3665 = vunpack.c.l.b16 %v3510
    %v3666 = vunpack.c.h.b16 %v3510
    %v3667 = vunpack.c.l.b16 %v3511
    %v3668 = vunpack.c.h.b16 %v3511
    %v3669 = vunpack.c.l.b16 %v3512
    %v3670 = vunpack.c.h.b16 %v3512
    %v3671 = vunpack.c.l.b16 %v3513
    %v3672 = vunpack.c.h.b16 %v3513
    %v3673 = vunpack.c.l.b16 %v3514
    %v3674 = vunpack.c.h.b16 %v3514
    %v3675 = vunpack.c.l.b16 %v3515
    %v3676 = vunpack.c.h.b16 %v3515
    %v3677 = vunpack.c.l.b16 %v3516
    %v3678 = vunpack.c.h.b16 %v3516
    %v3679 = vunpack.c.l.b16 %v3517
    %v3680 = vunpack.c.h.b16 %v3517
    %v3681 = vunpack.c.l.b16 %v3518
    %v3682 = vunpack.c.h.b16 %v3518
    %v3683 = vunpack.c.l.b16 %v3519
    %v3684 = vunpack.c.h.b16 %v3519
    %v3685 = vunpack.c.l.b16 %v3520
    %v3686 = vunpack.c.h.b16 %v3520
    %v3687 = vunpack.c.l.b16 %v3521
    %v3688 = vunpack.c.h.b16 %v3521
    %v3689 = vunpack.c.l.b16 %v3522
    %v3690 = vunpack.c.h.b16 %v3522
    %v3691 = vunpack.c.l.b16 %v3523
    %v3692 = vunpack.c.h.b16 %v3523
    %v3693 = vunpack.c.l.b16 %v3524
    %v3694 = vunpack.c.h.b16 %v3524
    %v3695 = vunpack.c.l.b16 %v3525
    %v3696 = vunpack.c.h.b16 %v3525
    %v3697 = vunpack.c.l.b16 %v3526
    %v3698 = vunpack.c.h.b16 %v3526
    %v3699 = vunpack.c.l.b16 %v3527
    %v3700 = vunpack.c.h.b16 %v3527
    %v3701 = vunpack.c.l.b16 %v3528
    %v3702 = vunpack.c.h.b16 %v3528
    %v3703 = vunpack.c.l.b16 %v3529
    %v3704 = vunpack.c.h.b16 %v3529
    %v3705 = vunpack.c.l.b16 %v3530
    %v3706 = vunpack.c.h.b16 %v3530
    %v3707 = vunpack.c.l.b16 %v3531
    %v3708 = vunpack.c.h.b16 %v3531
    %v3709 = vunpack.c.l.b16 %v3532
    %v3710 = vunpack.c.h.b16 %v3532
    %v3711 = vunpack.c.l.b16 %v3533
    %v3712 = vunpack.c.h.b16 %v3533
    %v3713 = vunpack.c.l.b16 %v3534
    %v3714 = vunpack.c.h.b16 %v3534
    %v3715 = vunpack.c.l.b16 %v3535
    %v3716 = vunpack.c.h.b16 %v3535
    %v3717 = vunpack.c.l.b16 %v3536
    %v3718 = vunpack.c.h.b16 %v3536
    %v3719 = vunpack.c.l.b16 %v3537
    %v3720 = vunpack.c.h.b16 %v3537
    %v3721 = vunpack.c.l.b16 %v3538
    %v3722 = vunpack.c.h.b16 %v3538
    %v3723 = vunpack.c.l.b16 %v3539
    %v3724 = vunpack.c.h.b16 %v3539
    %v3725 = vunpack.c.l.b16 %v3540
    %v3726 = vunpack.c.h.b16 %v3540
    %v3727 = vunpack.c.l.b16 %v3541
    %v3728 = vunpack.c.h.b16 %v3541
    %v3729 = vunpack.c.l.b16 %v3542
    %v3730 = vunpack.c.h.b16 %v3542
    %v3731 = vunpack.c.l.b16 %v3543
    %v3732 = vunpack.c.h.b16 %v3543
    %v3733 = vunpack.c.l.b16 %v3544
    %v3734 = vunpack.c.h.b16 %v3544
    %v3735 = vunpack.c.l.b16 %v3545
    %v3736 = vunpack.c.h.b16 %v3545
    %v3737 = vunpack.c.l.b16 %v3546
    %v3738 = vunpack.c.h.b16 %v3546
    %v3739 = vunpack.c.l.b16 %v3547
    %v3740 = vunpack.c.h.b16 %v3547
    %v3741 = vunpack.c.l.b16 %v3548
    %v3742 = vunpack.c.h.b16 %v3548
    %v3743 = vunpack.c.l.b16 %v3549
    %v3744 = vunpack.c.h.b16 %v3549
    %v3745 = vunpack.c.l.b16 %v3550
    %v3746 = vunpack.c.h.b16 %v3550
    %v3747 = vunpack.c.l.b16 %v3551
    %v3748 = vunpack.c.h.b16 %v3551
    %v3749 = vunpack.c.l.b16 %v3552
    %v3750 = vunpack.c.h.b16 %v3552
    %v3751 = vunpack.c.l.b16 %v3553
    %v3752 = vunpack.c.h.b16 %v3553
    %v3753 = vunpack.c.l.b16 %v3554
    %v3754 = vunpack.c.h.b16 %v3554
    %v3755 = vunpack.c.l.b16 %v3555
    %v3756 = vunpack.c.h.b16 %v3555
    %v3757 = vunpack.c.l.b16 %v3556
    %v3758 = vunpack.c.h.b16 %v3556
    %v3759 = vunpack.c.l.b16 %v3557
    %v3760 = vunpack.c.h.b16 %v3557
    %v3761 = vunpack.c.l.b16 %v3558
    %v3762 = vunpack.c.h.b16 %v3558
    %v3763 = vpack.c.b16 %v3637, %v3635
    %v3764 = vpack.c.b16 %v3638, %v3636
    %v3765 = vpack.c.b16 %v3641, %v3639
    %v3766 = vpack.c.b16 %v3642, %v3640
    %v3767 = vpack.c.b16 %v3645, %v3643
    %v3768 = vpack.c.b16 %v3646, %v3644
    %v3769 = vpack.c.b16 %v3649, %v3647
    %v3770 = vpack.c.b16 %v3650, %v3648
    %v3771 = vpack.c.b16 %v3653, %v3651
    %v3772 = vpack.c.b16 %v3654, %v3652
    %v3773 = vpack.c.b16 %v3657, %v3655
    %v3774 = vpack.c.b16 %v3658, %v3656
    %v3775 = vpack.c.b16 %v3661, %v3659
    %v3776 = vpack.c.b16 %v3662, %v3660
    %v3777 = vpack.c.b16 %v3665, %v3663
    %v3778 = vpack.c.b16 %v3666, %v3664
    %v3779 = vpack.c.b16 %v3669, %v3667
    %v3780 = vpack.c.b16 %v3670, %v3668
    %v3781 = vpack.c.b16 %v3673, %v3671
    %v3782 = vpack.c.b16 %v3674, %v3672
    %v3783 = vpack.c.b16 %v3677, %v3675
    %v3784 = vpack.c.b16 %v3678, %v3676
    %v3785 = vpack.c.b16 %v3681, %v3679
    %v3786 = vpack.c.b16 %v3682, %v3680
    %v3787 = vpack.c.b16 %v3685, %v3683
    %v3788 = vpack.c.b16 %v3686, %v3684
    %v3789 = vpack.c.b16 %v3689, %v3687
    %v3790 = vpack.c.b16 %v3690, %v3688
    %v3791 = vpack.c.b16 %v3693, %v3691
    %v3792 = vpack.c.b16 %v3694, %v3692
    %v3793 = vpack.c.b16 %v3697, %v3695
    %v3794 = vpack.c.b16 %v3698, %v3696
    %v3795 = vpack.c.b16 %v3701, %v3699
    %v3796 = vpack.c.b16 %v3702, %v3700
    %v3797 = vpack.c.b16 %v3705, %v3703
    %v3798 = vpack.c.b16 %v3706, %v3704
    %v3799 = vpack.c.b16 %v3709, %v3707
    %v3800 = vpack.c.b16 %v3710, %v3708
    %v3801 = vpack.c.b16 %v3713, %v3711
    %v3802 = vpack.c.b16 %v3714, %v3712
    %v3803 = vpack.c.b16 %v3717, %v3715
    %v3804 = vpack.c.b16 %v3718, %v3716
    %v3805 = vpack.c.b16 %v3721, %v3719
    %v3806 = vpack.c.b16 %v3722, %v3720
    %v3807 = vpack.c.b16 %v3725, %v3723
    %v3808 = vpack.c.b16 %v3726, %v3724
    %v3809 = vpack.c.b16 %v3729, %v3727
    %v3810 = vpack.c.b16 %v3730, %v3728
    %v3811 = vpack.c.b16 %v3733, %v3731
    %v3812 = vpack.c.b16 %v3734, %v3732
    %v3813 = vpack.c.b16 %v3737, %v3735
    %v3814 = vpack.c.b16 %v3738, %v3736
    %v3815 = vpack.c.b16 %v3741, %v3739
    %v3816 = vpack.c.b16 %v3742, %v3740
    %v3817 = vpack.c.b16 %v3745, %v3743
    %v3818 = vpack.c.b16 %v3746, %v3744
    %v3819 = vpack.c.b16 %v3749, %v3747
    %v3820 = vpack.c.b16 %v3750, %v3748
    %v3821 = vpack.c.b16 %v3753, %v3751
    %v3822 = vpack.c.b16 %v3754, %v3752
    %v3823 = vpack.c.b16 %v3757, %v3755
    %v3824 = vpack.c.b16 %v3758, %v3756
    %v3825 = vpack.c.b16 %v3761, %v3759
    %v3826 = vpack.c.b16 %v3762, %v3760
    %3891 = vmatprep.subr.bf16.mxu0 %v3764
    %3892 = vmatpush1.bf16.msra.mxu0 %v3763
    %3893 = vmatprep.subr.bf16.mxu0 %v3766
    %3894 = vmatpush1.bf16.msra.mxu0 %v3765
    %3895 = vmatprep.subr.bf16.mxu0 %v3768
    %3896 = vmatpush1.bf16.msra.mxu0 %v3767
    %3897 = vmatprep.subr.bf16.mxu0 %v3770
    %3898 = vmatpush1.bf16.msra.mxu0 %v3769
    %3899 = vmatprep.subr.bf16.mxu0 %v3772
    %3900 = vmatpush1.bf16.msra.mxu0 %v3771
    %3901 = vmatprep.subr.bf16.mxu0 %v3774
    %3902 = vmatpush1.bf16.msra.mxu0 %v3773
    %3903 = vmatprep.subr.bf16.mxu0 %v3776
    %3904 = vmatpush1.bf16.msra.mxu0 %v3775
    %3905 = vmatprep.subr.bf16.mxu0 %v3778
    %3906 = vmatpush1.bf16.msra.mxu0 %v3777
    %3907 = vmatprep.subr.bf16.mxu0 %v3780
    %3908 = vmatpush1.bf16.msra.mxu0 %v3779
    %3909 = vmatprep.subr.bf16.mxu0 %v3782
    %3910 = vmatpush1.bf16.msra.mxu0 %v3781
    %3911 = vmatprep.subr.bf16.mxu0 %v3784
    %3912 = vmatpush1.bf16.msra.mxu0 %v3783
    %3913 = vmatprep.subr.bf16.mxu0 %v3786
    %3914 = vmatpush1.bf16.msra.mxu0 %v3785
    %3915 = vmatprep.subr.bf16.mxu0 %v3788
    %3916 = vmatpush1.bf16.msra.mxu0 %v3787
    %3917 = vmatprep.subr.bf16.mxu0 %v3790
    %3918 = vmatpush1.bf16.msra.mxu0 %v3789
    %3919 = vmatprep.subr.bf16.mxu0 %v3792
    %3920 = vmatpush1.bf16.msra.mxu0 %v3791
    %3921 = vmatprep.subr.bf16.mxu0 %v3794
    %3922 = vmatpush1.bf16.msra.mxu0 %v3793
    %3923 = vmatprep.mubr.bf16.mxu0 %v3492
    %3924 = vmatmul.mubr.bf16.gmra.mrb[0].mxu0 %v3491
    %v3925 = vpop.f32.mrb[0].mxu0
    %v3926 = vadd.f32 %v3564, %v3925
    %v3927 = vpop.f32.mrb[0].mxu0
    %v3928 = vadd.f32 %v3568, %v3927
    %v3929 = vpop.f32.mrb[0].mxu0
    %v3930 = vpop.f32.mrb[0].mxu0
    %3931 = vdwg.mxu0
    %3932 = vmatprep.subr.bf16.mxu0 %v3796
    %3933 = vmatpush1.bf16.msra.mxu0 %v3795
    %3934 = vmatprep.subr.bf16.mxu0 %v3798
    %3935 = vmatpush1.bf16.msra.mxu0 %v3797
    %3936 = vmatprep.subr.bf16.mxu0 %v3800
    %3937 = vmatpush1.bf16.msra.mxu0 %v3799
    %3938 = vmatprep.subr.bf16.mxu0 %v3802
    %3939 = vmatpush1.bf16.msra.mxu0 %v3801
    %3940 = vmatprep.subr.bf16.mxu0 %v3804
    %3941 = vmatpush1.bf16.msra.mxu0 %v3803
    %3942 = vmatprep.subr.bf16.mxu0 %v3806
    %3943 = vmatpush1.bf16.msra.mxu0 %v3805
    %3944 = vmatprep.subr.bf16.mxu0 %v3808
    %3945 = vmatpush1.bf16.msra.mxu0 %v3807
    %3946 = vmatprep.subr.bf16.mxu0 %v3810
    %3947 = vmatpush1.bf16.msra.mxu0 %v3809
    %3948 = vmatprep.subr.bf16.mxu0 %v3812
    %3949 = vmatpush1.bf16.msra.mxu0 %v3811
    %3950 = vmatprep.subr.bf16.mxu0 %v3814
    %3951 = vmatpush1.bf16.msra.mxu0 %v3813
    %3952 = vmatprep.subr.bf16.mxu0 %v3816
    %3953 = vmatpush1.bf16.msra.mxu0 %v3815
    %3954 = vmatprep.subr.bf16.mxu0 %v3818
    %3955 = vmatpush1.bf16.msra.mxu0 %v3817
    %3956 = vmatprep.subr.bf16.mxu0 %v3820
    %3957 = vmatpush1.bf16.msra.mxu0 %v3819
    %3958 = vmatprep.subr.bf16.mxu0 %v3822
    %3959 = vmatpush1.bf16.msra.mxu0 %v3821
    %3960 = vmatprep.subr.bf16.mxu0 %v3824
    %3961 = vmatpush1.bf16.msra.mxu0 %v3823
    %3962 = vmatprep.subr.bf16.mxu0 %v3826
    %3963 = vmatpush1.bf16.msra.mxu0 %v3825
    %3964 = vmatprep.mubr.bf16.mxu0 %v3494
    %3965 = vmatmul.mubr.bf16.gmra.mrb[0].mxu0 %v3493
    %v3966 = vpop.f32.mrb[0].mxu0
    %v3967 = vadd.f32 %v3926, %v3966
    %v3968 = vpop.f32.mrb[0].mxu0
    %v3969 = vadd.f32 %v3928, %v3968
    %v3970 = vpop.f32.mrb[0].mxu0
    %v3971 = vpop.f32.mrb[0].mxu0
    %3972 = vdwg.mxu0
    %vm3973 = vcmp.gt.f32.partialorder %v3967, 0.3
    %vm3974 = vcmp.gt.f32.partialorder %v3969, 0.3
    %v3975 = vsel %vm3973, 1, 0
    %v3976 = vsel %vm3974, 1, 0
    %v3977 = vcvt.s32.f32 %v3975
    %v3978 = vcvt.s32.f32 %v3976
    %v3979 = vld [vmem:[#allocation11] sm:$0xff]
    %v3980 = vld [vmem:[#allocation11 + $0x8] sm:$0xff]
    %v3981 = vld [vmem:[#allocation11 + $0x10] sm:$0xff]
    %v3982 = vld [vmem:[#allocation11 + $0x18] sm:$0xff]
    %v3983 = vld [vmem:[#allocation11 + $0x20] sm:$0xff]
    %v3984 = vld [vmem:[#allocation11 + $0x28] sm:$0xff]
    %v3985 = vld [vmem:[#allocation11 + $0x30] sm:$0xff]
    %v3986 = vld [vmem:[#allocation11 + $0x38] sm:$0xff]
    %v3987 = vld [vmem:[#allocation11 + $0x40] sm:$0xff]
    %v3988 = vld [vmem:[#allocation11 + $0x48] sm:$0xff]
    %v3989 = vld [vmem:[#allocation11 + $0x50] sm:$0xff]
    %v3990 = vld [vmem:[#allocation11 + $0x58] sm:$0xff]
    %v3991 = vld [vmem:[#allocation11 + $0x60] sm:$0xff]
    %v3992 = vld [vmem:[#allocation11 + $0x68] sm:$0xff]
    %v3993 = vld [vmem:[#allocation11 + $0x70] sm:$0xff]
    %v3994 = vld [vmem:[#allocation11 + $0x78] sm:$0xff]
    %v3995 = vld [vmem:[#allocation11 + $0x80] sm:$0xff]
    %v3996 = vld [vmem:[#allocation11 + $0x88] sm:$0xff]
    %v3997 = vld [vmem:[#allocation11 + $0x90] sm:$0xff]
    %v3998 = vld [vmem:[#allocation11 + $0x98] sm:$0xff]
    %v3999 = vld [vmem:[#allocation11 + $0xa0] sm:$0xff]
    %v4000 = vld [vmem:[#allocation11 + $0xa8] sm:$0xff]
    %v4001 = vld [vmem:[#allocation11 + $0xb0] sm:$0xff]
    %v4002 = vld [vmem:[#allocation11 + $0xb8] sm:$0xff]
    %v4003 = vld [vmem:[#allocation11 + $0xc0] sm:$0xff]
    %v4004 = vld [vmem:[#allocation11 + $0xc8] sm:$0xff]
    %v4005 = vld [vmem:[#allocation11 + $0xd0] sm:$0xff]
    %v4006 = vld [vmem:[#allocation11 + $0xd8] sm:$0xff]
    %v4007 = vld [vmem:[#allocation11 + $0xe0] sm:$0xff]
    %v4008 = vld [vmem:[#allocation11 + $0xe8] sm:$0xff]
    %v4009 = vld [vmem:[#allocation11 + $0xf0] sm:$0xff]
    %v4010 = vld [vmem:[#allocation11 + $0xf8] sm:$0xff]
    %v4011 = vld [vmem:[%s9] sm:$0x1]
    %v4013 = vlaneseq
    %v4014 = vshrl.u32 %v4013, 7
    %v4015 = vsub.s32 0, %v4014
    %v4016 = vrot.slane %v4011, %v4015
    %4018 = vmatprep.subr.mxu0 0.0
    %4019 = vmatpush1.msra.mxu0 %v3979
    %4020 = vmatprep.subr.mxu0 0.0
    %4021 = vmatpush1.msra.mxu0 %v3980
    %4022 = vmatprep.subr.mxu0 0.0
    %4023 = vmatpush1.msra.mxu0 %v3981
    %4024 = vmatprep.subr.mxu0 0.0
    %4025 = vmatpush1.msra.mxu0 %v3982
    %4026 = vmatprep.subr.mxu0 0.0
    %4027 = vmatpush1.msra.mxu0 %v3983
    %4028 = vmatprep.subr.mxu0 0.0
    %4029 = vmatpush1.msra.mxu0 %v3984
    %4030 = vmatprep.subr.mxu0 0.0
    %4031 = vmatpush1.msra.mxu0 %v3985
    %4032 = vmatprep.subr.mxu0 0.0
    %4033 = vmatpush1.msra.mxu0 %v3986
    %4034 = vmatprep.subr.mxu0 0.0
    %4035 = vmatpush1.msra.mxu0 %v3987
    %4036 = vmatprep.subr.mxu0 0.0
    %4037 = vmatpush1.msra.mxu0 %v3988
    %4038 = vmatprep.subr.mxu0 0.0
    %4039 = vmatpush1.msra.mxu0 %v3989
    %4040 = vmatprep.subr.mxu0 0.0
    %4041 = vmatpush1.msra.mxu0 %v3990
    %4042 = vmatprep.subr.mxu0 0.0
    %4043 = vmatpush1.msra.mxu0 %v3991
    %4044 = vmatprep.subr.mxu0 0.0
    %4045 = vmatpush1.msra.mxu0 %v3992
    %4046 = vmatprep.subr.mxu0 0.0
    %4047 = vmatpush1.msra.mxu0 %v3993
    %4048 = vmatprep.subr.mxu0 0.0
    %4049 = vmatpush1.msra.mxu0 %v3994
    %4050 = vmatprep.subr.mxu0 0.0
    %4051 = vmatpush1.msra.mxu0 %v3995
    %4052 = vmatprep.subr.mxu0 0.0
    %4053 = vmatpush1.msra.mxu0 %v3996
    %4054 = vmatprep.subr.mxu0 0.0
    %4055 = vmatpush1.msra.mxu0 %v3997
    %4056 = vmatprep.subr.mxu0 0.0
    %4057 = vmatpush1.msra.mxu0 %v3998
    %4058 = vmatprep.subr.mxu0 0.0
    %4059 = vmatpush1.msra.mxu0 %v3999
    %4060 = vmatprep.subr.mxu0 0.0
    %4061 = vmatpush1.msra.mxu0 %v4000
    %4062 = vmatprep.subr.mxu0 0.0
    %4063 = vmatpush1.msra.mxu0 %v4001
    %4064 = vmatprep.subr.mxu0 0.0
    %4065 = vmatpush1.msra.mxu0 %v4002
    %4066 = vmatprep.subr.mxu0 0.0
    %4067 = vmatpush1.msra.mxu0 %v4003
    %4068 = vmatprep.subr.mxu0 0.0
    %4069 = vmatpush1.msra.mxu0 %v4004
    %4070 = vmatprep.subr.mxu0 0.0
    %4071 = vmatpush1.msra.mxu0 %v4005
    %4072 = vmatprep.subr.mxu0 0.0
    %4073 = vmatpush1.msra.mxu0 %v4006
    %4074 = vmatprep.subr.mxu0 0.0
    %4075 = vmatpush1.msra.mxu0 %v4007
    %4076 = vmatprep.subr.mxu0 0.0
    %4077 = vmatpush1.msra.mxu0 %v4008
    %4078 = vmatprep.subr.mxu0 0.0
    %4079 = vmatpush1.msra.mxu0 %v4009
    %4080 = vmatprep.subr.mxu0 0.0
    %4081 = vmatpush1.msra.mxu0 %v4010
    %4082 = vmatprep.mubr.f32.mxu0 %v3978
    %4083 = vmatmul.mubr.f32.gmra.mrb[0].mxu0 %v3977
    %v4084 = vpop.f32.mrb[0].mxu0
    %v4085 = vadd.f32 %v4016, %v4084
    %v4086 = vpop.f32.mrb[0].mxu0
    %4087 = vdwg.mxu0
    %4088 = vst [vmem:[#allocation12] sm:$0xff] %v4085
    // Predicated region
    $region62: #{tpu_custom_call.1} parent=1 // pred_check
      _
    $region63: #{tpu_custom_call.1} parent=1 // pred_check_branch
      %4090 = sbr.rel (0) target = $region65
    $region64: #{tpu_custom_call.1} parent=1 // pred_region
      %s4092 = ssub.s32 128, 128
      %4093 = vsyncadd [#allocation5], %s4092
      %s4095 = sshll.u32 [#allocation12], 4
      %s4096 = int_to_ptr.vmem [resolvable:$true] %s4095
      %4098 = dma.vmem_to_hbm [thread:$0]  %s4096, 128, %s10, [#allocation5]
    $region65: #{tpu_custom_call.1} parent=1 // pred_fallthru
      _
    // Predicated region
    $region66: #{tpu_custom_call.1} parent=1 // pred_check
      _
    $region67: #{tpu_custom_call.1} parent=1 // pred_check_branch
      %4100 = sbr.rel (0) target = $region69
    $region68: #{tpu_custom_call.1} parent=1 // pred_region
      %4101 = dma.done [#allocation5], 128
    $region69: #{tpu_custom_call.1} parent=1 // pred_fallthru
      _
    %4102 = vsyncpa [#allocation4], 1
    %4103 = vsyncpa [#allocation7], 1
    %4104 = vsyncpa [#allocation10], 1
    %4105 = vsyncpa [#allocation5], 1

</llo_original>
